<compile_context>
chip_gen: v6e
topology: v6e:2x2x1
jax: 0.10.0
libtpu: 0.0.40
codegen_flags: <defaults>
</compile_context>

<pallas_src>
import functools
import math
from typing import NamedTuple

import jax
import jax.numpy as jnp
from jax.experimental import pallas as pl
from jax.experimental.pallas import tpu as pltpu

MXU_DTYPE = jnp.bfloat16       # MXU operand dtype (f32 accumulate); jnp.float32 for strict parity
ACT_DTYPE = jnp.bfloat16       # inter-kernel activation storage dtype (halves HBM traffic)
GELU_TANH = True               # tanh-approx GELU (EUP) vs exact-erf rational poly (VALU heavy)


# ----------------------------- PF layout helpers (wrapper side) -----------------------------

class Geom(NamedTuple):
    hv: int        # valid (logical) height
    wv: int        # valid (logical) width
    border: int    # zero-border width baked into the padded grid
    hp: int        # padded grid height = hv + 2*border
    wp: int        # padded grid width
    lead: int      # zero lanes before the grid, 128-aligned, >= wp+1
    l_body: int    # round_up(hp*wp, 128)
    lp: int        # total lanes = lead + l_body + lead


def _round_up(v, m):
    return (v + m - 1) // m * m


def _make_geom(hv, wv, border):
    hp, wp = hv + 2 * border, wv + 2 * border
    lead = _round_up(wp + 1, 128)
    l_body = _round_up(hp * wp, 128)
    return Geom(hv, wv, border, hp, wp, lead, l_body, lead + l_body + lead)


def _to_pf(x_nchw, border):
    """NCHW -> PF (N, C, Lp); exactly zero everywhere outside the valid pixels."""
    n, c, hv, wv = x_nchw.shape
    g = _make_geom(hv, wv, border)
    xp = jnp.pad(x_nchw, ((0, 0), (0, 0), (border, border), (border, border)))
    xp = xp.reshape(n, c, g.hp * g.wp)
    xp = jnp.pad(xp, ((0, 0), (0, 0), (g.lead, g.lp - g.lead - g.hp * g.wp)))
    return xp, g


def _from_pf(x_pf, g):
    n, c, _ = x_pf.shape
    grid = x_pf[:, :, g.lead:g.lead + g.hp * g.wp].reshape(n, c, g.hp, g.wp)
    return grid[:, :, g.border:g.border + g.hv, g.border:g.border + g.wv]


def _grid_mask(g, length, offset):
    """(1, length) f32 mask, 1 on the valid pixels of geometry g placed at lane `offset`."""
    rows = (jnp.arange(g.hp) >= g.border) & (jnp.arange(g.hp) < g.border + g.hv)
    cols = (jnp.arange(g.wp) >= g.border) & (jnp.arange(g.wp) < g.border + g.wv)
    m = (rows[:, None] & cols[None, :]).astype(jnp.float32).reshape(1, g.hp * g.wp)
    return jnp.pad(m, ((0, 0), (offset, length - offset - g.hp * g.wp)))


def _vmem_limit(block_bytes):
    # double-buffered blocks + headroom, derived from actual block sizes (review #6), clamped.
    return int(min(96 * 1024 * 1024, max(32 * 1024 * 1024, 3 * block_bytes)))


# ----------------------------- small in-kernel math helpers -----------------------------

_SQRT_2_OVER_PI = 0.7978845608028654


def _gelu(x):
    if GELU_TANH:
        # tanh-approx GELU: a handful of VALU ops + one EUP tanh per element (review #3).
        return 0.5 * x * (1.0 + jnp.tanh(_SQRT_2_OVER_PI * (x + 0.044715 * x * x * x)))
    # exact-erf GELU via A&S 7.1.26 (parity escape hatch); reciprocal goes to EUP, not VALU.
    a1, a2, a3, a4, a5 = 0.254829592, -0.284496736, 1.421413741, -1.453152027, 1.061405429
    s = jnp.sign(x)
    ax = jnp.abs(x) * 0.7071067811865476
    t = pl.reciprocal(1.0 + 0.3275911 * ax, approx=True)
    poly = ((((a5 * t + a4) * t + a3) * t + a2) * t + a1) * t
    erf = s * (1.0 - poly * jnp.exp(-ax * ax))
    return 0.5 * x * (1.0 + erf)


def _colvec_matmul(mat, col):
    # (C, C) @ (C, 1) done as an N=128 matmul (lane-broadcast the column) -> robust lowering.
    colb = jnp.broadcast_to(col, (col.shape[0], 128))
    return jnp.dot(mat, colb, preferred_element_type=jnp.float32)[:, 0:1]


def _group_bcast(stat_col, gmat_ref, gs):
    # Per-channel stats (C,1) -> per-group means broadcast back to (C,1).
    if gs == 1:                 # min(32, C) groups with C<=32 => one channel per group
        return stat_col
    return _colvec_matmul(gmat_ref[...], stat_col)


# ----------------------------- Pallas kernels -----------------------------

def _fused_conv_kernel(*refs, cin, cout, wp, lead, l_body, hw, eps, gs,
                       apply_gn, mxu_dtype):
    """[GroupNorm -> GELU ->] 3x3 stride-1 conv on one batch element, PF layout in & out.

    The 9 taps are stacked along the contraction dim into a (9*cin, l_body) bf16 VMEM slab
    (9 statically-shifted lane slices of the post-GN bf16 activation) and contracted with a
    single MXU matmul against the (cout, 9*cin) weight; im2col never touches HBM.
    """
    if apply_gn:
        if gs > 1:
            (x_ref, in_mask_ref, gamma_ref, beta_ref, gmat_ref,
             out_mask_ref, w_ref, b_ref, o_ref, slab_ref) = refs
        else:
            (x_ref, in_mask_ref, gamma_ref, beta_ref,
             out_mask_ref, w_ref, b_ref, o_ref, slab_ref) = refs
            gmat_ref = None
    else:
        x_ref, out_mask_ref, w_ref, b_ref, o_ref, slab_ref = refs
        gmat_ref = None

    if apply_gn:
        x = x_ref[0].astype(jnp.float32)                     # (cin, Lp); GN stats in f32
        mask = in_mask_ref[...]                              # (1, Lp): 1 on valid pixels
        inv_hw = 1.0 / hw
        mu = _group_bcast(jnp.sum(x, axis=1, keepdims=True) * inv_hw, gmat_ref, gs)
        d = (x - mu) * mask                                  # centered; pad lanes re-zeroed
        var = _group_bcast(jnp.sum(d * d, axis=1, keepdims=True) * inv_hw, gmat_ref, gs)
        y = _gelu(d * jax.lax.rsqrt(var + eps) * gamma_ref[...] + beta_ref[...]) * mask
        y_lo = y.astype(mxu_dtype)                           # single cast; taps sliced in bf16
    else:
        y_lo = x_ref[0].astype(mxu_dtype)                    # skip path: conv on raw input

    base = lead - wp - 1                                     # tap (0,0) offset; lead >= wp+1
    for t in range(9):                                       # unrolled: 9 static lane shifts
        kh, kw = divmod(t, 3)
        off = base + kh * wp + kw
        slab_ref[pl.ds(t * cin, cin), :] = y_lo[:, off:off + l_body]

    acc = jnp.dot(w_ref[...], slab_ref[...], preferred_element_type=jnp.float32)
    core = ((acc + b_ref[...]) * out_mask_ref[...]).astype(o_ref.dtype)

    lp = o_ref.shape[2]
    zlead = jnp.zeros((cout, lead), o_ref.dtype)
    ztail = jnp.zeros((cout, lp - lead - l_body), o_ref.dtype)
    o_ref[0] = jnp.concatenate([zlead, core, ztail], axis=1)  # dense, 128-aligned lane store


def _eca_combine_kernel(*refs, hw, eps, gs):
    """Skip-path GroupNorm + ECA channel gate + residual add (one batch element, PF layout)."""
    if gs > 1:
        m_ref, s_ref, mask_ref, gamma_ref, beta_ref, gmat_ref, band_ref, o_ref = refs
    else:
        m_ref, s_ref, mask_ref, gamma_ref, beta_ref, band_ref, o_ref = refs
        gmat_ref = None

    m = m_ref[0].astype(jnp.float32)            # main path (conv2 output); zero off-valid
    s = s_ref[0].astype(jnp.float32)            # skip conv output (pre-GN); zero off-valid
    mask = mask_ref[...]
    inv_hw = 1.0 / hw

    # skip-path GroupNorm (no activation), centered (stable) variance
    mu = _group_bcast(jnp.sum(s, axis=1, keepdims=True) * inv_hw, gmat_ref, gs)
    d = s - mu
    dm = d * mask
    var = _group_bcast(jnp.sum(dm * dm, axis=1, keepdims=True) * inv_hw, gmat_ref, gs)
    skip = d * jax.lax.rsqrt(var + eps) * gamma_ref[...] + beta_ref[...]

    # ECA: spatial mean -> k-tap conv1d across channels (banded matrix) -> sigmoid gate
    pool = jnp.sum(m, axis=1, keepdims=True) * inv_hw         # off-valid lanes are zero
    gate = jax.nn.sigmoid(_colvec_matmul(band_ref[...], pool))

    # off-valid lanes of the result are junk; the wrapper strips them once at the very end.
    o_ref[0] = (m * gate + skip).astype(o_ref.dtype)


# ----------------------------- wrappers (glue only) -----------------------------

def fused_gn_gelu_conv_pf(x_pf, g, w_oihw, bias, *, stride, apply_gn,
                          gamma=None, beta=None, num_groups=1, eps=1e-5):
    """Conv3x3(GELU(GroupNorm(x))) (or Conv3x3(x)) on a PF-layout input; PF-layout output.

    The output keeps the same padded grid geometry (1-pixel zero border), so the next stage
    consumes it directly -- no strip / re-pad HBM round trip between kernels.
    """
    n, cin, lp = x_pf.shape
    assert lp == g.lp
    cout = w_oihw.shape[0]
    g_out = _make_geom(g.hp - 2, g.wp - 2, 1)         # same hp/wp/lead/l_body/lp as g
    assert g_out.lp == g.lp and g_out.wp == g.wp

    w2 = jnp.transpose(w_oihw, (0, 2, 3, 1)).reshape(cout, 9 * cin).astype(MXU_DTYPE)
    b2 = bias.reshape(cout, 1).astype(jnp.float32)
    out_mask = _grid_mask(g_out, g.l_body, 0)

    args = [x_pf]
    in_specs = [pl.BlockSpec((1, cin, g.lp), lambda i: (i, 0, 0))]
    gs = 1
    if apply_gn:
        gs = cin // num_groups
        in_mask = _grid_mask(g, g.lp, g.lead)
        args += [in_mask, gamma.reshape(cin, 1).astype(jnp.float32),
                 beta.reshape(cin, 1).astype(jnp.float32)]
        in_specs += [pl.BlockSpec((1, g.lp), lambda i: (0, 0)),
                     pl.BlockSpec((cin, 1), lambda i: (0, 0)),
                     pl.BlockSpec((cin, 1), lambda i: (0, 0))]
        if gs > 1:                                    # groups with >1 channel (C > 32)
            gid = jnp.arange(cin) // gs
            gmat = (gid[:, None] == gid[None, :]).astype(jnp.float32) / gs
            args.append(gmat)
            in_specs.append(pl.BlockSpec((cin, cin), lambda i: (0, 0)))
    args += [out_mask, w2, b2]
    in_specs += [pl.BlockSpec((1, g.l_body), lambda i: (0, 0)),
                 pl.BlockSpec((cout, 9 * cin), lambda i: (0, 0)),
                 pl.BlockSpec((cout, 1), lambda i: (0, 0))]

    kern = functools.partial(
        _fused_conv_kernel, cin=cin, cout=cout, wp=g.wp, lead=g.lead,
        l_body=g.l_body, hw=g.hv * g.wv, eps=eps, gs=gs, apply_gn=apply_gn,
        mxu_dtype=MXU_DTYPE)

    block_bytes = (cin * g.lp * x_pf.dtype.itemsize + cout * g.lp * 2
                   + 9 * cin * g.l_body * 2 + g.lp * 4 + g.l_body * 4
                   + cout * 9 * cin * 2)
    out_pf = pl.pallas_call(
        kern,
        out_shape=jax.ShapeDtypeStruct((n, cout, g.lp), ACT_DTYPE),
        grid=(n,),                                    # N parallel steps -> feeds both v7x TCs
        in_specs=in_specs,
        out_specs=pl.BlockSpec((1, cout, g.lp), lambda i: (i, 0, 0)),
        scratch_shapes=[pltpu.VMEM((9 * cin, g.l_body), MXU_DTYPE)],
        compiler_params=pltpu.CompilerParams(
            dimension_semantics=("parallel",),
            vmem_limit_bytes=_vmem_limit(block_bytes)),
    )(*args)

    if stride > 1:
        # TODO(synk): compute only strided outputs in-kernel instead of this wrapper subsample.
        out_c = _from_pf(out_pf, g_out)[:, :, ::stride, ::stride]
        out_pf, g_out = _to_pf(out_c, 1)
    return out_pf, g_out


def eca_combine_skipgn_pf(main_pf, skip_pf, g, gamma, beta, num_groups, w1d, *, eps=1e-5):
    n, c, lp = main_pf.shape
    assert skip_pf.shape == main_pf.shape, "main/skip shapes must match (requires padding=1)"
    gs = c // num_groups
    hw = g.hv * g.wv
    mask = _grid_mask(g, g.lp, g.lead)

    k = w1d.shape[0]
    idx = jnp.arange(c)
    off = idx[None, :] - idx[:, None] + k // 2        # band[i, j] = w1d[j - i + k//2]
    band = jnp.where((off >= 0) & (off < k),
                     w1d[jnp.clip(off, 0, k - 1)], 0.0).astype(jnp.float32)

    args = [main_pf, skip_pf, mask, gamma.reshape(c, 1).astype(jnp.float32),
            beta.reshape(c, 1).astype(jnp.float32)]
    in_specs = [pl.BlockSpec((1, c, lp), lambda i: (i, 0, 0)),
                pl.BlockSpec((1, c, lp), lambda i: (i, 0, 0)),
                pl.BlockSpec((1, lp), lambda i: (0, 0)),
                pl.BlockSpec((c, 1), lambda i: (0, 0)),
                pl.BlockSpec((c, 1), lambda i: (0, 0))]
    if gs > 1:
        gid = jnp.arange(c) // gs
        gmat = (gid[:, None] == gid[None, :]).astype(jnp.float32) / gs
        args.append(gmat)
        in_specs.append(pl.BlockSpec((c, c), lambda i: (0, 0)))
    args.append(band)
    in_specs.append(pl.BlockSpec((c, c), lambda i: (0, 0)))

    kern = functools.partial(_eca_combine_kernel, hw=hw, eps=eps, gs=gs)
    block_bytes = 2 * c * lp * 2 + c * lp * 4 + lp * 4 + 2 * c * c * 4
    out_pf = pl.pallas_call(
        kern,
        out_shape=jax.ShapeDtypeStruct((n, c, lp), jnp.float32),
        grid=(n,),
        in_specs=in_specs,
        out_specs=pl.BlockSpec((1, c, lp), lambda i: (i, 0, 0)),
        compiler_params=pltpu.CompilerParams(
            dimension_semantics=("parallel",),
            vmem_limit_bytes=_vmem_limit(block_bytes)),
    )(*args)
    return _from_pf(out_pf, g)                        # single strip at the module boundary


# ----------------------------- module -----------------------------

class ResidualConvPallas:
    def __init__(self, key, input_dim, output_dim, stride, padding):
        self.stride, self.padding = stride, padding
        self.g_in = min(32, input_dim)
        self.g_out = min(32, output_dim)
        k_size = int(abs(math.log(output_dim, 2) + 1) / 2)
        self.k_size = k_size if k_size % 2 else k_size + 1

        keys = jax.random.split(key, 13)

        def w(k, shape, scale=0.1):
            return (scale * jax.random.normal(k, shape)).astype(jnp.float32)

        # conv_block: GN -> GELU -> Conv3x3 -> GN -> GELU -> Conv3x3
        self.gn1_w = 1.0 + w(keys[0], (input_dim,))
        self.gn1_b = w(keys[1], (input_dim,))
        self.conv1_w = w(keys[2], (output_dim, input_dim, 3, 3))    # OIHW (PyTorch layout)
        self.conv1_b = w(keys[3], (output_dim,))
        self.gn2_w = 1.0 + w(keys[4], (output_dim,))
        self.gn2_b = w(keys[5], (output_dim,))
        self.conv2_w = w(keys[6], (output_dim, output_dim, 3, 3))
        self.conv2_b = w(keys[7], (output_dim,))
        # conv_skip: Conv3x3 (padding=1) -> GN
        self.convs_w = w(keys[8], (output_dim, input_dim, 3, 3))
        self.convs_b = w(keys[9], (output_dim,))
        self.gns_w = 1.0 + w(keys[10], (output_dim,))
        self.gns_b = w(keys[11], (output_dim,))
        # ECA conv1d (no bias)
        self.eca_w = w(keys[12], (self.k_size,))

    def __call__(self, x_nchw):
        p = self.padding
        x_pf, g_x = _to_pf(x_nchw, p)                 # one pad at the module input
        # main path: [GN -> GELU -> Conv] -> [GN -> GELU -> Conv]  (one fused kernel each)
        h1, g_h1 = fused_gn_gelu_conv_pf(x_pf, g_x, self.conv1_w, self.conv1_b,
                                         stride=self.stride, apply_gn=True,
                                         gamma=self.gn1_w, beta=self.gn1_b,
                                         num_groups=self.g_in)
        main, g_m = fused_gn_gelu_conv_pf(h1, g_h1, self.conv2_w, self.conv2_b,
                                          stride=1, apply_gn=True,
                                          gamma=self.gn2_w, beta=self.gn2_b,
                                          num_groups=self.g_out)
        # skip path conv (its GroupNorm is fused into the combine kernel below)
        if p == 1:
            xs_pf, g_xs = x_pf, g_x                   # skip conv uses padding=1; reuse PF input
        else:
            xs_pf, g_xs = _to_pf(x_nchw, 1)
        sk, g_s = fused_gn_gelu_conv_pf(xs_pf, g_xs, self.convs_w, self.convs_b,
                                        stride=self.stride, apply_gn=False)
        assert (g_m.hv, g_m.wv) == (g_s.hv, g_s.wv), "main/skip spatial mismatch"
        # skip GN + ECA gate + residual add, all in one fused kernel; strip once at the end
        return eca_combine_skipgn_pf(main, sk, g_m, self.gns_w, self.gns_b,
                                     self.g_out, self.eca_w)


if __name__ == "__main__":
    key = jax.random.PRNGKey(0)
    k_x, k_p = jax.random.split(key)

    N, Cin, H, W = 2, 4, 16, 16
    Cout, stride, padding = 8, 1, 1

    x = jax.random.normal(k_x, (N, Cin, H, W), dtype=jnp.float32)    # NCHW, like PyTorch
    model = ResidualConvPallas(k_p, Cin, Cout, stride, padding)

    out = jax.jit(model.__call__)(x)
    out = jax.block_until_ready(out)

    assert out.shape == (N, Cout, H, W), out.shape
    assert bool(jnp.all(jnp.isfinite(out)))
    print("KERNEL_OK")
</pallas_src>

<mosaic_0001>
module attributes {stable_mosaic.version = 11 : i64} {
  func.func @_fused_conv_kernel(%arg0: i32, %arg1: memref<1x4x640xf32, #tpu.memory_space<vmem>>, %arg2: memref<1x384xf32, #tpu.memory_space<vmem>>, %arg3: memref<8x36xbf16, #tpu.memory_space<vmem>>, %arg4: memref<8x1xf32, #tpu.memory_space<vmem>>, %arg5: memref<1x8x640xbf16, #tpu.memory_space<vmem>>, %arg6: memref<36x384xbf16, #tpu.memory_space<vmem>>) attributes {dimension_semantics = [#tpu.dimension_semantics<parallel>], iteration_bounds = array<i64: 2>, scalar_prefetch = 0 : i64, scratch_operands = 1 : i64, tpu.core_type = #tpu.core_type<tc>, window_params = [{transform_indices = @transform_0, window_bounds = array<i64: 1, 4, 640>}, {pipeline_mode = #tpu.pipeline_mode<synchronous>, transform_indices = @transform_1, window_bounds = array<i64: 1, 384>}, {pipeline_mode = #tpu.pipeline_mode<synchronous>, transform_indices = @transform_2, window_bounds = array<i64: 8, 36>}, {pipeline_mode = #tpu.pipeline_mode<synchronous>, transform_indices = @transform_3, window_bounds = array<i64: 8, 1>}, {transform_indices = @transform_4, window_bounds = array<i64: 1, 8, 640>}]} {
    %c0 = arith.constant 0 : index
    %c0_0 = arith.constant 0 : index
    %c0_1 = arith.constant 0 : index
    %0 = vector.load %arg1[%c0, %c0_0, %c0_1] : memref<1x4x640xf32, #tpu.memory_space<vmem>>, vector<1x4x640xf32>
    %1 = vector.shape_cast %0 : vector<1x4x640xf32> to vector<4x640xf32>
    %2 = arith.truncf %1 : vector<4x640xf32> to vector<4x640xbf16>
    %3 = vector.extract_strided_slice %2 {offsets = [0, 109], sizes = [4, 384], strides = [1, 1]} : vector<4x640xbf16> to vector<4x384xbf16>
    %c0_2 = arith.constant 0 : index
    %c0_3 = arith.constant 0 : index
    %4 = vector.load %arg6[%c0_2, %c0_3] : memref<36x384xbf16, #tpu.memory_space<vmem>>, vector<4x384xbf16>
    tpu.vector_store %arg6[%c0_2, %c0_3], %3 {strides = array<i32>} : memref<36x384xbf16, #tpu.memory_space<vmem>>, vector<4x384xbf16>,
    %5 = vector.extract_strided_slice %2 {offsets = [0, 110], sizes = [4, 384], strides = [1, 1]} : vector<4x640xbf16> to vector<4x384xbf16>
    %c4 = arith.constant 4 : index
    %c0_4 = arith.constant 0 : index
    %6 = vector.load %arg6[%c4, %c0_4] : memref<36x384xbf16, #tpu.memory_space<vmem>>, vector<4x384xbf16>
    tpu.vector_store %arg6[%c4, %c0_4], %5 {strides = array<i32>} : memref<36x384xbf16, #tpu.memory_space<vmem>>, vector<4x384xbf16>,
    %7 = vector.extract_strided_slice %2 {offsets = [0, 111], sizes = [4, 384], strides = [1, 1]} : vector<4x640xbf16> to vector<4x384xbf16>
    %c8 = arith.constant 8 : index
    %c0_5 = arith.constant 0 : index
    %8 = vector.load %arg6[%c8, %c0_5] : memref<36x384xbf16, #tpu.memory_space<vmem>>, vector<4x384xbf16>
    tpu.vector_store %arg6[%c8, %c0_5], %7 {strides = array<i32>} : memref<36x384xbf16, #tpu.memory_space<vmem>>, vector<4x384xbf16>,
    %9 = vector.extract_strided_slice %2 {offsets = [0, 127], sizes = [4, 384], strides = [1, 1]} : vector<4x640xbf16> to vector<4x384xbf16>
    %c12 = arith.constant 12 : index
    %c0_6 = arith.constant 0 : index
    %10 = vector.load %arg6[%c12, %c0_6] : memref<36x384xbf16, #tpu.memory_space<vmem>>, vector<4x384xbf16>
    tpu.vector_store %arg6[%c12, %c0_6], %9 {strides = array<i32>} : memref<36x384xbf16, #tpu.memory_space<vmem>>, vector<4x384xbf16>,
    %11 = vector.extract_strided_slice %2 {offsets = [0, 128], sizes = [4, 384], strides = [1, 1]} : vector<4x640xbf16> to vector<4x384xbf16>
    %c16 = arith.constant 16 : index
    %c0_7 = arith.constant 0 : index
    %12 = vector.load %arg6[%c16, %c0_7] : memref<36x384xbf16, #tpu.memory_space<vmem>>, vector<4x384xbf16>
    tpu.vector_store %arg6[%c16, %c0_7], %11 {strides = array<i32>} : memref<36x384xbf16, #tpu.memory_space<vmem>>, vector<4x384xbf16>,
    %13 = vector.extract_strided_slice %2 {offsets = [0, 129], sizes = [4, 384], strides = [1, 1]} : vector<4x640xbf16> to vector<4x384xbf16>
    %c20 = arith.constant 20 : index
    %c0_8 = arith.constant 0 : index
    %14 = vector.load %arg6[%c20, %c0_8] : memref<36x384xbf16, #tpu.memory_space<vmem>>, vector<4x384xbf16>
    tpu.vector_store %arg6[%c20, %c0_8], %13 {strides = array<i32>} : memref<36x384xbf16, #tpu.memory_space<vmem>>, vector<4x384xbf16>,
    %15 = vector.extract_strided_slice %2 {offsets = [0, 145], sizes = [4, 384], strides = [1, 1]} : vector<4x640xbf16> to vector<4x384xbf16>
    %c24 = arith.constant 24 : index
    %c0_9 = arith.constant 0 : index
    %16 = vector.load %arg6[%c24, %c0_9] : memref<36x384xbf16, #tpu.memory_space<vmem>>, vector<4x384xbf16>
    tpu.vector_store %arg6[%c24, %c0_9], %15 {strides = array<i32>} : memref<36x384xbf16, #tpu.memory_space<vmem>>, vector<4x384xbf16>,
    %17 = vector.extract_strided_slice %2 {offsets = [0, 146], sizes = [4, 384], strides = [1, 1]} : vector<4x640xbf16> to vector<4x384xbf16>
    %c28 = arith.constant 28 : index
    %c0_10 = arith.constant 0 : index
    %18 = vector.load %arg6[%c28, %c0_10] : memref<36x384xbf16, #tpu.memory_space<vmem>>, vector<4x384xbf16>
    tpu.vector_store %arg6[%c28, %c0_10], %17 {strides = array<i32>} : memref<36x384xbf16, #tpu.memory_space<vmem>>, vector<4x384xbf16>,
    %19 = vector.extract_strided_slice %2 {offsets = [0, 147], sizes = [4, 384], strides = [1, 1]} : vector<4x640xbf16> to vector<4x384xbf16>
    %c32 = arith.constant 32 : index
    %c0_11 = arith.constant 0 : index
    %20 = vector.load %arg6[%c32, %c0_11] : memref<36x384xbf16, #tpu.memory_space<vmem>>, vector<4x384xbf16>
    tpu.vector_store %arg6[%c32, %c0_11], %19 {strides = array<i32>} : memref<36x384xbf16, #tpu.memory_space<vmem>>, vector<4x384xbf16>,
    %c0_12 = arith.constant 0 : index
    %c0_13 = arith.constant 0 : index
    %21 = vector.load %arg3[%c0_12, %c0_13] : memref<8x36xbf16, #tpu.memory_space<vmem>>, vector<8x36xbf16>
    %c0_14 = arith.constant 0 : index
    %c0_15 = arith.constant 0 : index
    %22 = vector.load %arg6[%c0_14, %c0_15] : memref<36x384xbf16, #tpu.memory_space<vmem>>, vector<36x384xbf16>
    %cst = arith.constant dense<0.000000e+00> : vector<8x384xf32>
    %23 = tpu.matmul %21, %22, %cst {dimension_numbers = #tpu.dot_dimension_numbers<[1], [0], [0], [1], [0, 0, 1, 1], [], []>} : vector<8x36xbf16>, vector<36x384xbf16>, vector<8x384xf32> -> vector<8x384xf32>
    %c0_16 = arith.constant 0 : index
    %c0_17 = arith.constant 0 : index
    %24 = vector.load %arg4[%c0_16, %c0_17] : memref<8x1xf32, #tpu.memory_space<vmem>>, vector<8x1xf32>
    %25 = vector.broadcast %24 : vector<8x1xf32> to vector<8x384xf32>
    %26 = arith.addf %23, %25 : vector<8x384xf32>
    %c0_18 = arith.constant 0 : index
    %c0_19 = arith.constant 0 : index
    %27 = vector.load %arg2[%c0_18, %c0_19] : memref<1x384xf32, #tpu.memory_space<vmem>>, vector<1x384xf32>
    %28 = vector.broadcast %27 : vector<1x384xf32> to vector<8x384xf32>
    %29 = arith.mulf %26, %28 : vector<8x384xf32>
    %30 = arith.truncf %29 : vector<8x384xf32> to vector<8x384xbf16>
    %cst_20 = arith.constant 0.000000e+00 : bf16
    %31 = vector.broadcast %cst_20 : bf16 to vector<8x128xbf16>
    %cst_21 = arith.constant 0.000000e+00 : bf16
    %32 = vector.broadcast %cst_21 : bf16 to vector<8x128xbf16>
    %33 = tpu.concatenate %31, %30, %32 in 1 : vector<8x128xbf16>, vector<8x384xbf16>, vector<8x128xbf16> -> vector<8x640xbf16>
    %c0_22 = arith.constant 0 : index
    %c0_23 = arith.constant 0 : index
    %c0_24 = arith.constant 0 : index
    %34 = vector.load %arg5[%c0_22, %c0_23, %c0_24] : memref<1x8x640xbf16, #tpu.memory_space<vmem>>, vector<1x8x640xbf16>
    %35 = vector.shape_cast %34 : vector<1x8x640xbf16> to vector<8x640xbf16>
    %36 = vector.shape_cast %33 : vector<8x640xbf16> to vector<1x8x640xbf16>
    tpu.vector_store %arg5[%c0_22, %c0_23, %c0_24], %36 {strides = array<i32>} : memref<1x8x640xbf16, #tpu.memory_space<vmem>>, vector<1x8x640xbf16>,
    return
  }
  func.func @transform_0(%arg0: i32) -> (i32, i32, i32) {
    %c0_i32 = arith.constant 0 : i32
    %c0_i32_0 = arith.constant 0 : i32
    %c0_i32_1 = arith.constant 0 : i32
    return %arg0, %c0_i32, %c0_i32_0 : i32, i32, i32
  }
  func.func @transform_1(%arg0: i32) -> (i32, i32) {
    %c0_i32 = arith.constant 0 : i32
    %c0_i32_0 = arith.constant 0 : i32
    %c0_i32_1 = arith.constant 0 : i32
    return %c0_i32, %c0_i32_0 : i32, i32
  }
  func.func @transform_2(%arg0: i32) -> (i32, i32) {
    %c0_i32 = arith.constant 0 : i32
    %c0_i32_0 = arith.constant 0 : i32
    %c0_i32_1 = arith.constant 0 : i32
    return %c0_i32, %c0_i32_0 : i32, i32
  }
  func.func @transform_3(%arg0: i32) -> (i32, i32) {
    %c0_i32 = arith.constant 0 : i32
    %c0_i32_0 = arith.constant 0 : i32
    %c0_i32_1 = arith.constant 0 : i32
    return %c0_i32, %c0_i32_0 : i32, i32
  }
  func.func @transform_4(%arg0: i32) -> (i32, i32, i32) {
    %c0_i32 = arith.constant 0 : i32
    %c0_i32_0 = arith.constant 0 : i32
    %c0_i32_1 = arith.constant 0 : i32
    return %arg0, %c0_i32, %c0_i32_0 : i32, i32, i32
  }
}

module attributes {stable_mosaic.version = 11 : i64} {
  func.func @_fused_conv_kernel(%arg0: i32, %arg1: memref<1x4x640xf32, #tpu.memory_space<vmem>>, %arg2: memref<1x640xf32, #tpu.memory_space<vmem>>, %arg3: memref<4x1xf32, #tpu.memory_space<vmem>>, %arg4: memref<4x1xf32, #tpu.memory_space<vmem>>, %arg5: memref<1x384xf32, #tpu.memory_space<vmem>>, %arg6: memref<8x36xbf16, #tpu.memory_space<vmem>>, %arg7: memref<8x1xf32, #tpu.memory_space<vmem>>, %arg8: memref<1x8x640xbf16, #tpu.memory_space<vmem>>, %arg9: memref<36x384xbf16, #tpu.memory_space<vmem>>) attributes {dimension_semantics = [#tpu.dimension_semantics<parallel>], iteration_bounds = array<i64: 2>, scalar_prefetch = 0 : i64, scratch_operands = 1 : i64, tpu.core_type = #tpu.core_type<tc>, window_params = [{transform_indices = @transform_0, window_bounds = array<i64: 1, 4, 640>}, {pipeline_mode = #tpu.pipeline_mode<synchronous>, transform_indices = @transform_1, window_bounds = array<i64: 1, 640>}, {pipeline_mode = #tpu.pipeline_mode<synchronous>, transform_indices = @transform_2, window_bounds = array<i64: 4, 1>}, {pipeline_mode = #tpu.pipeline_mode<synchronous>, transform_indices = @transform_3, window_bounds = array<i64: 4, 1>}, {pipeline_mode = #tpu.pipeline_mode<synchronous>, transform_indices = @transform_4, window_bounds = array<i64: 1, 384>}, {pipeline_mode = #tpu.pipeline_mode<synchronous>, transform_indices = @transform_5, window_bounds = array<i64: 8, 36>}, {pipeline_mode = #tpu.pipeline_mode<synchronous>, transform_indices = @transform_6, window_bounds = array<i64: 8, 1>}, {transform_indices = @transform_7, window_bounds = array<i64: 1, 8, 640>}]} {
    %c0 = arith.constant 0 : index
    %c0_0 = arith.constant 0 : index
    %c0_1 = arith.constant 0 : index
    %0 = vector.load %arg1[%c0, %c0_0, %c0_1] : memref<1x4x640xf32, #tpu.memory_space<vmem>>, vector<1x4x640xf32>
    %1 = vector.shape_cast %0 : vector<1x4x640xf32> to vector<4x640xf32>
    %c0_2 = arith.constant 0 : index
    %c0_3 = arith.constant 0 : index
    %2 = vector.load %arg2[%c0_2, %c0_3] : memref<1x640xf32, #tpu.memory_space<vmem>>, vector<1x640xf32>
    %cst = arith.constant dense<0.000000e+00> : vector<4xf32>
    %3 = vector.multi_reduction <add>, %1, %cst [1] : vector<4x640xf32> to vector<4xf32>
    %4 = vector.shape_cast %3 : vector<4xf32> to vector<4x1xf32>
    %cst_4 = arith.constant 3.906250e-03 : f32
    %5 = vector.broadcast %cst_4 : f32 to vector<4x1xf32>
    %6 = arith.mulf %4, %5 : vector<4x1xf32>
    %7 = vector.broadcast %6 : vector<4x1xf32> to vector<4x640xf32>
    %8 = arith.subf %1, %7 : vector<4x640xf32>
    %9 = vector.broadcast %2 : vector<1x640xf32> to vector<4x640xf32>
    %10 = arith.mulf %8, %9 : vector<4x640xf32>
    %11 = arith.mulf %10, %10 : vector<4x640xf32>
    %cst_5 = arith.constant dense<0.000000e+00> : vector<4xf32>
    %12 = vector.multi_reduction <add>, %11, %cst_5 [1] : vector<4x640xf32> to vector<4xf32>
    %13 = vector.shape_cast %12 : vector<4xf32> to vector<4x1xf32>
    %cst_6 = arith.constant 3.906250e-03 : f32
    %14 = vector.broadcast %cst_6 : f32 to vector<4x1xf32>
    %15 = arith.mulf %13, %14 : vector<4x1xf32>
    %cst_7 = arith.constant 9.99999974E-6 : f32
    %16 = vector.broadcast %cst_7 : f32 to vector<4x1xf32>
    %17 = arith.addf %15, %16 : vector<4x1xf32>
    %18 = math.rsqrt %17 : vector<4x1xf32>
    %19 = vector.broadcast %18 : vector<4x1xf32> to vector<4x640xf32>
    %20 = arith.mulf %10, %19 : vector<4x640xf32>
    %c0_8 = arith.constant 0 : index
    %c0_9 = arith.constant 0 : index
    %21 = vector.load %arg3[%c0_8, %c0_9] : memref<4x1xf32, #tpu.memory_space<vmem>>, vector<4x1xf32>
    %22 = vector.broadcast %21 : vector<4x1xf32> to vector<4x640xf32>
    %23 = arith.mulf %20, %22 : vector<4x640xf32>
    %c0_10 = arith.constant 0 : index
    %c0_11 = arith.constant 0 : index
    %24 = vector.load %arg4[%c0_10, %c0_11] : memref<4x1xf32, #tpu.memory_space<vmem>>, vector<4x1xf32>
    %25 = vector.broadcast %24 : vector<4x1xf32> to vector<4x640xf32>
    %26 = arith.addf %23, %25 : vector<4x640xf32>
    %cst_12 = arith.constant 5.000000e-01 : f32
    %27 = vector.broadcast %cst_12 : f32 to vector<4x640xf32>
    %28 = arith.mulf %27, %26 : vector<4x640xf32>
    %cst_13 = arith.constant 4.471500e-02 : f32
    %29 = vector.broadcast %cst_13 : f32 to vector<4x640xf32>
    %30 = arith.mulf %29, %26 : vector<4x640xf32>
    %31 = arith.mulf %30, %26 : vector<4x640xf32>
    %32 = arith.mulf %31, %26 : vector<4x640xf32>
    %33 = arith.addf %26, %32 : vector<4x640xf32>
    %cst_14 = arith.constant 0.797884583 : f32
    %34 = vector.broadcast %cst_14 : f32 to vector<4x640xf32>
    %35 = arith.mulf %34, %33 : vector<4x640xf32>
    %36 = math.tanh %35 : vector<4x640xf32>
    %cst_15 = arith.constant 1.000000e+00 : f32
    %37 = vector.broadcast %cst_15 : f32 to vector<4x640xf32>
    %38 = arith.addf %37, %36 : vector<4x640xf32>
    %39 = arith.mulf %28, %38 : vector<4x640xf32>
    %40 = vector.broadcast %2 : vector<1x640xf32> to vector<4x640xf32>
    %41 = arith.mulf %39, %40 : vector<4x640xf32>
    %42 = arith.truncf %41 : vector<4x640xf32> to vector<4x640xbf16>
    %43 = vector.extract_strided_slice %42 {offsets = [0, 109], sizes = [4, 384], strides = [1, 1]} : vector<4x640xbf16> to vector<4x384xbf16>
    %c0_16 = arith.constant 0 : index
    %c0_17 = arith.constant 0 : index
    %44 = vector.load %arg9[%c0_16, %c0_17] : memref<36x384xbf16, #tpu.memory_space<vmem>>, vector<4x384xbf16>
    tpu.vector_store %arg9[%c0_16, %c0_17], %43 {strides = array<i32>} : memref<36x384xbf16, #tpu.memory_space<vmem>>, vector<4x384xbf16>,
    %45 = vector.extract_strided_slice %42 {offsets = [0, 110], sizes = [4, 384], strides = [1, 1]} : vector<4x640xbf16> to vector<4x384xbf16>
    %c4 = arith.constant 4 : index
    %c0_18 = arith.constant 0 : index
    %46 = vector.load %arg9[%c4, %c0_18] : memref<36x384xbf16, #tpu.memory_space<vmem>>, vector<4x384xbf16>
    tpu.vector_store %arg9[%c4, %c0_18], %45 {strides = array<i32>} : memref<36x384xbf16, #tpu.memory_space<vmem>>, vector<4x384xbf16>,
    %47 = vector.extract_strided_slice %42 {offsets = [0, 111], sizes = [4, 384], strides = [1, 1]} : vector<4x640xbf16> to vector<4x384xbf16>
    %c8 = arith.constant 8 : index
    %c0_19 = arith.constant 0 : index
    %48 = vector.load %arg9[%c8, %c0_19] : memref<36x384xbf16, #tpu.memory_space<vmem>>, vector<4x384xbf16>
    tpu.vector_store %arg9[%c8, %c0_19], %47 {strides = array<i32>} : memref<36x384xbf16, #tpu.memory_space<vmem>>, vector<4x384xbf16>,
    %49 = vector.extract_strided_slice %42 {offsets = [0, 127], sizes = [4, 384], strides = [1, 1]} : vector<4x640xbf16> to vector<4x384xbf16>
    %c12 = arith.constant 12 : index
    %c0_20 = arith.constant 0 : index
    %50 = vector.load %arg9[%c12, %c0_20] : memref<36x384xbf16, #tpu.memory_space<vmem>>, vector<4x384xbf16>
    tpu.vector_store %arg9[%c12, %c0_20], %49 {strides = array<i32>} : memref<36x384xbf16, #tpu.memory_space<vmem>>, vector<4x384xbf16>,
    %51 = vector.extract_strided_slice %42 {offsets = [0, 128], sizes = [4, 384], strides = [1, 1]} : vector<4x640xbf16> to vector<4x384xbf16>
    %c16 = arith.constant 16 : index
    %c0_21 = arith.constant 0 : index
    %52 = vector.load %arg9[%c16, %c0_21] : memref<36x384xbf16, #tpu.memory_space<vmem>>, vector<4x384xbf16>
    tpu.vector_store %arg9[%c16, %c0_21], %51 {strides = array<i32>} : memref<36x384xbf16, #tpu.memory_space<vmem>>, vector<4x384xbf16>,
    %53 = vector.extract_strided_slice %42 {offsets = [0, 129], sizes = [4, 384], strides = [1, 1]} : vector<4x640xbf16> to vector<4x384xbf16>
    %c20 = arith.constant 20 : index
    %c0_22 = arith.constant 0 : index
    %54 = vector.load %arg9[%c20, %c0_22] : memref<36x384xbf16, #tpu.memory_space<vmem>>, vector<4x384xbf16>
    tpu.vector_store %arg9[%c20, %c0_22], %53 {strides = array<i32>} : memref<36x384xbf16, #tpu.memory_space<vmem>>, vector<4x384xbf16>,
    %55 = vector.extract_strided_slice %42 {offsets = [0, 145], sizes = [4, 384], strides = [1, 1]} : vector<4x640xbf16> to vector<4x384xbf16>
    %c24 = arith.constant 24 : index
    %c0_23 = arith.constant 0 : index
    %56 = vector.load %arg9[%c24, %c0_23] : memref<36x384xbf16, #tpu.memory_space<vmem>>, vector<4x384xbf16>
    tpu.vector_store %arg9[%c24, %c0_23], %55 {strides = array<i32>} : memref<36x384xbf16, #tpu.memory_space<vmem>>, vector<4x384xbf16>,
    %57 = vector.extract_strided_slice %42 {offsets = [0, 146], sizes = [4, 384], strides = [1, 1]} : vector<4x640xbf16> to vector<4x384xbf16>
    %c28 = arith.constant 28 : index
    %c0_24 = arith.constant 0 : index
    %58 = vector.load %arg9[%c28, %c0_24] : memref<36x384xbf16, #tpu.memory_space<vmem>>, vector<4x384xbf16>
    tpu.vector_store %arg9[%c28, %c0_24], %57 {strides = array<i32>} : memref<36x384xbf16, #tpu.memory_space<vmem>>, vector<4x384xbf16>,
    %59 = vector.extract_strided_slice %42 {offsets = [0, 147], sizes = [4, 384], strides = [1, 1]} : vector<4x640xbf16> to vector<4x384xbf16>
    %c32 = arith.constant 32 : index
    %c0_25 = arith.constant 0 : index
    %60 = vector.load %arg9[%c32, %c0_25] : memref<36x384xbf16, #tpu.memory_space<vmem>>, vector<4x384xbf16>
    tpu.vector_store %arg9[%c32, %c0_25], %59 {strides = array<i32>} : memref<36x384xbf16, #tpu.memory_space<vmem>>, vector<4x384xbf16>,
    %c0_26 = arith.constant 0 : index
    %c0_27 = arith.constant 0 : index
    %61 = vector.load %arg6[%c0_26, %c0_27] : memref<8x36xbf16, #tpu.memory_space<vmem>>, vector<8x36xbf16>
    %c0_28 = arith.constant 0 : index
    %c0_29 = arith.constant 0 : index
    %62 = vector.load %arg9[%c0_28, %c0_29] : memref<36x384xbf16, #tpu.memory_space<vmem>>, vector<36x384xbf16>
    %cst_30 = arith.constant dense<0.000000e+00> : vector<8x384xf32>
    %63 = tpu.matmul %61, %62, %cst_30 {dimension_numbers = #tpu.dot_dimension_numbers<[1], [0], [0], [1], [0, 0, 1, 1], [], []>} : vector<8x36xbf16>, vector<36x384xbf16>, vector<8x384xf32> -> vector<8x384xf32>
    %c0_31 = arith.constant 0 : index
    %c0_32 = arith.constant 0 : index
    %64 = vector.load %arg7[%c0_31, %c0_32] : memref<8x1xf32, #tpu.memory_space<vmem>>, vector<8x1xf32>
    %65 = vector.broadcast %64 : vector<8x1xf32> to vector<8x384xf32>
    %66 = arith.addf %63, %65 : vector<8x384xf32>
    %c0_33 = arith.constant 0 : index
    %c0_34 = arith.constant 0 : index
    %67 = vector.load %arg5[%c0_33, %c0_34] : memref<1x384xf32, #tpu.memory_space<vmem>>, vector<1x384xf32>
    %68 = vector.broadcast %67 : vector<1x384xf32> to vector<8x384xf32>
    %69 = arith.mulf %66, %68 : vector<8x384xf32>
    %70 = arith.truncf %69 : vector<8x384xf32> to vector<8x384xbf16>
    %cst_35 = arith.constant 0.000000e+00 : bf16
    %71 = vector.broadcast %cst_35 : bf16 to vector<8x128xbf16>
    %cst_36 = arith.constant 0.000000e+00 : bf16
    %72 = vector.broadcast %cst_36 : bf16 to vector<8x128xbf16>
    %73 = tpu.concatenate %71, %70, %72 in 1 : vector<8x128xbf16>, vector<8x384xbf16>, vector<8x128xbf16> -> vector<8x640xbf16>
    %c0_37 = arith.constant 0 : index
    %c0_38 = arith.constant 0 : index
    %c0_39 = arith.constant 0 : index
    %74 = vector.load %arg8[%c0_37, %c0_38, %c0_39] : memref<1x8x640xbf16, #tpu.memory_space<vmem>>, vector<1x8x640xbf16>
    %75 = vector.shape_cast %74 : vector<1x8x640xbf16> to vector<8x640xbf16>
    %76 = vector.shape_cast %73 : vector<8x640xbf16> to vector<1x8x640xbf16>
    tpu.vector_store %arg8[%c0_37, %c0_38, %c0_39], %76 {strides = array<i32>} : memref<1x8x640xbf16, #tpu.memory_space<vmem>>, vector<1x8x640xbf16>,
    return
  }
  func.func @transform_0(%arg0: i32) -> (i32, i32, i32) {
    %c0_i32 = arith.constant 0 : i32
    %c0_i32_0 = arith.constant 0 : i32
    %c0_i32_1 = arith.constant 0 : i32
    return %arg0, %c0_i32, %c0_i32_0 : i32, i32, i32
  }
  func.func @transform_1(%arg0: i32) -> (i32, i32) {
    %c0_i32 = arith.constant 0 : i32
    %c0_i32_0 = arith.constant 0 : i32
    %c0_i32_1 = arith.constant 0 : i32
    return %c0_i32, %c0_i32_0 : i32, i32
  }
  func.func @transform_2(%arg0: i32) -> (i32, i32) {
    %c0_i32 = arith.constant 0 : i32
    %c0_i32_0 = arith.constant 0 : i32
    %c0_i32_1 = arith.constant 0 : i32
    return %c0_i32, %c0_i32_0 : i32, i32
  }
  func.func @transform_3(%arg0: i32) -> (i32, i32) {
    %c0_i32 = arith.constant 0 : i32
    %c0_i32_0 = arith.constant 0 : i32
    %c0_i32_1 = arith.constant 0 : i32
    return %c0_i32, %c0_i32_0 : i32, i32
  }
  func.func @transform_4(%arg0: i32) -> (i32, i32) {
    %c0_i32 = arith.constant 0 : i32
    %c0_i32_0 = arith.constant 0 : i32
    %c0_i32_1 = arith.constant 0 : i32
    return %c0_i32, %c0_i32_0 : i32, i32
  }
  func.func @transform_5(%arg0: i32) -> (i32, i32) {
    %c0_i32 = arith.constant 0 : i32
    %c0_i32_0 = arith.constant 0 : i32
    %c0_i32_1 = arith.constant 0 : i32
    return %c0_i32, %c0_i32_0 : i32, i32
  }
  func.func @transform_6(%arg0: i32) -> (i32, i32) {
    %c0_i32 = arith.constant 0 : i32
    %c0_i32_0 = arith.constant 0 : i32
    %c0_i32_1 = arith.constant 0 : i32
    return %c0_i32, %c0_i32_0 : i32, i32
  }
  func.func @transform_7(%arg0: i32) -> (i32, i32, i32) {
    %c0_i32 = arith.constant 0 : i32
    %c0_i32_0 = arith.constant 0 : i32
    %c0_i32_1 = arith.constant 0 : i32
    return %arg0, %c0_i32, %c0_i32_0 : i32, i32, i32
  }
}

module attributes {stable_mosaic.version = 11 : i64} {
  func.func @_fused_conv_kernel(%arg0: i32, %arg1: memref<1x8x640xbf16, #tpu.memory_space<vmem>>, %arg2: memref<1x640xf32, #tpu.memory_space<vmem>>, %arg3: memref<8x1xf32, #tpu.memory_space<vmem>>, %arg4: memref<8x1xf32, #tpu.memory_space<vmem>>, %arg5: memref<1x384xf32, #tpu.memory_space<vmem>>, %arg6: memref<8x72xbf16, #tpu.memory_space<vmem>>, %arg7: memref<8x1xf32, #tpu.memory_space<vmem>>, %arg8: memref<1x8x640xbf16, #tpu.memory_space<vmem>>, %arg9: memref<72x384xbf16, #tpu.memory_space<vmem>>) attributes {dimension_semantics = [#tpu.dimension_semantics<parallel>], iteration_bounds = array<i64: 2>, scalar_prefetch = 0 : i64, scratch_operands = 1 : i64, tpu.core_type = #tpu.core_type<tc>, window_params = [{transform_indices = @transform_0, window_bounds = array<i64: 1, 8, 640>}, {pipeline_mode = #tpu.pipeline_mode<synchronous>, transform_indices = @transform_1, window_bounds = array<i64: 1, 640>}, {pipeline_mode = #tpu.pipeline_mode<synchronous>, transform_indices = @transform_2, window_bounds = array<i64: 8, 1>}, {pipeline_mode = #tpu.pipeline_mode<synchronous>, transform_indices = @transform_3, window_bounds = array<i64: 8, 1>}, {pipeline_mode = #tpu.pipeline_mode<synchronous>, transform_indices = @transform_4, window_bounds = array<i64: 1, 384>}, {pipeline_mode = #tpu.pipeline_mode<synchronous>, transform_indices = @transform_5, window_bounds = array<i64: 8, 72>}, {pipeline_mode = #tpu.pipeline_mode<synchronous>, transform_indices = @transform_6, window_bounds = array<i64: 8, 1>}, {transform_indices = @transform_7, window_bounds = array<i64: 1, 8, 640>}]} {
    %c0 = arith.constant 0 : index
    %c0_0 = arith.constant 0 : index
    %c0_1 = arith.constant 0 : index
    %0 = vector.load %arg1[%c0, %c0_0, %c0_1] : memref<1x8x640xbf16, #tpu.memory_space<vmem>>, vector<1x8x640xbf16>
    %1 = vector.shape_cast %0 : vector<1x8x640xbf16> to vector<8x640xbf16>
    %2 = arith.extf %1 : vector<8x640xbf16> to vector<8x640xf32>
    %c0_2 = arith.constant 0 : index
    %c0_3 = arith.constant 0 : index
    %3 = vector.load %arg2[%c0_2, %c0_3] : memref<1x640xf32, #tpu.memory_space<vmem>>, vector<1x640xf32>
    %cst = arith.constant dense<0.000000e+00> : vector<8xf32>
    %4 = vector.multi_reduction <add>, %2, %cst [1] : vector<8x640xf32> to vector<8xf32>
    %5 = vector.shape_cast %4 : vector<8xf32> to vector<8x1xf32>
    %cst_4 = arith.constant 3.906250e-03 : f32
    %6 = vector.broadcast %cst_4 : f32 to vector<8x1xf32>
    %7 = arith.mulf %5, %6 : vector<8x1xf32>
    %8 = vector.broadcast %7 : vector<8x1xf32> to vector<8x640xf32>
    %9 = arith.subf %2, %8 : vector<8x640xf32>
    %10 = vector.broadcast %3 : vector<1x640xf32> to vector<8x640xf32>
    %11 = arith.mulf %9, %10 : vector<8x640xf32>
    %12 = arith.mulf %11, %11 : vector<8x640xf32>
    %cst_5 = arith.constant dense<0.000000e+00> : vector<8xf32>
    %13 = vector.multi_reduction <add>, %12, %cst_5 [1] : vector<8x640xf32> to vector<8xf32>
    %14 = vector.shape_cast %13 : vector<8xf32> to vector<8x1xf32>
    %cst_6 = arith.constant 3.906250e-03 : f32
    %15 = vector.broadcast %cst_6 : f32 to vector<8x1xf32>
    %16 = arith.mulf %14, %15 : vector<8x1xf32>
    %cst_7 = arith.constant 9.99999974E-6 : f32
    %17 = vector.broadcast %cst_7 : f32 to vector<8x1xf32>
    %18 = arith.addf %16, %17 : vector<8x1xf32>
    %19 = math.rsqrt %18 : vector<8x1xf32>
    %20 = vector.broadcast %19 : vector<8x1xf32> to vector<8x640xf32>
    %21 = arith.mulf %11, %20 : vector<8x640xf32>
    %c0_8 = arith.constant 0 : index
    %c0_9 = arith.constant 0 : index
    %22 = vector.load %arg3[%c0_8, %c0_9] : memref<8x1xf32, #tpu.memory_space<vmem>>, vector<8x1xf32>
    %23 = vector.broadcast %22 : vector<8x1xf32> to vector<8x640xf32>
    %24 = arith.mulf %21, %23 : vector<8x640xf32>
    %c0_10 = arith.constant 0 : index
    %c0_11 = arith.constant 0 : index
    %25 = vector.load %arg4[%c0_10, %c0_11] : memref<8x1xf32, #tpu.memory_space<vmem>>, vector<8x1xf32>
    %26 = vector.broadcast %25 : vector<8x1xf32> to vector<8x640xf32>
    %27 = arith.addf %24, %26 : vector<8x640xf32>
    %cst_12 = arith.constant 5.000000e-01 : f32
    %28 = vector.broadcast %cst_12 : f32 to vector<8x640xf32>
    %29 = arith.mulf %28, %27 : vector<8x640xf32>
    %cst_13 = arith.constant 4.471500e-02 : f32
    %30 = vector.broadcast %cst_13 : f32 to vector<8x640xf32>
    %31 = arith.mulf %30, %27 : vector<8x640xf32>
    %32 = arith.mulf %31, %27 : vector<8x640xf32>
    %33 = arith.mulf %32, %27 : vector<8x640xf32>
    %34 = arith.addf %27, %33 : vector<8x640xf32>
    %cst_14 = arith.constant 0.797884583 : f32
    %35 = vector.broadcast %cst_14 : f32 to vector<8x640xf32>
    %36 = arith.mulf %35, %34 : vector<8x640xf32>
    %37 = math.tanh %36 : vector<8x640xf32>
    %cst_15 = arith.constant 1.000000e+00 : f32
    %38 = vector.broadcast %cst_15 : f32 to vector<8x640xf32>
    %39 = arith.addf %38, %37 : vector<8x640xf32>
    %40 = arith.mulf %29, %39 : vector<8x640xf32>
    %41 = vector.broadcast %3 : vector<1x640xf32> to vector<8x640xf32>
    %42 = arith.mulf %40, %41 : vector<8x640xf32>
    %43 = arith.truncf %42 : vector<8x640xf32> to vector<8x640xbf16>
    %44 = vector.extract_strided_slice %43 {offsets = [0, 109], sizes = [8, 384], strides = [1, 1]} : vector<8x640xbf16> to vector<8x384xbf16>
    %c0_16 = arith.constant 0 : index
    %c0_17 = arith.constant 0 : index
    %45 = vector.load %arg9[%c0_16, %c0_17] : memref<72x384xbf16, #tpu.memory_space<vmem>>, vector<8x384xbf16>
    tpu.vector_store %arg9[%c0_16, %c0_17], %44 {strides = array<i32>} : memref<72x384xbf16, #tpu.memory_space<vmem>>, vector<8x384xbf16>,
    %46 = vector.extract_strided_slice %43 {offsets = [0, 110], sizes = [8, 384], strides = [1, 1]} : vector<8x640xbf16> to vector<8x384xbf16>
    %c8 = arith.constant 8 : index
    %c0_18 = arith.constant 0 : index
    %47 = vector.load %arg9[%c8, %c0_18] : memref<72x384xbf16, #tpu.memory_space<vmem>>, vector<8x384xbf16>
    tpu.vector_store %arg9[%c8, %c0_18], %46 {strides = array<i32>} : memref<72x384xbf16, #tpu.memory_space<vmem>>, vector<8x384xbf16>,
    %48 = vector.extract_strided_slice %43 {offsets = [0, 111], sizes = [8, 384], strides = [1, 1]} : vector<8x640xbf16> to vector<8x384xbf16>
    %c16 = arith.constant 16 : index
    %c0_19 = arith.constant 0 : index
    %49 = vector.load %arg9[%c16, %c0_19] : memref<72x384xbf16, #tpu.memory_space<vmem>>, vector<8x384xbf16>
    tpu.vector_store %arg9[%c16, %c0_19], %48 {strides = array<i32>} : memref<72x384xbf16, #tpu.memory_space<vmem>>, vector<8x384xbf16>,
    %50 = vector.extract_strided_slice %43 {offsets = [0, 127], sizes = [8, 384], strides = [1, 1]} : vector<8x640xbf16> to vector<8x384xbf16>
    %c24 = arith.constant 24 : index
    %c0_20 = arith.constant 0 : index
    %51 = vector.load %arg9[%c24, %c0_20] : memref<72x384xbf16, #tpu.memory_space<vmem>>, vector<8x384xbf16>
    tpu.vector_store %arg9[%c24, %c0_20], %50 {strides = array<i32>} : memref<72x384xbf16, #tpu.memory_space<vmem>>, vector<8x384xbf16>,
    %52 = vector.extract_strided_slice %43 {offsets = [0, 128], sizes = [8, 384], strides = [1, 1]} : vector<8x640xbf16> to vector<8x384xbf16>
    %c32 = arith.constant 32 : index
    %c0_21 = arith.constant 0 : index
    %53 = vector.load %arg9[%c32, %c0_21] : memref<72x384xbf16, #tpu.memory_space<vmem>>, vector<8x384xbf16>
    tpu.vector_store %arg9[%c32, %c0_21], %52 {strides = array<i32>} : memref<72x384xbf16, #tpu.memory_space<vmem>>, vector<8x384xbf16>,
    %54 = vector.extract_strided_slice %43 {offsets = [0, 129], sizes = [8, 384], strides = [1, 1]} : vector<8x640xbf16> to vector<8x384xbf16>
    %c40 = arith.constant 40 : index
    %c0_22 = arith.constant 0 : index
    %55 = vector.load %arg9[%c40, %c0_22] : memref<72x384xbf16, #tpu.memory_space<vmem>>, vector<8x384xbf16>
    tpu.vector_store %arg9[%c40, %c0_22], %54 {strides = array<i32>} : memref<72x384xbf16, #tpu.memory_space<vmem>>, vector<8x384xbf16>,
    %56 = vector.extract_strided_slice %43 {offsets = [0, 145], sizes = [8, 384], strides = [1, 1]} : vector<8x640xbf16> to vector<8x384xbf16>
    %c48 = arith.constant 48 : index
    %c0_23 = arith.constant 0 : index
    %57 = vector.load %arg9[%c48, %c0_23] : memref<72x384xbf16, #tpu.memory_space<vmem>>, vector<8x384xbf16>
    tpu.vector_store %arg9[%c48, %c0_23], %56 {strides = array<i32>} : memref<72x384xbf16, #tpu.memory_space<vmem>>, vector<8x384xbf16>,
    %58 = vector.extract_strided_slice %43 {offsets = [0, 146], sizes = [8, 384], strides = [1, 1]} : vector<8x640xbf16> to vector<8x384xbf16>
    %c56 = arith.constant 56 : index
    %c0_24 = arith.constant 0 : index
    %59 = vector.load %arg9[%c56, %c0_24] : memref<72x384xbf16, #tpu.memory_space<vmem>>, vector<8x384xbf16>
    tpu.vector_store %arg9[%c56, %c0_24], %58 {strides = array<i32>} : memref<72x384xbf16, #tpu.memory_space<vmem>>, vector<8x384xbf16>,
    %60 = vector.extract_strided_slice %43 {offsets = [0, 147], sizes = [8, 384], strides = [1, 1]} : vector<8x640xbf16> to vector<8x384xbf16>
    %c64 = arith.constant 64 : index
    %c0_25 = arith.constant 0 : index
    %61 = vector.load %arg9[%c64, %c0_25] : memref<72x384xbf16, #tpu.memory_space<vmem>>, vector<8x384xbf16>
    tpu.vector_store %arg9[%c64, %c0_25], %60 {strides = array<i32>} : memref<72x384xbf16, #tpu.memory_space<vmem>>, vector<8x384xbf16>,
    %c0_26 = arith.constant 0 : index
    %c0_27 = arith.constant 0 : index
    %62 = vector.load %arg6[%c0_26, %c0_27] : memref<8x72xbf16, #tpu.memory_space<vmem>>, vector<8x72xbf16>
    %c0_28 = arith.constant 0 : index
    %c0_29 = arith.constant 0 : index
    %63 = vector.load %arg9[%c0_28, %c0_29] : memref<72x384xbf16, #tpu.memory_space<vmem>>, vector<72x384xbf16>
    %cst_30 = arith.constant dense<0.000000e+00> : vector<8x384xf32>
    %64 = tpu.matmul %62, %63, %cst_30 {dimension_numbers = #tpu.dot_dimension_numbers<[1], [0], [0], [1], [0, 0, 1, 1], [], []>} : vector<8x72xbf16>, vector<72x384xbf16>, vector<8x384xf32> -> vector<8x384xf32>
    %c0_31 = arith.constant 0 : index
    %c0_32 = arith.constant 0 : index
    %65 = vector.load %arg7[%c0_31, %c0_32] : memref<8x1xf32, #tpu.memory_space<vmem>>, vector<8x1xf32>
    %66 = vector.broadcast %65 : vector<8x1xf32> to vector<8x384xf32>
    %67 = arith.addf %64, %66 : vector<8x384xf32>
    %c0_33 = arith.constant 0 : index
    %c0_34 = arith.constant 0 : index
    %68 = vector.load %arg5[%c0_33, %c0_34] : memref<1x384xf32, #tpu.memory_space<vmem>>, vector<1x384xf32>
    %69 = vector.broadcast %68 : vector<1x384xf32> to vector<8x384xf32>
    %70 = arith.mulf %67, %69 : vector<8x384xf32>
    %71 = arith.truncf %70 : vector<8x384xf32> to vector<8x384xbf16>
    %cst_35 = arith.constant 0.000000e+00 : bf16
    %72 = vector.broadcast %cst_35 : bf16 to vector<8x128xbf16>
    %cst_36 = arith.constant 0.000000e+00 : bf16
    %73 = vector.broadcast %cst_36 : bf16 to vector<8x128xbf16>
    %74 = tpu.concatenate %72, %71, %73 in 1 : vector<8x128xbf16>, vector<8x384xbf16>, vector<8x128xbf16> -> vector<8x640xbf16>
    %c0_37 = arith.constant 0 : index
    %c0_38 = arith.constant 0 : index
    %c0_39 = arith.constant 0 : index
    %75 = vector.load %arg8[%c0_37, %c0_38, %c0_39] : memref<1x8x640xbf16, #tpu.memory_space<vmem>>, vector<1x8x640xbf16>
    %76 = vector.shape_cast %75 : vector<1x8x640xbf16> to vector<8x640xbf16>
    %77 = vector.shape_cast %74 : vector<8x640xbf16> to vector<1x8x640xbf16>
    tpu.vector_store %arg8[%c0_37, %c0_38, %c0_39], %77 {strides = array<i32>} : memref<1x8x640xbf16, #tpu.memory_space<vmem>>, vector<1x8x640xbf16>,
    return
  }
  func.func @transform_0(%arg0: i32) -> (i32, i32, i32) {
    %c0_i32 = arith.constant 0 : i32
    %c0_i32_0 = arith.constant 0 : i32
    %c0_i32_1 = arith.constant 0 : i32
    return %arg0, %c0_i32, %c0_i32_0 : i32, i32, i32
  }
  func.func @transform_1(%arg0: i32) -> (i32, i32) {
    %c0_i32 = arith.constant 0 : i32
    %c0_i32_0 = arith.constant 0 : i32
    %c0_i32_1 = arith.constant 0 : i32
    return %c0_i32, %c0_i32_0 : i32, i32
  }
  func.func @transform_2(%arg0: i32) -> (i32, i32) {
    %c0_i32 = arith.constant 0 : i32
    %c0_i32_0 = arith.constant 0 : i32
    %c0_i32_1 = arith.constant 0 : i32
    return %c0_i32, %c0_i32_0 : i32, i32
  }
  func.func @transform_3(%arg0: i32) -> (i32, i32) {
    %c0_i32 = arith.constant 0 : i32
    %c0_i32_0 = arith.constant 0 : i32
    %c0_i32_1 = arith.constant 0 : i32
    return %c0_i32, %c0_i32_0 : i32, i32
  }
  func.func @transform_4(%arg0: i32) -> (i32, i32) {
    %c0_i32 = arith.constant 0 : i32
    %c0_i32_0 = arith.constant 0 : i32
    %c0_i32_1 = arith.constant 0 : i32
    return %c0_i32, %c0_i32_0 : i32, i32
  }
  func.func @transform_5(%arg0: i32) -> (i32, i32) {
    %c0_i32 = arith.constant 0 : i32
    %c0_i32_0 = arith.constant 0 : i32
    %c0_i32_1 = arith.constant 0 : i32
    return %c0_i32, %c0_i32_0 : i32, i32
  }
  func.func @transform_6(%arg0: i32) -> (i32, i32) {
    %c0_i32 = arith.constant 0 : i32
    %c0_i32_0 = arith.constant 0 : i32
    %c0_i32_1 = arith.constant 0 : i32
    return %c0_i32, %c0_i32_0 : i32, i32
  }
  func.func @transform_7(%arg0: i32) -> (i32, i32, i32) {
    %c0_i32 = arith.constant 0 : i32
    %c0_i32_0 = arith.constant 0 : i32
    %c0_i32_1 = arith.constant 0 : i32
    return %arg0, %c0_i32, %c0_i32_0 : i32, i32, i32
  }
}

module attributes {stable_mosaic.version = 11 : i64} {
  func.func @_eca_combine_kernel(%arg0: i32, %arg1: memref<1x8x640xbf16, #tpu.memory_space<vmem>>, %arg2: memref<1x8x640xbf16, #tpu.memory_space<vmem>>, %arg3: memref<1x640xf32, #tpu.memory_space<vmem>>, %arg4: memref<8x1xf32, #tpu.memory_space<vmem>>, %arg5: memref<8x1xf32, #tpu.memory_space<vmem>>, %arg6: memref<8x8xf32, #tpu.memory_space<vmem>>, %arg7: memref<1x8x640xf32, #tpu.memory_space<vmem>>) attributes {dimension_semantics = [#tpu.dimension_semantics<parallel>], iteration_bounds = array<i64: 2>, scalar_prefetch = 0 : i64, scratch_operands = 0 : i64, tpu.core_type = #tpu.core_type<tc>, window_params = [{transform_indices = @transform_0, window_bounds = array<i64: 1, 8, 640>}, {transform_indices = @transform_1, window_bounds = array<i64: 1, 8, 640>}, {pipeline_mode = #tpu.pipeline_mode<synchronous>, transform_indices = @transform_2, window_bounds = array<i64: 1, 640>}, {pipeline_mode = #tpu.pipeline_mode<synchronous>, transform_indices = @transform_3, window_bounds = array<i64: 8, 1>}, {pipeline_mode = #tpu.pipeline_mode<synchronous>, transform_indices = @transform_4, window_bounds = array<i64: 8, 1>}, {pipeline_mode = #tpu.pipeline_mode<synchronous>, transform_indices = @transform_5, window_bounds = array<i64: 8, 8>}, {transform_indices = @transform_6, window_bounds = array<i64: 1, 8, 640>}]} {
    %c0 = arith.constant 0 : index
    %c0_0 = arith.constant 0 : index
    %c0_1 = arith.constant 0 : index
    %0 = vector.load %arg1[%c0, %c0_0, %c0_1] : memref<1x8x640xbf16, #tpu.memory_space<vmem>>, vector<1x8x640xbf16>
    %1 = vector.shape_cast %0 : vector<1x8x640xbf16> to vector<8x640xbf16>
    %2 = arith.extf %1 : vector<8x640xbf16> to vector<8x640xf32>
    %c0_2 = arith.constant 0 : index
    %c0_3 = arith.constant 0 : index
    %c0_4 = arith.constant 0 : index
    %3 = vector.load %arg2[%c0_2, %c0_3, %c0_4] : memref<1x8x640xbf16, #tpu.memory_space<vmem>>, vector<1x8x640xbf16>
    %4 = vector.shape_cast %3 : vector<1x8x640xbf16> to vector<8x640xbf16>
    %5 = arith.extf %4 : vector<8x640xbf16> to vector<8x640xf32>
    %c0_5 = arith.constant 0 : index
    %c0_6 = arith.constant 0 : index
    %6 = vector.load %arg3[%c0_5, %c0_6] : memref<1x640xf32, #tpu.memory_space<vmem>>, vector<1x640xf32>
    %cst = arith.constant dense<0.000000e+00> : vector<8xf32>
    %7 = vector.multi_reduction <add>, %5, %cst [1] : vector<8x640xf32> to vector<8xf32>
    %8 = vector.shape_cast %7 : vector<8xf32> to vector<8x1xf32>
    %cst_7 = arith.constant 3.906250e-03 : f32
    %9 = vector.broadcast %cst_7 : f32 to vector<8x1xf32>
    %10 = arith.mulf %8, %9 : vector<8x1xf32>
    %11 = vector.broadcast %10 : vector<8x1xf32> to vector<8x640xf32>
    %12 = arith.subf %5, %11 : vector<8x640xf32>
    %13 = vector.broadcast %6 : vector<1x640xf32> to vector<8x640xf32>
    %14 = arith.mulf %12, %13 : vector<8x640xf32>
    %15 = arith.mulf %14, %14 : vector<8x640xf32>
    %cst_8 = arith.constant dense<0.000000e+00> : vector<8xf32>
    %16 = vector.multi_reduction <add>, %15, %cst_8 [1] : vector<8x640xf32> to vector<8xf32>
    %17 = vector.shape_cast %16 : vector<8xf32> to vector<8x1xf32>
    %cst_9 = arith.constant 3.906250e-03 : f32
    %18 = vector.broadcast %cst_9 : f32 to vector<8x1xf32>
    %19 = arith.mulf %17, %18 : vector<8x1xf32>
    %cst_10 = arith.constant 9.99999974E-6 : f32
    %20 = vector.broadcast %cst_10 : f32 to vector<8x1xf32>
    %21 = arith.addf %19, %20 : vector<8x1xf32>
    %22 = math.rsqrt %21 : vector<8x1xf32>
    %23 = vector.broadcast %22 : vector<8x1xf32> to vector<8x640xf32>
    %24 = arith.mulf %12, %23 : vector<8x640xf32>
    %c0_11 = arith.constant 0 : index
    %c0_12 = arith.constant 0 : index
    %25 = vector.load %arg4[%c0_11, %c0_12] : memref<8x1xf32, #tpu.memory_space<vmem>>, vector<8x1xf32>
    %26 = vector.broadcast %25 : vector<8x1xf32> to vector<8x640xf32>
    %27 = arith.mulf %24, %26 : vector<8x640xf32>
    %c0_13 = arith.constant 0 : index
    %c0_14 = arith.constant 0 : index
    %28 = vector.load %arg5[%c0_13, %c0_14] : memref<8x1xf32, #tpu.memory_space<vmem>>, vector<8x1xf32>
    %29 = vector.broadcast %28 : vector<8x1xf32> to vector<8x640xf32>
    %30 = arith.addf %27, %29 : vector<8x640xf32>
    %cst_15 = arith.constant dense<0.000000e+00> : vector<8xf32>
    %31 = vector.multi_reduction <add>, %2, %cst_15 [1] : vector<8x640xf32> to vector<8xf32>
    %32 = vector.shape_cast %31 : vector<8xf32> to vector<8x1xf32>
    %cst_16 = arith.constant 3.906250e-03 : f32
    %33 = vector.broadcast %cst_16 : f32 to vector<8x1xf32>
    %34 = arith.mulf %32, %33 : vector<8x1xf32>
    %c0_17 = arith.constant 0 : index
    %c0_18 = arith.constant 0 : index
    %35 = vector.load %arg6[%c0_17, %c0_18] : memref<8x8xf32, #tpu.memory_space<vmem>>, vector<8x8xf32>
    %36 = vector.shape_cast %34 : vector<8x1xf32> to vector<8x1xf32>
    %37 = vector.broadcast %36 : vector<8x1xf32> to vector<8x128xf32>
    %cst_19 = arith.constant dense<0.000000e+00> : vector<8x128xf32>
    %38 = tpu.matmul %35, %37, %cst_19 {dimension_numbers = #tpu.dot_dimension_numbers<[1], [0], [0], [1], [0, 0, 1, 1], [], []>} : vector<8x8xf32>, vector<8x128xf32>, vector<8x128xf32> -> vector<8x128xf32>
    %39 = vector.extract_strided_slice %38 {offsets = [0, 0], sizes = [8, 1], strides = [1, 1]} : vector<8x128xf32> to vector<8x1xf32>
    %40 = arith.negf %39 : vector<8x1xf32>
    %41 = math.exp %40 : vector<8x1xf32>
    %cst_20 = arith.constant 1.000000e+00 : f32
    %42 = vector.broadcast %cst_20 : f32 to vector<8x1xf32>
    %43 = arith.addf %42, %41 : vector<8x1xf32>
    %44 = arith.divf %42, %43 : vector<8x1xf32>
    %45 = vector.broadcast %44 : vector<8x1xf32> to vector<8x640xf32>
    %46 = arith.mulf %2, %45 : vector<8x640xf32>
    %47 = arith.addf %46, %30 : vector<8x640xf32>
    %c0_21 = arith.constant 0 : index
    %c0_22 = arith.constant 0 : index
    %c0_23 = arith.constant 0 : index
    %48 = vector.load %arg7[%c0_21, %c0_22, %c0_23] : memref<1x8x640xf32, #tpu.memory_space<vmem>>, vector<1x8x640xf32>
    %49 = vector.shape_cast %48 : vector<1x8x640xf32> to vector<8x640xf32>
    %50 = vector.shape_cast %47 : vector<8x640xf32> to vector<1x8x640xf32>
    tpu.vector_store %arg7[%c0_21, %c0_22, %c0_23], %50 {strides = array<i32>} : memref<1x8x640xf32, #tpu.memory_space<vmem>>, vector<1x8x640xf32>,
    return
  }
  func.func @transform_0(%arg0: i32) -> (i32, i32, i32) {
    %c0_i32 = arith.constant 0 : i32
    %c0_i32_0 = arith.constant 0 : i32
    %c0_i32_1 = arith.constant 0 : i32
    return %arg0, %c0_i32, %c0_i32_0 : i32, i32, i32
  }
  func.func @transform_1(%arg0: i32) -> (i32, i32, i32) {
    %c0_i32 = arith.constant 0 : i32
    %c0_i32_0 = arith.constant 0 : i32
    %c0_i32_1 = arith.constant 0 : i32
    return %arg0, %c0_i32, %c0_i32_0 : i32, i32, i32
  }
  func.func @transform_2(%arg0: i32) -> (i32, i32) {
    %c0_i32 = arith.constant 0 : i32
    %c0_i32_0 = arith.constant 0 : i32
    %c0_i32_1 = arith.constant 0 : i32
    return %c0_i32, %c0_i32_0 : i32, i32
  }
  func.func @transform_3(%arg0: i32) -> (i32, i32) {
    %c0_i32 = arith.constant 0 : i32
    %c0_i32_0 = arith.constant 0 : i32
    %c0_i32_1 = arith.constant 0 : i32
    return %c0_i32, %c0_i32_0 : i32, i32
  }
  func.func @transform_4(%arg0: i32) -> (i32, i32) {
    %c0_i32 = arith.constant 0 : i32
    %c0_i32_0 = arith.constant 0 : i32
    %c0_i32_1 = arith.constant 0 : i32
    return %c0_i32, %c0_i32_0 : i32, i32
  }
  func.func @transform_5(%arg0: i32) -> (i32, i32) {
    %c0_i32 = arith.constant 0 : i32
    %c0_i32_0 = arith.constant 0 : i32
    %c0_i32_1 = arith.constant 0 : i32
    return %c0_i32, %c0_i32_0 : i32, i32
  }
  func.func @transform_6(%arg0: i32) -> (i32, i32, i32) {
    %c0_i32 = arith.constant 0 : i32
    %c0_i32_0 = arith.constant 0 : i32
    %c0_i32_1 = arith.constant 0 : i32
    return %arg0, %c0_i32, %c0_i32_0 : i32, i32, i32
  }
}

</mosaic_0001>

<llo_original>
// kernel: a_call__.4
$region0: #{a_call__.4}
  #allocation0 [shape = 'u32[]', space=smem, size = 0x4, offset = 0x4, fixed_abs, tag = 'smem constant byte address 0x4 - core index']
  #allocation1 [shape = 'u32[144,128]{1,0:T(1,128)}', space=vmem, size = 0x12000, scoped, tag = 'internal scratch']
  #allocation2 [shape = 'bf16[36,384]{1,0:T(8,128)(2,1)}', space=vmem, size = 0x7800, scoped, tag = 'scratch operand']
  %s0 = inlined_call_operand.vmem [shape: f32[2,4,640], index: 0, kind: input, shape index: {}]
  %s1 = inlined_call_operand.vmem [shape: f32[1,640], index: 1, kind: input, shape index: {}]
  %s2 = inlined_call_operand.vmem [shape: f32[4,1], index: 2, kind: input, shape index: {}]
  %s3 = inlined_call_operand.vmem [shape: f32[4,1], index: 3, kind: input, shape index: {}]
  %s4 = inlined_call_operand.vmem [shape: f32[1,384], index: 4, kind: input, shape index: {}]
  %s5 = inlined_call_operand.vmem [shape: bf16[8,36], index: 5, kind: input, shape index: {}]
  %s6 = inlined_call_operand.vmem [shape: f32[8,1], index: 6, kind: input, shape index: {}]
  %s7 = inlined_call_operand.vmem [shape: bf16[2,8,640], index: 7, kind: output, shape index: {}]
  %s8 = sld [smem:[#allocation0]]
  $region61: #{a_call__.4} parent=0
    _
  %s10 = ssub.s32 1, %s8
  %s11 = scalar_select 0, %s10, %s8
  loop: start=0, step=1, limit=4
  $region2: #{a_call__.4} parent=0 // loop_pre_header
    _
  $region3: #{a_call__.4} parent=0 // loop_header
    %s13 = sphi 0, %s17
    %p14 = scmp.ge.s32.totalorder %s13, 4
    %s23 = sphi 0, %s25
    %s26 = sphi 0, %s23
    %s27 = sphi 0, %s26
    %s43 = sphi 0, %s27
    %s47 = sphi 0, %s47
    %s49 = sphi 0, %s47
    %s50 = sphi 0, %s49
    %s64 = sphi 0, %s50
    %s68 = sphi 0, %s68
    %s70 = sphi 0, %s68
    %s71 = sphi 0, %s70
    %s85 = sphi 0, %s71
    %s89 = sphi 0, %s89
    %s91 = sphi 0, %s89
    %s92 = sphi 0, %s91
    %s106 = sphi 0, %s92
    %s110 = sphi 0, %s110
    %s112 = sphi 0, %s110
    %s113 = sphi 0, %s112
    %s127 = sphi 0, %s113
    %s131 = sphi 0, %s131
    %s133 = sphi 0, %s131
    %s134 = sphi 0, %s133
    %s148 = sphi 0, %s134
    %s152 = sphi 0, %s152
    %s154 = sphi 0, %s152
    %s155 = sphi 0, %s154
    %s169 = sphi 0, %s155
    %s175 = sphi 0, %s177
    %s178 = sphi 0, %s175
    %s179 = sphi 0, %s178
    %s195 = sphi 0, %s179
  $region4: #{a_call__.4} parent=0 // loop_header_branch
    %16 = sbr.rel (%p14) target = $region8
  $region5: #{a_call__.4} parent=0 // loop_body
    %s18 = ssub.s32 %s13, 1
    %s19 = ssub.s32 %s13, 2
    %s20 = sadd.s32 %s13, 1
    %s21 = ssub.s32 %s13, %s20
    %p22 = scmp.eq.s32.totalorder %s21, 0
    %s24 = sadd.s32 %s23, 1
    %s25 = scalar_select %p22, %s23, %s24
    %p28 = pneg %p22
    %p29 = scmp.eq.s32.totalorder %s13, 1
    %p30 = por %p28, %p29
    %p31 = scmp.ne.s32.totalorder %s23, %s26
    %p32 = scmp.eq.s32.totalorder %s13, 0
    %p33 = por %p31, %p32
    %p34 = scmp.ne.s32.totalorder %s23, %s26
    %p35 = scmp.eq.s32.totalorder %s18, 1
    %p36 = por %p34, %p35
    %p37 = scmp.ne.s32.totalorder %s26, %s27
    %p38 = scmp.eq.s32.totalorder %s18, 0
    %p39 = por %p37, %p38
    %p40 = scmp.ne.s32.totalorder %s26, %s27
    %p41 = scmp.eq.s32.totalorder %s19, 1
    %p42 = por %p40, %p41
    %p44 = scmp.ne.s32.totalorder %s27, %s43
    %p45 = scmp.eq.s32.totalorder %s19, 0
    %p46 = por %p44, %p45
    %s48 = sadd.s32 %s47, 1
    %p51 = scmp.eq.s32.totalorder %s13, 1
    %p52 = scmp.ne.s32.totalorder %s47, %s49
    %p53 = scmp.eq.s32.totalorder %s13, 0
    %p54 = por %p52, %p53
    %p55 = scmp.ne.s32.totalorder %s47, %s49
    %p56 = scmp.eq.s32.totalorder %s18, 1
    %p57 = por %p55, %p56
    %p58 = scmp.ne.s32.totalorder %s49, %s50
    %p59 = scmp.eq.s32.totalorder %s18, 0
    %p60 = por %p58, %p59
    %p61 = scmp.ne.s32.totalorder %s49, %s50
    %p62 = scmp.eq.s32.totalorder %s19, 1
    %p63 = por %p61, %p62
    %p65 = scmp.ne.s32.totalorder %s50, %s64
    %p66 = scmp.eq.s32.totalorder %s19, 0
    %p67 = por %p65, %p66
    %s69 = sadd.s32 %s68, 1
    %p72 = scmp.eq.s32.totalorder %s13, 1
    %p73 = scmp.ne.s32.totalorder %s68, %s70
    %p74 = scmp.eq.s32.totalorder %s13, 0
    %p75 = por %p73, %p74
    %p76 = scmp.ne.s32.totalorder %s68, %s70
    %p77 = scmp.eq.s32.totalorder %s18, 1
    %p78 = por %p76, %p77
    %p79 = scmp.ne.s32.totalorder %s70, %s71
    %p80 = scmp.eq.s32.totalorder %s18, 0
    %p81 = por %p79, %p80
    %p82 = scmp.ne.s32.totalorder %s70, %s71
    %p83 = scmp.eq.s32.totalorder %s19, 1
    %p84 = por %p82, %p83
    %p86 = scmp.ne.s32.totalorder %s71, %s85
    %p87 = scmp.eq.s32.totalorder %s19, 0
    %p88 = por %p86, %p87
    %s90 = sadd.s32 %s89, 1
    %p93 = scmp.eq.s32.totalorder %s13, 1
    %p94 = scmp.ne.s32.totalorder %s89, %s91
    %p95 = scmp.eq.s32.totalorder %s13, 0
    %p96 = por %p94, %p95
    %p97 = scmp.ne.s32.totalorder %s89, %s91
    %p98 = scmp.eq.s32.totalorder %s18, 1
    %p99 = por %p97, %p98
    %p100 = scmp.ne.s32.totalorder %s91, %s92
    %p101 = scmp.eq.s32.totalorder %s18, 0
    %p102 = por %p100, %p101
    %p103 = scmp.ne.s32.totalorder %s91, %s92
    %p104 = scmp.eq.s32.totalorder %s19, 1
    %p105 = por %p103, %p104
    %p107 = scmp.ne.s32.totalorder %s92, %s106
    %p108 = scmp.eq.s32.totalorder %s19, 0
    %p109 = por %p107, %p108
    %s111 = sadd.s32 %s110, 1
    %p114 = scmp.eq.s32.totalorder %s13, 1
    %p115 = scmp.ne.s32.totalorder %s110, %s112
    %p116 = scmp.eq.s32.totalorder %s13, 0
    %p117 = por %p115, %p116
    %p118 = scmp.ne.s32.totalorder %s110, %s112
    %p119 = scmp.eq.s32.totalorder %s18, 1
    %p120 = por %p118, %p119
    %p121 = scmp.ne.s32.totalorder %s112, %s113
    %p122 = scmp.eq.s32.totalorder %s18, 0
    %p123 = por %p121, %p122
    %p124 = scmp.ne.s32.totalorder %s112, %s113
    %p125 = scmp.eq.s32.totalorder %s19, 1
    %p126 = por %p124, %p125
    %p128 = scmp.ne.s32.totalorder %s113, %s127
    %p129 = scmp.eq.s32.totalorder %s19, 0
    %p130 = por %p128, %p129
    %s132 = sadd.s32 %s131, 1
    %p135 = scmp.eq.s32.totalorder %s13, 1
    %p136 = scmp.ne.s32.totalorder %s131, %s133
    %p137 = scmp.eq.s32.totalorder %s13, 0
    %p138 = por %p136, %p137
    %p139 = scmp.ne.s32.totalorder %s131, %s133
    %p140 = scmp.eq.s32.totalorder %s18, 1
    %p141 = por %p139, %p140
    %p142 = scmp.ne.s32.totalorder %s133, %s134
    %p143 = scmp.eq.s32.totalorder %s18, 0
    %p144 = por %p142, %p143
    %p145 = scmp.ne.s32.totalorder %s133, %s134
    %p146 = scmp.eq.s32.totalorder %s19, 1
    %p147 = por %p145, %p146
    %p149 = scmp.ne.s32.totalorder %s134, %s148
    %p150 = scmp.eq.s32.totalorder %s19, 0
    %p151 = por %p149, %p150
    %s153 = sadd.s32 %s152, 1
    %p156 = scmp.eq.s32.totalorder %s13, 1
    %p157 = scmp.ne.s32.totalorder %s152, %s154
    %p158 = scmp.eq.s32.totalorder %s13, 0
    %p159 = por %p157, %p158
    %p160 = scmp.ne.s32.totalorder %s152, %s154
    %p161 = scmp.eq.s32.totalorder %s18, 1
    %p162 = por %p160, %p161
    %p163 = scmp.ne.s32.totalorder %s154, %s155
    %p164 = scmp.eq.s32.totalorder %s18, 0
    %p165 = por %p163, %p164
    %p166 = scmp.ne.s32.totalorder %s154, %s155
    %p167 = scmp.eq.s32.totalorder %s19, 1
    %p168 = por %p166, %p167
    %p170 = scmp.ne.s32.totalorder %s155, %s169
    %p171 = scmp.eq.s32.totalorder %s19, 0
    %p172 = por %p170, %p171
    %s173 = ssub.s32 %s13, %s20
    %p174 = scmp.eq.s32.totalorder %s173, 0
    %s176 = sadd.s32 %s175, 1
    %s177 = scalar_select %p174, %s175, %s176
    %p180 = pneg %p174
    %p181 = scmp.eq.s32.totalorder %s13, 1
    %p182 = por %p180, %p181
    %p183 = scmp.ne.s32.totalorder %s175, %s178
    %p184 = scmp.eq.s32.totalorder %s13, 0
    %p185 = por %p183, %p184
    %p186 = scmp.ne.s32.totalorder %s175, %s178
    %p187 = scmp.eq.s32.totalorder %s18, 1
    %p188 = por %p186, %p187
    %p189 = scmp.ne.s32.totalorder %s178, %s179
    %p190 = scmp.eq.s32.totalorder %s18, 0
    %p191 = por %p189, %p190
    %p192 = scmp.ne.s32.totalorder %s178, %s179
    %p193 = scmp.eq.s32.totalorder %s19, 1
    %p194 = por %p192, %p193
    %p196 = scmp.ne.s32.totalorder %s179, %s195
    %p197 = scmp.eq.s32.totalorder %s19, 0
    %p198 = por %p196, %p197
    %p199 = scmp.le.s32.totalorder 1, %s13
    %p200 = scmp.lt.s32.totalorder %s13, 3
    %p201 = pnand %p199, %p200
    %p202 = pneg %p201
    // Predicated region
    $region9: #{a_call__.4} parent=5 // pred_check
      _
    $region10: #{a_call__.4} parent=5 // pred_check_branch
      %204 = sbr.rel (%p201) target = $region12
    $region11: #{a_call__.4} parent=5 // pred_region
      %s205 = ssub.s32 %s13, 1
      // Predicated region
      $region13: #{a_call__.4} parent=11 // pred_check
        %p206 = pneg %p60
      $region14: #{a_call__.4} parent=11 // pred_check_branch
        %208 = sbr.rel (%p206) target = $region16
      $region15: #{a_call__.4} parent=11 // pred_region
        _
      $region16: #{a_call__.4} parent=11 // pred_fallthru
        _
      // Predicated region
      $region17: #{a_call__.4} parent=11 // pred_check
        %p209 = pneg %p81
      $region18: #{a_call__.4} parent=11 // pred_check_branch
        %211 = sbr.rel (%p209) target = $region20
      $region19: #{a_call__.4} parent=11 // pred_region
        _
      $region20: #{a_call__.4} parent=11 // pred_fallthru
        _
      // Predicated region
      $region21: #{a_call__.4} parent=11 // pred_check
        %p212 = pneg %p102
      $region22: #{a_call__.4} parent=11 // pred_check_branch
        %214 = sbr.rel (%p212) target = $region24
      $region23: #{a_call__.4} parent=11 // pred_region
        _
      $region24: #{a_call__.4} parent=11 // pred_fallthru
        _
      // Predicated region
      $region25: #{a_call__.4} parent=11 // pred_check
        %p215 = pneg %p123
      $region26: #{a_call__.4} parent=11 // pred_check_branch
        %217 = sbr.rel (%p215) target = $region28
      $region27: #{a_call__.4} parent=11 // pred_region
        _
      $region28: #{a_call__.4} parent=11 // pred_fallthru
        _
      // Predicated region
      $region29: #{a_call__.4} parent=11 // pred_check
        %p218 = pneg %p144
      $region30: #{a_call__.4} parent=11 // pred_check_branch
        %220 = sbr.rel (%p218) target = $region32
      $region31: #{a_call__.4} parent=11 // pred_region
        _
      $region32: #{a_call__.4} parent=11 // pred_fallthru
        _
      // Predicated region
      $region33: #{a_call__.4} parent=11 // pred_check
        %p221 = pneg %p165
      $region34: #{a_call__.4} parent=11 // pred_check_branch
        %223 = sbr.rel (%p221) target = $region36
      $region35: #{a_call__.4} parent=11 // pred_region
        _
      $region36: #{a_call__.4} parent=11 // pred_fallthru
        _
    $region12: #{a_call__.4} parent=5 // pred_fallthru
      _
    %p224 = scmp.lt.s32.totalorder %s13, 2
    // Predicated region
    $region37: #{a_call__.4} parent=5 // pred_check
      %p225 = pneg %p224
    $region38: #{a_call__.4} parent=5 // pred_check_branch
      %227 = sbr.rel (%p225) target = $region40
    $region39: #{a_call__.4} parent=5 // pred_region
      // Predicated region
      $region41: #{a_call__.4} parent=39 // pred_check
        %p228 = pneg %p33
      $region42: #{a_call__.4} parent=39 // pred_check_branch
        %230 = sbr.rel (%p228) target = $region44
      $region43: #{a_call__.4} parent=39 // pred_region
        %p231 = scmp.lt.s32.totalorder %s13, 1
        %s232 = scalar_select %p231, %s13, 1
        %s233 = smul.addr %s232, 5
        %s234 = smul.addr %s233, 4
        %s235 = scalar_lea.vmem %s0, %s234
      $region44: #{a_call__.4} parent=39 // pred_fallthru
        _
    $region40: #{a_call__.4} parent=5 // pred_fallthru
      _
    %p236 = scmp.le.s32.totalorder 1, %s13
    %p237 = scmp.lt.s32.totalorder %s13, 3
    %p238 = pnand %p236, %p237
    %p239 = pneg %p238
    // Predicated region
    $region45: #{a_call__.4} parent=5 // pred_check
      _
    $region46: #{a_call__.4} parent=5 // pred_check_branch
      %241 = sbr.rel (%p238) target = $region48
    $region47: #{a_call__.4} parent=5 // pred_region
      %s242 = ssub.s32 %s13, 1
      %p243 = scmp.lt.s32.totalorder %s18, 1
      %s244 = scalar_select %p243, %s18, 1
      %s245 = smul.addr %s244, 5
      %s246 = smul.addr %s245, 4
      %s247 = scalar_lea.vmem %s0, %s246
      %p248 = pneg %p39
      %p249 = pneg %p36
      %p250 = pneg %p60
      %p251 = pneg %p57
      %p252 = pneg %p81
      %p253 = pneg %p78
      %p254 = pneg %p102
      %p255 = pneg %p99
      %p256 = pneg %p123
      %p257 = pneg %p120
      %p258 = pneg %p144
      %p259 = pneg %p141
      %p260 = pneg %p165
      %p261 = pneg %p162
      %p262 = pneg %p191
      %p263 = pneg %p188
      %p264 = scmp.lt.s32.totalorder %s18, 1
      %s265 = scalar_select %p264, %s18, 1
      %s266 = smul.addr %s265, 5
      %s267 = smul.addr %s266, 4
      %s268 = scalar_lea.vmem %s7, %s267
      %p269 = scmp.lt.s32.totalorder %s18, 1
      %s270 = scalar_select %p269, %s18, 1
      %s271 = smul.addr %s270, 5
      %s272 = smul.addr %s271, 4
      %s273 = scalar_lea.vmem %s0, %s272
      %p274 = scmp.lt.s32.totalorder %s18, 1
      %s275 = scalar_select %p274, %s18, 1
      %s276 = smul.addr %s275, 5
      %s277 = smul.addr %s276, 4
      %s278 = scalar_lea.vmem %s7, %s277
      %v280 = vld [vmem:[%s273] sm:$0xff]
      %v281 = vld [vmem:[%s273 + $0x8] sm:$0xff]
      %v282 = vld [vmem:[%s273 + $0x10] sm:$0xf]
      %v283 = vld [vmem:[%s1] sm:$0x1f]
      %v286 = vcombine.high %v280, %v280
      %v287 = vcombine.high %v281, %v281
      %vm290 = vcmask 1043456
      %v291 = vsel %vm290, %v280, 0.0
      %v292 = vsel %vm290, %v286, 0.0
      %v293 = vadd.f32 %v291, %v292
      %v294 = vsel %vm290, %v281, 0.0
      %v295 = vadd.f32 %v293, %v294
      %v296 = vsel %vm290, %v287, 0.0
      %v297 = vadd.f32 %v295, %v296
      %v298 = vsel %vm290, %v282, 0.0
      %v299 = vadd.f32 %v297, %v298
      %300 = vadd.xlane.f32.xlu0 %v299
      %v301 = vpop.xlane.xlu0 %300
      %v302 = vmul.f32 %v301, 0.00390625
      %v305 = vunpack.c.l.s4 839922192
      %v306 = vunpack.c.0.s8 %v305
      %v307 = vlaneseq
      %v308 = vshrl.u32 %v307, 7
      %v309 = vsub.s32 %v306, %v308
      %v310 = vrot.slane %v302, %v309
      %v312 = vsub.f32 %v280, %v310
      %v313 = vsub.f32 %v281, %v310
      %v314 = vsub.f32 %v282, %v310
      %v316 = vlaneseq
      %v317 = vshrl.u32 %v316, 7
      %v318 = vsub.s32 0, %v317
      %v319 = vrot.slane %v283, %v318
      %v320 = vlaneseq
      %v321 = vshrl.u32 %v320, 7
      %v322 = vsub.s32 1, %v321
      %v323 = vrot.slane %v283, %v322
      %v324 = vlaneseq
      %v325 = vshrl.u32 %v324, 7
      %v326 = vsub.s32 2, %v325
      %v327 = vrot.slane %v283, %v326
      %v328 = vlaneseq
      %v329 = vshrl.u32 %v328, 7
      %v330 = vsub.s32 3, %v329
      %v331 = vrot.slane %v283, %v330
      %v332 = vlaneseq
      %v333 = vshrl.u32 %v332, 7
      %v334 = vsub.s32 4, %v333
      %v335 = vrot.slane %v283, %v334
      %v337 = vcombine.low %v319, %v323
      %v338 = vcombine.low %v327, %v331
      %v341 = vmul.f32 %v312, %v337
      %v342 = vmul.f32 %v313, %v338
      %v343 = vmul.f32 %v314, %v335
      %v344 = vmul.f32 %v341, %v341
      %v345 = vmul.f32 %v342, %v342
      %v346 = vmul.f32 %v343, %v343
      %v349 = vcombine.high %v344, %v344
      %v350 = vcombine.high %v345, %v345
      %v353 = vsel %vm290, %v344, 0.0
      %v354 = vsel %vm290, %v349, 0.0
      %v355 = vadd.f32 %v353, %v354
      %v356 = vsel %vm290, %v345, 0.0
      %v357 = vadd.f32 %v355, %v356
      %v358 = vsel %vm290, %v350, 0.0
      %v359 = vadd.f32 %v357, %v358
      %v360 = vsel %vm290, %v346, 0.0
      %v361 = vadd.f32 %v359, %v360
      %362 = vadd.xlane.f32.xlu0 %v361
      %v363 = vpop.xlane.xlu0 %362
      %v364 = vmul.f32 %v363, 0.00390625
      %v365 = vadd.f32 %v364, 1e-05
      %v366 = vrsqrt.pop %v365
      %v369 = vunpack.c.l.s4 839922192
      %v370 = vunpack.c.0.s8 %v369
      %v371 = vlaneseq
      %v372 = vshrl.u32 %v371, 7
      %v373 = vsub.s32 %v370, %v372
      %v374 = vrot.slane %v366, %v373
      %v376 = vmul.f32 %v341, %v374
      %v377 = vmul.f32 %v342, %v374
      %v378 = vmul.f32 %v343, %v374
      %v379 = vld [vmem:[%s2] sm:$0xf]
      %381 = vset.pattern.permute.xlu0 0
      %382 = vperm.xlu0 %381, %v379
      %v383 = vpop.permute.xlu0 %382
      %v385 = vunpack.c.l.s4 839922192
      %v386 = vunpack.c.0.s8 %v385
      %v387 = vlaneseq
      %v388 = vshrl.u32 %v387, 7
      %v389 = vsub.s32 %v386, %v388
      %v390 = vrot.slane %v383, %v389
      %v392 = vmul.f32 %v376, %v390
      %v393 = vmul.f32 %v377, %v390
      %v394 = vmul.f32 %v378, %v390
      %v395 = vld [vmem:[%s3] sm:$0xf]
      %397 = vset.pattern.permute.xlu0 0
      %398 = vperm.xlu0 %397, %v395
      %v399 = vpop.permute.xlu0 %398
      %v401 = vunpack.c.l.s4 839922192
      %v402 = vunpack.c.0.s8 %v401
      %v403 = vlaneseq
      %v404 = vshrl.u32 %v403, 7
      %v405 = vsub.s32 %v402, %v404
      %v406 = vrot.slane %v399, %v405
      %v408 = vadd.f32 %v392, %v406
      %v409 = vadd.f32 %v393, %v406
      %v410 = vadd.f32 %v394, %v406
      %v411 = vmul.f32 %v408, 0.5
      %v412 = vmul.f32 %v409, 0.5
      %v413 = vmul.f32 %v410, 0.5
      %v414 = vmul.f32 %v408, 0.044715
      %v415 = vmul.f32 %v409, 0.044715
      %v416 = vmul.f32 %v410, 0.044715
      %v417 = vmul.f32 %v414, %v408
      %v418 = vmul.f32 %v415, %v409
      %v419 = vmul.f32 %v416, %v410
      %v420 = vmul.f32 %v417, %v408
      %v421 = vmul.f32 %v418, %v409
      %v422 = vmul.f32 %v419, %v410
      %v423 = vadd.f32 %v408, %v420
      %v424 = vadd.f32 %v409, %v421
      %v425 = vadd.f32 %v410, %v422
      %v426 = vmul.f32 %v423, 0.7978846
      %v427 = vmul.f32 %v424, 0.7978846
      %v428 = vmul.f32 %v425, 0.7978846
      %v429 = vtanh.pop %v426
      %v430 = vtanh.pop %v427
      %v431 = vtanh.pop %v428
      %v432 = vadd.f32 %v429, 1.0
      %v433 = vadd.f32 %v430, 1.0
      %v434 = vadd.f32 %v431, 1.0
      %v435 = vmul.f32 %v411, %v432
      %v436 = vmul.f32 %v412, %v433
      %v437 = vmul.f32 %v413, %v434
      %v438 = vmul.f32 %v435, %v337
      %v439 = vmul.f32 %v436, %v338
      %v440 = vmul.f32 %v437, %v335
      %v443 = vcombine.high %v438, %v438
      %v444 = vcombine.high %v439, %v439
      %v447 = vpack.c.bf16 %v438, %v438
      %v448 = vpack.c.bf16 %v443, %v443
      %v449 = vpack.c.bf16 %v439, %v439
      %v450 = vpack.c.bf16 %v444, %v444
      %v451 = vpack.c.bf16 %v440, %v440
      %v456 = vunpack.c.l.b16 %v447
      %v457 = vunpack.c.l.b16 %v448
      %v458 = vunpack.c.l.b16 %v449
      %v459 = vunpack.c.l.b16 %v450
      %v460 = vpack.c.b16 %v457, %v456
      %v461 = vpack.c.b16 %v459, %v458
      %462 = vrot.lane.b32.xlu0 %v460, 19
      %v463 = vpop.permute.xlu0 %462
      %464 = vrot.lane.b32.xlu0 %v461, 19
      %v465 = vpop.permute.xlu0 %464
      %v466 = vrot.slane %v463, 4
      %v467 = vrot.slane %v465, 4
      %vm468 = vcmask 1043456
      %v469 = vsel %vm468, %v466, %v467
      %vm470 = vcmask 154624
      %v471 = vsel %vm470, %v463, %v469
      %v472 = vsel %vm470, %v465, %v467
      %475 = vst [vmem:[#allocation2] sm:$0x33] %v471
      %476 = vst [vmem:[#allocation2 + $0x8] sm:$0x3] %v472
      %v477 = vrot.slane %v460, 6
      %v478 = vrot.slane %v461, 6
      %479 = vrot.lane.b32.xlu0 %v477, 18
      %v480 = vpop.permute.xlu0 %479
      %481 = vrot.lane.b32.xlu0 %v478, 18
      %v482 = vpop.permute.xlu0 %481
      %v483 = vrot.slane %v480, 4
      %v484 = vrot.slane %v482, 4
      %v485 = vsel %vm468, %v483, %v484
      %vm486 = vcmask 146432
      %v487 = vsel %vm486, %v480, %v485
      %v488 = vsel %vm486, %v482, %v484
      %491 = vst [vmem:[#allocation2] sm:$0xcc] %v487
      %492 = vst [vmem:[#allocation2 + $0x8] sm:$0xc] %v488
      %493 = vrot.lane.b32.xlu0 %v460, 17
      %v494 = vpop.permute.xlu0 %493
      %495 = vrot.lane.b32.xlu0 %v461, 17
      %v496 = vpop.permute.xlu0 %495
      %v497 = vrot.slane %v494, 4
      %v498 = vrot.slane %v496, 4
      %v499 = vsel %vm468, %v497, %v498
      %vm500 = vcmask 138240
      %v501 = vsel %vm500, %v494, %v499
      %v502 = vsel %vm500, %v496, %v498
      %505 = vst [vmem:[#allocation2 + $0xc] sm:$0x33] %v501
      %506 = vst [vmem:[#allocation2 + $0x14] sm:$0x3] %v502
      %507 = vrot.lane.b32.xlu0 %v477, 1
      %v508 = vpop.permute.xlu0 %507
      %509 = vrot.lane.b32.xlu0 %v478, 1
      %v510 = vpop.permute.xlu0 %509
      %v511 = vrot.slane %v508, 4
      %v512 = vrot.slane %v510, 4
      %v513 = vsel %vm468, %v511, %v512
      %vm514 = vcmask 7168
      %v515 = vsel %vm514, %v508, %v513
      %v516 = vsel %vm514, %v510, %v512
      %519 = vst [vmem:[#allocation2 + $0xc] sm:$0xcc] %v515
      %520 = vst [vmem:[#allocation2 + $0x14] sm:$0xc] %v516
      %v521 = vpack.c.b16 %v458, %v457
      %v522 = vpack.c.b16 %v459, %v459
      %525 = vst [vmem:[#allocation2 + $0x18] sm:$0x33] %v521
      %526 = vst [vmem:[#allocation2 + $0x20] sm:$0x3] %v522
      %v528 = vunpack.c.l.b16 %v451
      %v529 = vpack.c.b16 %v528, %v459
      %v530 = vrot.slane %v521, 6
      %v531 = vrot.slane %v529, 6
      %532 = vrot.lane.b32.xlu0 %v530, 127
      %v533 = vpop.permute.xlu0 %532
      %534 = vrot.lane.b32.xlu0 %v531, 127
      %v535 = vpop.permute.xlu0 %534
      %v536 = vrot.slane %v533, 4
      %v537 = vrot.slane %v535, 4
      %v538 = vsel %vm468, %v536, %v537
      %vm539 = vcmask 1039360
      %v540 = vsel %vm539, %v533, %v538
      %v541 = vsel %vm539, %v535, %v537
      %544 = vst [vmem:[#allocation2 + $0x18] sm:$0xcc] %v540
      %545 = vst [vmem:[#allocation2 + $0x20] sm:$0xc] %v541
      %546 = vrot.lane.b32.xlu0 %v521, 111
      %v547 = vpop.permute.xlu0 %546
      %548 = vrot.lane.b32.xlu0 %v529, 111
      %v549 = vpop.permute.xlu0 %548
      %v550 = vrot.slane %v547, 4
      %v551 = vrot.slane %v549, 4
      %v552 = vsel %vm468, %v550, %v551
      %vm553 = vcmask 908288
      %v554 = vsel %vm553, %v547, %v552
      %v555 = vsel %vm553, %v549, %v551
      %558 = vst [vmem:[#allocation2 + $0x24] sm:$0x33] %v554
      %559 = vst [vmem:[#allocation2 + $0x2c] sm:$0x3] %v555
      %560 = vrot.lane.b32.xlu0 %v530, 110
      %v561 = vpop.permute.xlu0 %560
      %562 = vrot.lane.b32.xlu0 %v531, 110
      %v563 = vpop.permute.xlu0 %562
      %v564 = vrot.slane %v561, 4
      %v565 = vrot.slane %v563, 4
      %v566 = vsel %vm468, %v564, %v565
      %vm567 = vcmask 900096
      %v568 = vsel %vm567, %v561, %v566
      %v569 = vsel %vm567, %v563, %v565
      %572 = vst [vmem:[#allocation2 + $0x24] sm:$0xcc] %v568
      %573 = vst [vmem:[#allocation2 + $0x2c] sm:$0xc] %v569
      %574 = vrot.lane.b32.xlu0 %v521, 109
      %v575 = vpop.permute.xlu0 %574
      %576 = vrot.lane.b32.xlu0 %v529, 109
      %v577 = vpop.permute.xlu0 %576
      %v578 = vrot.slane %v575, 4
      %v579 = vrot.slane %v577, 4
      %v580 = vsel %vm468, %v578, %v579
      %vm581 = vcmask 891904
      %v582 = vsel %vm581, %v575, %v580
      %v583 = vsel %vm581, %v577, %v579
      %586 = vst [vmem:[#allocation2 + $0x30] sm:$0x33] %v582
      %587 = vst [vmem:[#allocation2 + $0x38] sm:$0x3] %v583
      %v588 = vld [vmem:[%s5] sm:$0xf]
      %v589 = vld [vmem:[#allocation2] sm:$0xff]
      %v590 = vld [vmem:[#allocation2 + $0x8] sm:$0xf]
      %v591 = vld [vmem:[#allocation2 + $0xc] sm:$0xff]
      %v592 = vld [vmem:[#allocation2 + $0x14] sm:$0xf]
      %v593 = vld [vmem:[#allocation2 + $0x18] sm:$0xff]
      %v594 = vld [vmem:[#allocation2 + $0x20] sm:$0xf]
      %v595 = vld [vmem:[#allocation2 + $0x24] sm:$0xff]
      %v596 = vld [vmem:[#allocation2 + $0x2c] sm:$0xf]
      %v597 = vld [vmem:[#allocation2 + $0x30] sm:$0x33]
      %v598 = vld [vmem:[#allocation2 + $0x38] sm:$0x3]
      %v599 = vld [vmem:[%s6] sm:$0xff]
      %601 = vset.pattern.permute.xlu0 0
      %602 = vperm.xlu0 %601, %v599
      %v603 = vpop.permute.xlu0 %602
      %v615 = vunpack.c.l.b16 %v589
      %v616 = vunpack.c.h.b16 %v589
      %v617 = vunpack.c.l.b16 %v590
      %v618 = vunpack.c.l.b16 %v591
      %v619 = vunpack.c.h.b16 %v591
      %v620 = vunpack.c.l.b16 %v592
      %v621 = vunpack.c.l.b16 %v593
      %v622 = vunpack.c.h.b16 %v593
      %v623 = vunpack.c.l.b16 %v594
      %v624 = vunpack.c.l.b16 %v595
      %v625 = vunpack.c.h.b16 %v595
      %v626 = vunpack.c.l.b16 %v596
      %v627 = vunpack.c.l.b16 %v597
      %v628 = vunpack.c.h.b16 %v597
      %v629 = vunpack.c.l.b16 %v598
      %v630 = vpack.c.b16 %v618, %v615
      %v631 = vpack.c.b16 %v619, %v616
      %v632 = vpack.c.b16 %v620, %v617
      %v633 = vpack.c.b16 %v624, %v621
      %v634 = vpack.c.b16 %v625, %v622
      %v635 = vpack.c.b16 %v626, %v623
      %v636 = vpack.c.b16 %v627, %v627
      %v637 = vpack.c.b16 %v628, %v628
      %v638 = vpack.c.b16 %v629, %v629
      %vm645 = vcmask 293888
      %v647 = vsel %vm645, %v588, 0
      %vm649 = vcmask 1041408
      %v651 = vsel %vm649, %v636, 0
      %v654 = vsel %vm649, %v637, 0
      %v657 = vsel %vm649, %v638, 0
      %659 = vmatprep.subr.bf16.mxu0 0
      %660 = vmatpush1.bf16.msra.mxu0 0
      %661 = vmatprep.subr.bf16.mxu0 0
      %662 = vmatpush1.bf16.msra.mxu0 0
      %663 = vmatprep.subr.bf16.mxu0 0
      %664 = vmatpush1.bf16.msra.mxu0 0
      %665 = vmatprep.subr.bf16.mxu0 0
      %666 = vmatpush1.bf16.msra.mxu0 0
      %667 = vmatprep.subr.bf16.mxu0 0
      %668 = vmatpush1.bf16.msra.mxu0 0
      %669 = vmatprep.subr.bf16.mxu0 %v654
      %670 = vmatpush1.bf16.msra.mxu0 %v651
      %671 = vmatprep.subr.bf16.mxu0 %v634
      %672 = vmatpush1.bf16.msra.mxu0 %v633
      %673 = vmatprep.subr.bf16.mxu0 %v631
      %674 = vmatpush1.bf16.msra.mxu0 %v630
      %675 = vmatprep.subr.bf16.mxu0 0
      %676 = vmatpush2.bf16.msra.mxu0 0
      %677 = vmatprep.subr.bf16.mxu0 0
      %678 = vmatpush2.bf16.msra.mxu0 0
      %679 = vmatprep.subr.bf16.mxu0 0
      %680 = vmatpush2.bf16.msra.mxu0 0
      %681 = vmatprep.subr.bf16.mxu0 0
      %682 = vmatpush2.bf16.msra.mxu0 0
      %683 = vmatprep.subr.bf16.mxu0 0
      %684 = vmatpush2.bf16.msra.mxu0 0
      %685 = vmatprep.subr.bf16.mxu0 0
      %686 = vmatpush2.bf16.msra.mxu0 0
      %687 = vmatprep.subr.bf16.mxu0 0
      %688 = vmatpush2.bf16.msra.mxu0 0
      %689 = vmatprep.subr.bf16.mxu0 0
      %690 = vmatpush2.bf16.msra.mxu0 0
      %691 = vmatprep.mubr.bf16.mxu0 0
      %692 = vmatmul.mubr.bf16.gmra.mxu0 %v647
      %v693 = vpop.f32.mrf.mxu0
      %v694 = vadd.f32 %v603, %v693
      %v695 = vpop.f32.mrf.mxu0
      %v696 = vadd.f32 %v603, %v695
      %v697 = vpop.f32.mrf.mxu0
      %v698 = vpop.f32.mrf.mxu0
      %699 = vdwg.mxu0
      %700 = vmatprep.subr.bf16.mxu0 0
      %701 = vmatpush1.bf16.msra.mxu0 0
      %702 = vmatprep.subr.bf16.mxu0 0
      %703 = vmatpush1.bf16.msra.mxu0 0
      %704 = vmatprep.subr.bf16.mxu0 0
      %705 = vmatpush1.bf16.msra.mxu0 0
      %706 = vmatprep.subr.bf16.mxu0 0
      %707 = vmatpush1.bf16.msra.mxu0 0
      %708 = vmatprep.subr.bf16.mxu0 0
      %709 = vmatpush1.bf16.msra.mxu0 0
      %710 = vmatprep.subr.bf16.mxu0 0
      %711 = vmatpush1.bf16.msra.mxu0 %v657
      %712 = vmatprep.subr.bf16.mxu0 0
      %713 = vmatpush1.bf16.msra.mxu0 %v635
      %714 = vmatprep.subr.bf16.mxu0 0
      %715 = vmatpush1.bf16.msra.mxu0 %v632
      %716 = vmatprep.subr.bf16.mxu0 0
      %717 = vmatpush2.bf16.msra.mxu0 0
      %718 = vmatprep.subr.bf16.mxu0 0
      %719 = vmatpush2.bf16.msra.mxu0 0
      %720 = vmatprep.subr.bf16.mxu0 0
      %721 = vmatpush2.bf16.msra.mxu0 0
      %722 = vmatprep.subr.bf16.mxu0 0
      %723 = vmatpush2.bf16.msra.mxu0 0
      %724 = vmatprep.subr.bf16.mxu0 0
      %725 = vmatpush2.bf16.msra.mxu0 0
      %726 = vmatprep.subr.bf16.mxu0 0
      %727 = vmatpush2.bf16.msra.mxu0 0
      %728 = vmatprep.subr.bf16.mxu0 0
      %729 = vmatpush2.bf16.msra.mxu0 0
      %730 = vmatprep.subr.bf16.mxu0 0
      %731 = vmatpush2.bf16.msra.mxu0 0
      %732 = vmatprep.mubr.bf16.mxu0 0
      %733 = vmatmul.mubr.bf16.gmra.mxu0 %v647
      %v734 = vpop.f32.mrf.mxu0
      %v735 = vadd.f32 %v603, %v734
      %v736 = vpop.f32.mrf.mxu0
      %v737 = vpop.f32.mrf.mxu0
      %v738 = vpop.f32.mrf.mxu0
      %739 = vdwg.mxu0
      %v740 = vld [vmem:[%s4] sm:$0x7]
      %v742 = vlaneseq
      %v743 = vshrl.u32 %v742, 7
      %v744 = vsub.s32 0, %v743
      %v745 = vrot.slane %v740, %v744
      %v746 = vlaneseq
      %v747 = vshrl.u32 %v746, 7
      %v748 = vsub.s32 1, %v747
      %v749 = vrot.slane %v740, %v748
      %v750 = vlaneseq
      %v751 = vshrl.u32 %v750, 7
      %v752 = vsub.s32 2, %v751
      %v753 = vrot.slane %v740, %v752
      %v757 = vmul.f32 %v694, %v745
      %v758 = vmul.f32 %v696, %v749
      %v759 = vmul.f32 %v735, %v753
      %v760 = vpack.c.bf16 %v757, %v757
      %v761 = vpack.c.bf16 %v758, %v758
      %v762 = vpack.c.bf16 %v759, %v759
      %v767 = vunpack.c.l.b16 0
      %v768 = vunpack.c.l.b16 %v760
      %v769 = vunpack.c.l.b16 %v761
      %v770 = vunpack.c.l.b16 %v762
      %v771 = vpack.c.b16 %v768, %v767
      %v772 = vpack.c.b16 %v770, %v769
      %v773 = vpack.c.b16 %v767, %v767
      %777 = vst [vmem:[%s278] sm:$0xff] %v771
      %778 = vst [vmem:[%s278 + $0x8] sm:$0xff] %v772
      %779 = vst [vmem:[%s278 + $0x10] sm:$0xf] %v773
      %p780 = scmp.lt.s32.totalorder %s18, 1
      %s781 = scalar_select %p780, %s18, 1
      %s782 = smul.addr %s781, 5
      %s783 = smul.addr %s782, 4
      %s784 = scalar_lea.vmem %s7, %s783
      // Predicated region
      $region49: #{a_call__.4} parent=47 // pred_check
        %p785 = pneg %p188
      $region50: #{a_call__.4} parent=47 // pred_check_branch
        %787 = sbr.rel (%p785) target = $region52
      $region51: #{a_call__.4} parent=47 // pred_region
        _
      $region52: #{a_call__.4} parent=47 // pred_fallthru
        _
    $region48: #{a_call__.4} parent=5 // pred_fallthru
      _
    %p788 = scmp.le.s32.totalorder 2, %s13
    // Predicated region
    $region53: #{a_call__.4} parent=5 // pred_check
      %p789 = pneg %p788
    $region54: #{a_call__.4} parent=5 // pred_check_branch
      %791 = sbr.rel (%p789) target = $region56
    $region55: #{a_call__.4} parent=5 // pred_region
      %s792 = ssub.s32 %s13, 2
      // Predicated region
      $region57: #{a_call__.4} parent=55 // pred_check
        %p793 = pneg %p194
      $region58: #{a_call__.4} parent=55 // pred_check_branch
        %795 = sbr.rel (%p793) target = $region60
      $region59: #{a_call__.4} parent=55 // pred_region
        %p796 = scmp.lt.s32.totalorder %s19, 1
        %s797 = scalar_select %p796, %s19, 1
        %s798 = smul.addr %s797, 5
        %s799 = smul.addr %s798, 4
        %s800 = scalar_lea.vmem %s7, %s799
      $region60: #{a_call__.4} parent=55 // pred_fallthru
        _
    $region56: #{a_call__.4} parent=5 // pred_fallthru
      _
  $region6: #{a_call__.4} parent=0 // loop_footer
    %s17 = sadd.s32 1, %s13
  $region7: #{a_call__.4} parent=0 // loop_footer_branch
    %12 = sbr.rel target = $region3
  $region8: #{a_call__.4} parent=0 // loop_exit
    _

// kernel: a_call__.6
$region0: #{a_call__.6}
  #allocation0 [shape = 'u32[]', space=smem, size = 0x4, offset = 0x4, fixed_abs, tag = 'smem constant byte address 0x4 - core index']
  #allocation1 [shape = 'u32[144,128]{1,0:T(1,128)}', space=vmem, size = 0x12000, scoped, tag = 'internal scratch']
  #allocation2 [shape = 'bf16[36,384]{1,0:T(8,128)(2,1)}', space=vmem, size = 0x7800, scoped, tag = 'scratch operand']
  %s0 = inlined_call_operand.vmem [shape: f32[2,4,640], index: 0, kind: input, shape index: {}]
  %s1 = inlined_call_operand.vmem [shape: f32[1,384], index: 1, kind: input, shape index: {}]
  %s2 = inlined_call_operand.vmem [shape: bf16[8,36], index: 2, kind: input, shape index: {}]
  %s3 = inlined_call_operand.vmem [shape: f32[8,1], index: 3, kind: input, shape index: {}]
  %s4 = inlined_call_operand.vmem [shape: bf16[2,8,640], index: 4, kind: output, shape index: {}]
  %s5 = sld [smem:[#allocation0]]
  $region49: #{a_call__.6} parent=0
    _
  %s7 = ssub.s32 1, %s5
  %s8 = scalar_select 0, %s7, %s5
  loop: start=0, step=1, limit=4
  $region2: #{a_call__.6} parent=0 // loop_pre_header
    _
  $region3: #{a_call__.6} parent=0 // loop_header
    %s10 = sphi 0, %s14
    %p11 = scmp.ge.s32.totalorder %s10, 4
    %s20 = sphi 0, %s22
    %s23 = sphi 0, %s20
    %s24 = sphi 0, %s23
    %s40 = sphi 0, %s24
    %s44 = sphi 0, %s44
    %s46 = sphi 0, %s44
    %s47 = sphi 0, %s46
    %s61 = sphi 0, %s47
    %s65 = sphi 0, %s65
    %s67 = sphi 0, %s65
    %s68 = sphi 0, %s67
    %s82 = sphi 0, %s68
    %s86 = sphi 0, %s86
    %s88 = sphi 0, %s86
    %s89 = sphi 0, %s88
    %s103 = sphi 0, %s89
    %s109 = sphi 0, %s111
    %s112 = sphi 0, %s109
    %s113 = sphi 0, %s112
    %s129 = sphi 0, %s113
  $region4: #{a_call__.6} parent=0 // loop_header_branch
    %13 = sbr.rel (%p11) target = $region8
  $region5: #{a_call__.6} parent=0 // loop_body
    %s15 = ssub.s32 %s10, 1
    %s16 = ssub.s32 %s10, 2
    %s17 = sadd.s32 %s10, 1
    %s18 = ssub.s32 %s10, %s17
    %p19 = scmp.eq.s32.totalorder %s18, 0
    %s21 = sadd.s32 %s20, 1
    %s22 = scalar_select %p19, %s20, %s21
    %p25 = pneg %p19
    %p26 = scmp.eq.s32.totalorder %s10, 1
    %p27 = por %p25, %p26
    %p28 = scmp.ne.s32.totalorder %s20, %s23
    %p29 = scmp.eq.s32.totalorder %s10, 0
    %p30 = por %p28, %p29
    %p31 = scmp.ne.s32.totalorder %s20, %s23
    %p32 = scmp.eq.s32.totalorder %s15, 1
    %p33 = por %p31, %p32
    %p34 = scmp.ne.s32.totalorder %s23, %s24
    %p35 = scmp.eq.s32.totalorder %s15, 0
    %p36 = por %p34, %p35
    %p37 = scmp.ne.s32.totalorder %s23, %s24
    %p38 = scmp.eq.s32.totalorder %s16, 1
    %p39 = por %p37, %p38
    %p41 = scmp.ne.s32.totalorder %s24, %s40
    %p42 = scmp.eq.s32.totalorder %s16, 0
    %p43 = por %p41, %p42
    %s45 = sadd.s32 %s44, 1
    %p48 = scmp.eq.s32.totalorder %s10, 1
    %p49 = scmp.ne.s32.totalorder %s44, %s46
    %p50 = scmp.eq.s32.totalorder %s10, 0
    %p51 = por %p49, %p50
    %p52 = scmp.ne.s32.totalorder %s44, %s46
    %p53 = scmp.eq.s32.totalorder %s15, 1
    %p54 = por %p52, %p53
    %p55 = scmp.ne.s32.totalorder %s46, %s47
    %p56 = scmp.eq.s32.totalorder %s15, 0
    %p57 = por %p55, %p56
    %p58 = scmp.ne.s32.totalorder %s46, %s47
    %p59 = scmp.eq.s32.totalorder %s16, 1
    %p60 = por %p58, %p59
    %p62 = scmp.ne.s32.totalorder %s47, %s61
    %p63 = scmp.eq.s32.totalorder %s16, 0
    %p64 = por %p62, %p63
    %s66 = sadd.s32 %s65, 1
    %p69 = scmp.eq.s32.totalorder %s10, 1
    %p70 = scmp.ne.s32.totalorder %s65, %s67
    %p71 = scmp.eq.s32.totalorder %s10, 0
    %p72 = por %p70, %p71
    %p73 = scmp.ne.s32.totalorder %s65, %s67
    %p74 = scmp.eq.s32.totalorder %s15, 1
    %p75 = por %p73, %p74
    %p76 = scmp.ne.s32.totalorder %s67, %s68
    %p77 = scmp.eq.s32.totalorder %s15, 0
    %p78 = por %p76, %p77
    %p79 = scmp.ne.s32.totalorder %s67, %s68
    %p80 = scmp.eq.s32.totalorder %s16, 1
    %p81 = por %p79, %p80
    %p83 = scmp.ne.s32.totalorder %s68, %s82
    %p84 = scmp.eq.s32.totalorder %s16, 0
    %p85 = por %p83, %p84
    %s87 = sadd.s32 %s86, 1
    %p90 = scmp.eq.s32.totalorder %s10, 1
    %p91 = scmp.ne.s32.totalorder %s86, %s88
    %p92 = scmp.eq.s32.totalorder %s10, 0
    %p93 = por %p91, %p92
    %p94 = scmp.ne.s32.totalorder %s86, %s88
    %p95 = scmp.eq.s32.totalorder %s15, 1
    %p96 = por %p94, %p95
    %p97 = scmp.ne.s32.totalorder %s88, %s89
    %p98 = scmp.eq.s32.totalorder %s15, 0
    %p99 = por %p97, %p98
    %p100 = scmp.ne.s32.totalorder %s88, %s89
    %p101 = scmp.eq.s32.totalorder %s16, 1
    %p102 = por %p100, %p101
    %p104 = scmp.ne.s32.totalorder %s89, %s103
    %p105 = scmp.eq.s32.totalorder %s16, 0
    %p106 = por %p104, %p105
    %s107 = ssub.s32 %s10, %s17
    %p108 = scmp.eq.s32.totalorder %s107, 0
    %s110 = sadd.s32 %s109, 1
    %s111 = scalar_select %p108, %s109, %s110
    %p114 = pneg %p108
    %p115 = scmp.eq.s32.totalorder %s10, 1
    %p116 = por %p114, %p115
    %p117 = scmp.ne.s32.totalorder %s109, %s112
    %p118 = scmp.eq.s32.totalorder %s10, 0
    %p119 = por %p117, %p118
    %p120 = scmp.ne.s32.totalorder %s109, %s112
    %p121 = scmp.eq.s32.totalorder %s15, 1
    %p122 = por %p120, %p121
    %p123 = scmp.ne.s32.totalorder %s112, %s113
    %p124 = scmp.eq.s32.totalorder %s15, 0
    %p125 = por %p123, %p124
    %p126 = scmp.ne.s32.totalorder %s112, %s113
    %p127 = scmp.eq.s32.totalorder %s16, 1
    %p128 = por %p126, %p127
    %p130 = scmp.ne.s32.totalorder %s113, %s129
    %p131 = scmp.eq.s32.totalorder %s16, 0
    %p132 = por %p130, %p131
    %p133 = scmp.le.s32.totalorder 1, %s10
    %p134 = scmp.lt.s32.totalorder %s10, 3
    %p135 = pnand %p133, %p134
    %p136 = pneg %p135
    // Predicated region
    $region9: #{a_call__.6} parent=5 // pred_check
      _
    $region10: #{a_call__.6} parent=5 // pred_check_branch
      %138 = sbr.rel (%p135) target = $region12
    $region11: #{a_call__.6} parent=5 // pred_region
      %s139 = ssub.s32 %s10, 1
      // Predicated region
      $region13: #{a_call__.6} parent=11 // pred_check
        %p140 = pneg %p57
      $region14: #{a_call__.6} parent=11 // pred_check_branch
        %142 = sbr.rel (%p140) target = $region16
      $region15: #{a_call__.6} parent=11 // pred_region
        _
      $region16: #{a_call__.6} parent=11 // pred_fallthru
        _
      // Predicated region
      $region17: #{a_call__.6} parent=11 // pred_check
        %p143 = pneg %p78
      $region18: #{a_call__.6} parent=11 // pred_check_branch
        %145 = sbr.rel (%p143) target = $region20
      $region19: #{a_call__.6} parent=11 // pred_region
        _
      $region20: #{a_call__.6} parent=11 // pred_fallthru
        _
      // Predicated region
      $region21: #{a_call__.6} parent=11 // pred_check
        %p146 = pneg %p99
      $region22: #{a_call__.6} parent=11 // pred_check_branch
        %148 = sbr.rel (%p146) target = $region24
      $region23: #{a_call__.6} parent=11 // pred_region
        _
      $region24: #{a_call__.6} parent=11 // pred_fallthru
        _
    $region12: #{a_call__.6} parent=5 // pred_fallthru
      _
    %p149 = scmp.lt.s32.totalorder %s10, 2
    // Predicated region
    $region25: #{a_call__.6} parent=5 // pred_check
      %p150 = pneg %p149
    $region26: #{a_call__.6} parent=5 // pred_check_branch
      %152 = sbr.rel (%p150) target = $region28
    $region27: #{a_call__.6} parent=5 // pred_region
      // Predicated region
      $region29: #{a_call__.6} parent=27 // pred_check
        %p153 = pneg %p30
      $region30: #{a_call__.6} parent=27 // pred_check_branch
        %155 = sbr.rel (%p153) target = $region32
      $region31: #{a_call__.6} parent=27 // pred_region
        %p156 = scmp.lt.s32.totalorder %s10, 1
        %s157 = scalar_select %p156, %s10, 1
        %s158 = smul.addr %s157, 5
        %s159 = smul.addr %s158, 4
        %s160 = scalar_lea.vmem %s0, %s159
      $region32: #{a_call__.6} parent=27 // pred_fallthru
        _
    $region28: #{a_call__.6} parent=5 // pred_fallthru
      _
    %p161 = scmp.le.s32.totalorder 1, %s10
    %p162 = scmp.lt.s32.totalorder %s10, 3
    %p163 = pnand %p161, %p162
    %p164 = pneg %p163
    // Predicated region
    $region33: #{a_call__.6} parent=5 // pred_check
      _
    $region34: #{a_call__.6} parent=5 // pred_check_branch
      %166 = sbr.rel (%p163) target = $region36
    $region35: #{a_call__.6} parent=5 // pred_region
      %s167 = ssub.s32 %s10, 1
      %p168 = scmp.lt.s32.totalorder %s15, 1
      %s169 = scalar_select %p168, %s15, 1
      %s170 = smul.addr %s169, 5
      %s171 = smul.addr %s170, 4
      %s172 = scalar_lea.vmem %s0, %s171
      %p173 = pneg %p36
      %p174 = pneg %p33
      %p175 = pneg %p57
      %p176 = pneg %p54
      %p177 = pneg %p78
      %p178 = pneg %p75
      %p179 = pneg %p99
      %p180 = pneg %p96
      %p181 = pneg %p125
      %p182 = pneg %p122
      %p183 = scmp.lt.s32.totalorder %s15, 1
      %s184 = scalar_select %p183, %s15, 1
      %s185 = smul.addr %s184, 5
      %s186 = smul.addr %s185, 4
      %s187 = scalar_lea.vmem %s4, %s186
      %p188 = scmp.lt.s32.totalorder %s15, 1
      %s189 = scalar_select %p188, %s15, 1
      %s190 = smul.addr %s189, 5
      %s191 = smul.addr %s190, 4
      %s192 = scalar_lea.vmem %s0, %s191
      %p193 = scmp.lt.s32.totalorder %s15, 1
      %s194 = scalar_select %p193, %s15, 1
      %s195 = smul.addr %s194, 5
      %s196 = smul.addr %s195, 4
      %s197 = scalar_lea.vmem %s4, %s196
      %v199 = vld [vmem:[%s192] sm:$0xff]
      %v200 = vld [vmem:[%s192 + $0x8] sm:$0xff]
      %v201 = vld [vmem:[%s192 + $0x10] sm:$0xf]
      %v204 = vcombine.high %v199, %v199
      %v205 = vcombine.high %v200, %v200
      %v208 = vpack.c.bf16 %v199, %v199
      %v209 = vpack.c.bf16 %v204, %v204
      %v210 = vpack.c.bf16 %v200, %v200
      %v211 = vpack.c.bf16 %v205, %v205
      %v212 = vpack.c.bf16 %v201, %v201
      %v217 = vunpack.c.l.b16 %v208
      %v218 = vunpack.c.l.b16 %v209
      %v219 = vunpack.c.l.b16 %v210
      %v220 = vunpack.c.l.b16 %v211
      %v221 = vpack.c.b16 %v218, %v217
      %v222 = vpack.c.b16 %v220, %v219
      %223 = vrot.lane.b32.xlu0 %v221, 19
      %v224 = vpop.permute.xlu0 %223
      %225 = vrot.lane.b32.xlu0 %v222, 19
      %v226 = vpop.permute.xlu0 %225
      %v227 = vrot.slane %v224, 4
      %v228 = vrot.slane %v226, 4
      %vm229 = vcmask 1043456
      %v230 = vsel %vm229, %v227, %v228
      %vm231 = vcmask 154624
      %v232 = vsel %vm231, %v224, %v230
      %v233 = vsel %vm231, %v226, %v228
      %236 = vst [vmem:[#allocation2] sm:$0x33] %v232
      %237 = vst [vmem:[#allocation2 + $0x8] sm:$0x3] %v233
      %v238 = vrot.slane %v221, 6
      %v239 = vrot.slane %v222, 6
      %240 = vrot.lane.b32.xlu0 %v238, 18
      %v241 = vpop.permute.xlu0 %240
      %242 = vrot.lane.b32.xlu0 %v239, 18
      %v243 = vpop.permute.xlu0 %242
      %v244 = vrot.slane %v241, 4
      %v245 = vrot.slane %v243, 4
      %v246 = vsel %vm229, %v244, %v245
      %vm247 = vcmask 146432
      %v248 = vsel %vm247, %v241, %v246
      %v249 = vsel %vm247, %v243, %v245
      %252 = vst [vmem:[#allocation2] sm:$0xcc] %v248
      %253 = vst [vmem:[#allocation2 + $0x8] sm:$0xc] %v249
      %254 = vrot.lane.b32.xlu0 %v221, 17
      %v255 = vpop.permute.xlu0 %254
      %256 = vrot.lane.b32.xlu0 %v222, 17
      %v257 = vpop.permute.xlu0 %256
      %v258 = vrot.slane %v255, 4
      %v259 = vrot.slane %v257, 4
      %v260 = vsel %vm229, %v258, %v259
      %vm261 = vcmask 138240
      %v262 = vsel %vm261, %v255, %v260
      %v263 = vsel %vm261, %v257, %v259
      %266 = vst [vmem:[#allocation2 + $0xc] sm:$0x33] %v262
      %267 = vst [vmem:[#allocation2 + $0x14] sm:$0x3] %v263
      %268 = vrot.lane.b32.xlu0 %v238, 1
      %v269 = vpop.permute.xlu0 %268
      %270 = vrot.lane.b32.xlu0 %v239, 1
      %v271 = vpop.permute.xlu0 %270
      %v272 = vrot.slane %v269, 4
      %v273 = vrot.slane %v271, 4
      %v274 = vsel %vm229, %v272, %v273
      %vm275 = vcmask 7168
      %v276 = vsel %vm275, %v269, %v274
      %v277 = vsel %vm275, %v271, %v273
      %280 = vst [vmem:[#allocation2 + $0xc] sm:$0xcc] %v276
      %281 = vst [vmem:[#allocation2 + $0x14] sm:$0xc] %v277
      %v282 = vpack.c.b16 %v219, %v218
      %v283 = vpack.c.b16 %v220, %v220
      %286 = vst [vmem:[#allocation2 + $0x18] sm:$0x33] %v282
      %287 = vst [vmem:[#allocation2 + $0x20] sm:$0x3] %v283
      %v289 = vunpack.c.l.b16 %v212
      %v290 = vpack.c.b16 %v289, %v220
      %v291 = vrot.slane %v282, 6
      %v292 = vrot.slane %v290, 6
      %293 = vrot.lane.b32.xlu0 %v291, 127
      %v294 = vpop.permute.xlu0 %293
      %295 = vrot.lane.b32.xlu0 %v292, 127
      %v296 = vpop.permute.xlu0 %295
      %v297 = vrot.slane %v294, 4
      %v298 = vrot.slane %v296, 4
      %v299 = vsel %vm229, %v297, %v298
      %vm300 = vcmask 1039360
      %v301 = vsel %vm300, %v294, %v299
      %v302 = vsel %vm300, %v296, %v298
      %305 = vst [vmem:[#allocation2 + $0x18] sm:$0xcc] %v301
      %306 = vst [vmem:[#allocation2 + $0x20] sm:$0xc] %v302
      %307 = vrot.lane.b32.xlu0 %v282, 111
      %v308 = vpop.permute.xlu0 %307
      %309 = vrot.lane.b32.xlu0 %v290, 111
      %v310 = vpop.permute.xlu0 %309
      %v311 = vrot.slane %v308, 4
      %v312 = vrot.slane %v310, 4
      %v313 = vsel %vm229, %v311, %v312
      %vm314 = vcmask 908288
      %v315 = vsel %vm314, %v308, %v313
      %v316 = vsel %vm314, %v310, %v312
      %319 = vst [vmem:[#allocation2 + $0x24] sm:$0x33] %v315
      %320 = vst [vmem:[#allocation2 + $0x2c] sm:$0x3] %v316
      %321 = vrot.lane.b32.xlu0 %v291, 110
      %v322 = vpop.permute.xlu0 %321
      %323 = vrot.lane.b32.xlu0 %v292, 110
      %v324 = vpop.permute.xlu0 %323
      %v325 = vrot.slane %v322, 4
      %v326 = vrot.slane %v324, 4
      %v327 = vsel %vm229, %v325, %v326
      %vm328 = vcmask 900096
      %v329 = vsel %vm328, %v322, %v327
      %v330 = vsel %vm328, %v324, %v326
      %333 = vst [vmem:[#allocation2 + $0x24] sm:$0xcc] %v329
      %334 = vst [vmem:[#allocation2 + $0x2c] sm:$0xc] %v330
      %335 = vrot.lane.b32.xlu0 %v282, 109
      %v336 = vpop.permute.xlu0 %335
      %337 = vrot.lane.b32.xlu0 %v290, 109
      %v338 = vpop.permute.xlu0 %337
      %v339 = vrot.slane %v336, 4
      %v340 = vrot.slane %v338, 4
      %v341 = vsel %vm229, %v339, %v340
      %vm342 = vcmask 891904
      %v343 = vsel %vm342, %v336, %v341
      %v344 = vsel %vm342, %v338, %v340
      %347 = vst [vmem:[#allocation2 + $0x30] sm:$0x33] %v343
      %348 = vst [vmem:[#allocation2 + $0x38] sm:$0x3] %v344
      %v349 = vld [vmem:[%s2] sm:$0xf]
      %v350 = vld [vmem:[#allocation2] sm:$0xff]
      %v351 = vld [vmem:[#allocation2 + $0x8] sm:$0xf]
      %v352 = vld [vmem:[#allocation2 + $0xc] sm:$0xff]
      %v353 = vld [vmem:[#allocation2 + $0x14] sm:$0xf]
      %v354 = vld [vmem:[#allocation2 + $0x18] sm:$0xff]
      %v355 = vld [vmem:[#allocation2 + $0x20] sm:$0xf]
      %v356 = vld [vmem:[#allocation2 + $0x24] sm:$0xff]
      %v357 = vld [vmem:[#allocation2 + $0x2c] sm:$0xf]
      %v358 = vld [vmem:[#allocation2 + $0x30] sm:$0x33]
      %v359 = vld [vmem:[#allocation2 + $0x38] sm:$0x3]
      %v360 = vld [vmem:[%s3] sm:$0xff]
      %362 = vset.pattern.permute.xlu0 0
      %363 = vperm.xlu0 %362, %v360
      %v364 = vpop.permute.xlu0 %363
      %v376 = vunpack.c.l.b16 %v350
      %v377 = vunpack.c.h.b16 %v350
      %v378 = vunpack.c.l.b16 %v351
      %v379 = vunpack.c.l.b16 %v352
      %v380 = vunpack.c.h.b16 %v352
      %v381 = vunpack.c.l.b16 %v353
      %v382 = vunpack.c.l.b16 %v354
      %v383 = vunpack.c.h.b16 %v354
      %v384 = vunpack.c.l.b16 %v355
      %v385 = vunpack.c.l.b16 %v356
      %v386 = vunpack.c.h.b16 %v356
      %v387 = vunpack.c.l.b16 %v357
      %v388 = vunpack.c.l.b16 %v358
      %v389 = vunpack.c.h.b16 %v358
      %v390 = vunpack.c.l.b16 %v359
      %v391 = vpack.c.b16 %v379, %v376
      %v392 = vpack.c.b16 %v380, %v377
      %v393 = vpack.c.b16 %v381, %v378
      %v394 = vpack.c.b16 %v385, %v382
      %v395 = vpack.c.b16 %v386, %v383
      %v396 = vpack.c.b16 %v387, %v384
      %v397 = vpack.c.b16 %v388, %v388
      %v398 = vpack.c.b16 %v389, %v389
      %v399 = vpack.c.b16 %v390, %v390
      %vm406 = vcmask 293888
      %v408 = vsel %vm406, %v349, 0
      %vm410 = vcmask 1041408
      %v412 = vsel %vm410, %v397, 0
      %v415 = vsel %vm410, %v398, 0
      %v418 = vsel %vm410, %v399, 0
      %420 = vmatprep.subr.bf16.mxu0 0
      %421 = vmatpush1.bf16.msra.mxu0 0
      %422 = vmatprep.subr.bf16.mxu0 0
      %423 = vmatpush1.bf16.msra.mxu0 0
      %424 = vmatprep.subr.bf16.mxu0 0
      %425 = vmatpush1.bf16.msra.mxu0 0
      %426 = vmatprep.subr.bf16.mxu0 0
      %427 = vmatpush1.bf16.msra.mxu0 0
      %428 = vmatprep.subr.bf16.mxu0 0
      %429 = vmatpush1.bf16.msra.mxu0 0
      %430 = vmatprep.subr.bf16.mxu0 %v415
      %431 = vmatpush1.bf16.msra.mxu0 %v412
      %432 = vmatprep.subr.bf16.mxu0 %v395
      %433 = vmatpush1.bf16.msra.mxu0 %v394
      %434 = vmatprep.subr.bf16.mxu0 %v392
      %435 = vmatpush1.bf16.msra.mxu0 %v391
      %436 = vmatprep.subr.bf16.mxu0 0
      %437 = vmatpush2.bf16.msra.mxu0 0
      %438 = vmatprep.subr.bf16.mxu0 0
      %439 = vmatpush2.bf16.msra.mxu0 0
      %440 = vmatprep.subr.bf16.mxu0 0
      %441 = vmatpush2.bf16.msra.mxu0 0
      %442 = vmatprep.subr.bf16.mxu0 0
      %443 = vmatpush2.bf16.msra.mxu0 0
      %444 = vmatprep.subr.bf16.mxu0 0
      %445 = vmatpush2.bf16.msra.mxu0 0
      %446 = vmatprep.subr.bf16.mxu0 0
      %447 = vmatpush2.bf16.msra.mxu0 0
      %448 = vmatprep.subr.bf16.mxu0 0
      %449 = vmatpush2.bf16.msra.mxu0 0
      %450 = vmatprep.subr.bf16.mxu0 0
      %451 = vmatpush2.bf16.msra.mxu0 0
      %452 = vmatprep.mubr.bf16.mxu0 0
      %453 = vmatmul.mubr.bf16.gmra.mxu0 %v408
      %v454 = vpop.f32.mrf.mxu0
      %v455 = vadd.f32 %v364, %v454
      %v456 = vpop.f32.mrf.mxu0
      %v457 = vadd.f32 %v364, %v456
      %v458 = vpop.f32.mrf.mxu0
      %v459 = vpop.f32.mrf.mxu0
      %460 = vdwg.mxu0
      %461 = vmatprep.subr.bf16.mxu0 0
      %462 = vmatpush1.bf16.msra.mxu0 0
      %463 = vmatprep.subr.bf16.mxu0 0
      %464 = vmatpush1.bf16.msra.mxu0 0
      %465 = vmatprep.subr.bf16.mxu0 0
      %466 = vmatpush1.bf16.msra.mxu0 0
      %467 = vmatprep.subr.bf16.mxu0 0
      %468 = vmatpush1.bf16.msra.mxu0 0
      %469 = vmatprep.subr.bf16.mxu0 0
      %470 = vmatpush1.bf16.msra.mxu0 0
      %471 = vmatprep.subr.bf16.mxu0 0
      %472 = vmatpush1.bf16.msra.mxu0 %v418
      %473 = vmatprep.subr.bf16.mxu0 0
      %474 = vmatpush1.bf16.msra.mxu0 %v396
      %475 = vmatprep.subr.bf16.mxu0 0
      %476 = vmatpush1.bf16.msra.mxu0 %v393
      %477 = vmatprep.subr.bf16.mxu0 0
      %478 = vmatpush2.bf16.msra.mxu0 0
      %479 = vmatprep.subr.bf16.mxu0 0
      %480 = vmatpush2.bf16.msra.mxu0 0
      %481 = vmatprep.subr.bf16.mxu0 0
      %482 = vmatpush2.bf16.msra.mxu0 0
      %483 = vmatprep.subr.bf16.mxu0 0
      %484 = vmatpush2.bf16.msra.mxu0 0
      %485 = vmatprep.subr.bf16.mxu0 0
      %486 = vmatpush2.bf16.msra.mxu0 0
      %487 = vmatprep.subr.bf16.mxu0 0
      %488 = vmatpush2.bf16.msra.mxu0 0
      %489 = vmatprep.subr.bf16.mxu0 0
      %490 = vmatpush2.bf16.msra.mxu0 0
      %491 = vmatprep.subr.bf16.mxu0 0
      %492 = vmatpush2.bf16.msra.mxu0 0
      %493 = vmatprep.mubr.bf16.mxu0 0
      %494 = vmatmul.mubr.bf16.gmra.mxu0 %v408
      %v495 = vpop.f32.mrf.mxu0
      %v496 = vadd.f32 %v364, %v495
      %v497 = vpop.f32.mrf.mxu0
      %v498 = vpop.f32.mrf.mxu0
      %v499 = vpop.f32.mrf.mxu0
      %500 = vdwg.mxu0
      %v501 = vld [vmem:[%s1] sm:$0x7]
      %v503 = vlaneseq
      %v504 = vshrl.u32 %v503, 7
      %v505 = vsub.s32 0, %v504
      %v506 = vrot.slane %v501, %v505
      %v507 = vlaneseq
      %v508 = vshrl.u32 %v507, 7
      %v509 = vsub.s32 1, %v508
      %v510 = vrot.slane %v501, %v509
      %v511 = vlaneseq
      %v512 = vshrl.u32 %v511, 7
      %v513 = vsub.s32 2, %v512
      %v514 = vrot.slane %v501, %v513
      %v518 = vmul.f32 %v455, %v506
      %v519 = vmul.f32 %v457, %v510
      %v520 = vmul.f32 %v496, %v514
      %v521 = vpack.c.bf16 %v518, %v518
      %v522 = vpack.c.bf16 %v519, %v519
      %v523 = vpack.c.bf16 %v520, %v520
      %v528 = vunpack.c.l.b16 0
      %v529 = vunpack.c.l.b16 %v521
      %v530 = vunpack.c.l.b16 %v522
      %v531 = vunpack.c.l.b16 %v523
      %v532 = vpack.c.b16 %v529, %v528
      %v533 = vpack.c.b16 %v531, %v530
      %v534 = vpack.c.b16 %v528, %v528
      %538 = vst [vmem:[%s197] sm:$0xff] %v532
      %539 = vst [vmem:[%s197 + $0x8] sm:$0xff] %v533
      %540 = vst [vmem:[%s197 + $0x10] sm:$0xf] %v534
      %p541 = scmp.lt.s32.totalorder %s15, 1
      %s542 = scalar_select %p541, %s15, 1
      %s543 = smul.addr %s542, 5
      %s544 = smul.addr %s543, 4
      %s545 = scalar_lea.vmem %s4, %s544
      // Predicated region
      $region37: #{a_call__.6} parent=35 // pred_check
        %p546 = pneg %p122
      $region38: #{a_call__.6} parent=35 // pred_check_branch
        %548 = sbr.rel (%p546) target = $region40
      $region39: #{a_call__.6} parent=35 // pred_region
        _
      $region40: #{a_call__.6} parent=35 // pred_fallthru
        _
    $region36: #{a_call__.6} parent=5 // pred_fallthru
      _
    %p549 = scmp.le.s32.totalorder 2, %s10
    // Predicated region
    $region41: #{a_call__.6} parent=5 // pred_check
      %p550 = pneg %p549
    $region42: #{a_call__.6} parent=5 // pred_check_branch
      %552 = sbr.rel (%p550) target = $region44
    $region43: #{a_call__.6} parent=5 // pred_region
      %s553 = ssub.s32 %s10, 2
      // Predicated region
      $region45: #{a_call__.6} parent=43 // pred_check
        %p554 = pneg %p128
      $region46: #{a_call__.6} parent=43 // pred_check_branch
        %556 = sbr.rel (%p554) target = $region48
      $region47: #{a_call__.6} parent=43 // pred_region
        %p557 = scmp.lt.s32.totalorder %s16, 1
        %s558 = scalar_select %p557, %s16, 1
        %s559 = smul.addr %s558, 5
        %s560 = smul.addr %s559, 4
        %s561 = scalar_lea.vmem %s4, %s560
      $region48: #{a_call__.6} parent=43 // pred_fallthru
        _
    $region44: #{a_call__.6} parent=5 // pred_fallthru
      _
  $region6: #{a_call__.6} parent=0 // loop_footer
    %s14 = sadd.s32 1, %s10
  $region7: #{a_call__.6} parent=0 // loop_footer_branch
    %9 = sbr.rel target = $region3
  $region8: #{a_call__.6} parent=0 // loop_exit
    _

// kernel: a_call__.5
$region0: #{a_call__.5}
  #allocation0 [shape = 'u32[]', space=smem, size = 0x4, offset = 0x4, fixed_abs, tag = 'smem constant byte address 0x4 - core index']
  #allocation1 [shape = 'u32[144,128]{1,0:T(1,128)}', space=vmem, size = 0x12000, scoped, tag = 'internal scratch']
  #allocation2 [shape = 'bf16[72,384]{1,0:T(8,128)(2,1)}', space=vmem, size = 0xd800, scoped, tag = 'scratch operand']
  %s0 = inlined_call_operand.vmem [shape: bf16[2,8,640], index: 0, kind: input, shape index: {}]
  %s1 = inlined_call_operand.vmem [shape: f32[1,640], index: 1, kind: input, shape index: {}]
  %s2 = inlined_call_operand.vmem [shape: f32[8,1], index: 2, kind: input, shape index: {}]
  %s3 = inlined_call_operand.vmem [shape: f32[8,1], index: 3, kind: input, shape index: {}]
  %s4 = inlined_call_operand.vmem [shape: f32[1,384], index: 4, kind: input, shape index: {}]
  %s5 = inlined_call_operand.vmem [shape: bf16[8,72], index: 5, kind: input, shape index: {}]
  %s6 = inlined_call_operand.vmem [shape: f32[8,1], index: 6, kind: input, shape index: {}]
  %s7 = inlined_call_operand.vmem [shape: bf16[2,8,640], index: 7, kind: output, shape index: {}]
  %s8 = sld [smem:[#allocation0]]
  $region61: #{a_call__.5} parent=0
    _
  %s10 = ssub.s32 1, %s8
  %s11 = scalar_select 0, %s10, %s8
  loop: start=0, step=1, limit=4
  $region2: #{a_call__.5} parent=0 // loop_pre_header
    _
  $region3: #{a_call__.5} parent=0 // loop_header
    %s13 = sphi 0, %s17
    %p14 = scmp.ge.s32.totalorder %s13, 4
    %s23 = sphi 0, %s25
    %s26 = sphi 0, %s23
    %s27 = sphi 0, %s26
    %s43 = sphi 0, %s27
    %s47 = sphi 0, %s47
    %s49 = sphi 0, %s47
    %s50 = sphi 0, %s49
    %s64 = sphi 0, %s50
    %s68 = sphi 0, %s68
    %s70 = sphi 0, %s68
    %s71 = sphi 0, %s70
    %s85 = sphi 0, %s71
    %s89 = sphi 0, %s89
    %s91 = sphi 0, %s89
    %s92 = sphi 0, %s91
    %s106 = sphi 0, %s92
    %s110 = sphi 0, %s110
    %s112 = sphi 0, %s110
    %s113 = sphi 0, %s112
    %s127 = sphi 0, %s113
    %s131 = sphi 0, %s131
    %s133 = sphi 0, %s131
    %s134 = sphi 0, %s133
    %s148 = sphi 0, %s134
    %s152 = sphi 0, %s152
    %s154 = sphi 0, %s152
    %s155 = sphi 0, %s154
    %s169 = sphi 0, %s155
    %s175 = sphi 0, %s177
    %s178 = sphi 0, %s175
    %s179 = sphi 0, %s178
    %s195 = sphi 0, %s179
  $region4: #{a_call__.5} parent=0 // loop_header_branch
    %16 = sbr.rel (%p14) target = $region8
  $region5: #{a_call__.5} parent=0 // loop_body
    %s18 = ssub.s32 %s13, 1
    %s19 = ssub.s32 %s13, 2
    %s20 = sadd.s32 %s13, 1
    %s21 = ssub.s32 %s13, %s20
    %p22 = scmp.eq.s32.totalorder %s21, 0
    %s24 = sadd.s32 %s23, 1
    %s25 = scalar_select %p22, %s23, %s24
    %p28 = pneg %p22
    %p29 = scmp.eq.s32.totalorder %s13, 1
    %p30 = por %p28, %p29
    %p31 = scmp.ne.s32.totalorder %s23, %s26
    %p32 = scmp.eq.s32.totalorder %s13, 0
    %p33 = por %p31, %p32
    %p34 = scmp.ne.s32.totalorder %s23, %s26
    %p35 = scmp.eq.s32.totalorder %s18, 1
    %p36 = por %p34, %p35
    %p37 = scmp.ne.s32.totalorder %s26, %s27
    %p38 = scmp.eq.s32.totalorder %s18, 0
    %p39 = por %p37, %p38
    %p40 = scmp.ne.s32.totalorder %s26, %s27
    %p41 = scmp.eq.s32.totalorder %s19, 1
    %p42 = por %p40, %p41
    %p44 = scmp.ne.s32.totalorder %s27, %s43
    %p45 = scmp.eq.s32.totalorder %s19, 0
    %p46 = por %p44, %p45
    %s48 = sadd.s32 %s47, 1
    %p51 = scmp.eq.s32.totalorder %s13, 1
    %p52 = scmp.ne.s32.totalorder %s47, %s49
    %p53 = scmp.eq.s32.totalorder %s13, 0
    %p54 = por %p52, %p53
    %p55 = scmp.ne.s32.totalorder %s47, %s49
    %p56 = scmp.eq.s32.totalorder %s18, 1
    %p57 = por %p55, %p56
    %p58 = scmp.ne.s32.totalorder %s49, %s50
    %p59 = scmp.eq.s32.totalorder %s18, 0
    %p60 = por %p58, %p59
    %p61 = scmp.ne.s32.totalorder %s49, %s50
    %p62 = scmp.eq.s32.totalorder %s19, 1
    %p63 = por %p61, %p62
    %p65 = scmp.ne.s32.totalorder %s50, %s64
    %p66 = scmp.eq.s32.totalorder %s19, 0
    %p67 = por %p65, %p66
    %s69 = sadd.s32 %s68, 1
    %p72 = scmp.eq.s32.totalorder %s13, 1
    %p73 = scmp.ne.s32.totalorder %s68, %s70
    %p74 = scmp.eq.s32.totalorder %s13, 0
    %p75 = por %p73, %p74
    %p76 = scmp.ne.s32.totalorder %s68, %s70
    %p77 = scmp.eq.s32.totalorder %s18, 1
    %p78 = por %p76, %p77
    %p79 = scmp.ne.s32.totalorder %s70, %s71
    %p80 = scmp.eq.s32.totalorder %s18, 0
    %p81 = por %p79, %p80
    %p82 = scmp.ne.s32.totalorder %s70, %s71
    %p83 = scmp.eq.s32.totalorder %s19, 1
    %p84 = por %p82, %p83
    %p86 = scmp.ne.s32.totalorder %s71, %s85
    %p87 = scmp.eq.s32.totalorder %s19, 0
    %p88 = por %p86, %p87
    %s90 = sadd.s32 %s89, 1
    %p93 = scmp.eq.s32.totalorder %s13, 1
    %p94 = scmp.ne.s32.totalorder %s89, %s91
    %p95 = scmp.eq.s32.totalorder %s13, 0
    %p96 = por %p94, %p95
    %p97 = scmp.ne.s32.totalorder %s89, %s91
    %p98 = scmp.eq.s32.totalorder %s18, 1
    %p99 = por %p97, %p98
    %p100 = scmp.ne.s32.totalorder %s91, %s92
    %p101 = scmp.eq.s32.totalorder %s18, 0
    %p102 = por %p100, %p101
    %p103 = scmp.ne.s32.totalorder %s91, %s92
    %p104 = scmp.eq.s32.totalorder %s19, 1
    %p105 = por %p103, %p104
    %p107 = scmp.ne.s32.totalorder %s92, %s106
    %p108 = scmp.eq.s32.totalorder %s19, 0
    %p109 = por %p107, %p108
    %s111 = sadd.s32 %s110, 1
    %p114 = scmp.eq.s32.totalorder %s13, 1
    %p115 = scmp.ne.s32.totalorder %s110, %s112
    %p116 = scmp.eq.s32.totalorder %s13, 0
    %p117 = por %p115, %p116
    %p118 = scmp.ne.s32.totalorder %s110, %s112
    %p119 = scmp.eq.s32.totalorder %s18, 1
    %p120 = por %p118, %p119
    %p121 = scmp.ne.s32.totalorder %s112, %s113
    %p122 = scmp.eq.s32.totalorder %s18, 0
    %p123 = por %p121, %p122
    %p124 = scmp.ne.s32.totalorder %s112, %s113
    %p125 = scmp.eq.s32.totalorder %s19, 1
    %p126 = por %p124, %p125
    %p128 = scmp.ne.s32.totalorder %s113, %s127
    %p129 = scmp.eq.s32.totalorder %s19, 0
    %p130 = por %p128, %p129
    %s132 = sadd.s32 %s131, 1
    %p135 = scmp.eq.s32.totalorder %s13, 1
    %p136 = scmp.ne.s32.totalorder %s131, %s133
    %p137 = scmp.eq.s32.totalorder %s13, 0
    %p138 = por %p136, %p137
    %p139 = scmp.ne.s32.totalorder %s131, %s133
    %p140 = scmp.eq.s32.totalorder %s18, 1
    %p141 = por %p139, %p140
    %p142 = scmp.ne.s32.totalorder %s133, %s134
    %p143 = scmp.eq.s32.totalorder %s18, 0
    %p144 = por %p142, %p143
    %p145 = scmp.ne.s32.totalorder %s133, %s134
    %p146 = scmp.eq.s32.totalorder %s19, 1
    %p147 = por %p145, %p146
    %p149 = scmp.ne.s32.totalorder %s134, %s148
    %p150 = scmp.eq.s32.totalorder %s19, 0
    %p151 = por %p149, %p150
    %s153 = sadd.s32 %s152, 1
    %p156 = scmp.eq.s32.totalorder %s13, 1
    %p157 = scmp.ne.s32.totalorder %s152, %s154
    %p158 = scmp.eq.s32.totalorder %s13, 0
    %p159 = por %p157, %p158
    %p160 = scmp.ne.s32.totalorder %s152, %s154
    %p161 = scmp.eq.s32.totalorder %s18, 1
    %p162 = por %p160, %p161
    %p163 = scmp.ne.s32.totalorder %s154, %s155
    %p164 = scmp.eq.s32.totalorder %s18, 0
    %p165 = por %p163, %p164
    %p166 = scmp.ne.s32.totalorder %s154, %s155
    %p167 = scmp.eq.s32.totalorder %s19, 1
    %p168 = por %p166, %p167
    %p170 = scmp.ne.s32.totalorder %s155, %s169
    %p171 = scmp.eq.s32.totalorder %s19, 0
    %p172 = por %p170, %p171
    %s173 = ssub.s32 %s13, %s20
    %p174 = scmp.eq.s32.totalorder %s173, 0
    %s176 = sadd.s32 %s175, 1
    %s177 = scalar_select %p174, %s175, %s176
    %p180 = pneg %p174
    %p181 = scmp.eq.s32.totalorder %s13, 1
    %p182 = por %p180, %p181
    %p183 = scmp.ne.s32.totalorder %s175, %s178
    %p184 = scmp.eq.s32.totalorder %s13, 0
    %p185 = por %p183, %p184
    %p186 = scmp.ne.s32.totalorder %s175, %s178
    %p187 = scmp.eq.s32.totalorder %s18, 1
    %p188 = por %p186, %p187
    %p189 = scmp.ne.s32.totalorder %s178, %s179
    %p190 = scmp.eq.s32.totalorder %s18, 0
    %p191 = por %p189, %p190
    %p192 = scmp.ne.s32.totalorder %s178, %s179
    %p193 = scmp.eq.s32.totalorder %s19, 1
    %p194 = por %p192, %p193
    %p196 = scmp.ne.s32.totalorder %s179, %s195
    %p197 = scmp.eq.s32.totalorder %s19, 0
    %p198 = por %p196, %p197
    %p199 = scmp.le.s32.totalorder 1, %s13
    %p200 = scmp.lt.s32.totalorder %s13, 3
    %p201 = pnand %p199, %p200
    %p202 = pneg %p201
    // Predicated region
    $region9: #{a_call__.5} parent=5 // pred_check
      _
    $region10: #{a_call__.5} parent=5 // pred_check_branch
      %204 = sbr.rel (%p201) target = $region12
    $region11: #{a_call__.5} parent=5 // pred_region
      %s205 = ssub.s32 %s13, 1
      // Predicated region
      $region13: #{a_call__.5} parent=11 // pred_check
        %p206 = pneg %p60
      $region14: #{a_call__.5} parent=11 // pred_check_branch
        %208 = sbr.rel (%p206) target = $region16
      $region15: #{a_call__.5} parent=11 // pred_region
        _
      $region16: #{a_call__.5} parent=11 // pred_fallthru
        _
      // Predicated region
      $region17: #{a_call__.5} parent=11 // pred_check
        %p209 = pneg %p81
      $region18: #{a_call__.5} parent=11 // pred_check_branch
        %211 = sbr.rel (%p209) target = $region20
      $region19: #{a_call__.5} parent=11 // pred_region
        _
      $region20: #{a_call__.5} parent=11 // pred_fallthru
        _
      // Predicated region
      $region21: #{a_call__.5} parent=11 // pred_check
        %p212 = pneg %p102
      $region22: #{a_call__.5} parent=11 // pred_check_branch
        %214 = sbr.rel (%p212) target = $region24
      $region23: #{a_call__.5} parent=11 // pred_region
        _
      $region24: #{a_call__.5} parent=11 // pred_fallthru
        _
      // Predicated region
      $region25: #{a_call__.5} parent=11 // pred_check
        %p215 = pneg %p123
      $region26: #{a_call__.5} parent=11 // pred_check_branch
        %217 = sbr.rel (%p215) target = $region28
      $region27: #{a_call__.5} parent=11 // pred_region
        _
      $region28: #{a_call__.5} parent=11 // pred_fallthru
        _
      // Predicated region
      $region29: #{a_call__.5} parent=11 // pred_check
        %p218 = pneg %p144
      $region30: #{a_call__.5} parent=11 // pred_check_branch
        %220 = sbr.rel (%p218) target = $region32
      $region31: #{a_call__.5} parent=11 // pred_region
        _
      $region32: #{a_call__.5} parent=11 // pred_fallthru
        _
      // Predicated region
      $region33: #{a_call__.5} parent=11 // pred_check
        %p221 = pneg %p165
      $region34: #{a_call__.5} parent=11 // pred_check_branch
        %223 = sbr.rel (%p221) target = $region36
      $region35: #{a_call__.5} parent=11 // pred_region
        _
      $region36: #{a_call__.5} parent=11 // pred_fallthru
        _
    $region12: #{a_call__.5} parent=5 // pred_fallthru
      _
    %p224 = scmp.lt.s32.totalorder %s13, 2
    // Predicated region
    $region37: #{a_call__.5} parent=5 // pred_check
      %p225 = pneg %p224
    $region38: #{a_call__.5} parent=5 // pred_check_branch
      %227 = sbr.rel (%p225) target = $region40
    $region39: #{a_call__.5} parent=5 // pred_region
      // Predicated region
      $region41: #{a_call__.5} parent=39 // pred_check
        %p228 = pneg %p33
      $region42: #{a_call__.5} parent=39 // pred_check_branch
        %230 = sbr.rel (%p228) target = $region44
      $region43: #{a_call__.5} parent=39 // pred_region
        %p231 = scmp.lt.s32.totalorder %s13, 1
        %s232 = scalar_select %p231, %s13, 1
        %s233 = smul.addr %s232, 5
        %s234 = smul.addr %s233, 4
        %s235 = scalar_lea.vmem %s0, %s234
      $region44: #{a_call__.5} parent=39 // pred_fallthru
        _
    $region40: #{a_call__.5} parent=5 // pred_fallthru
      _
    %p236 = scmp.le.s32.totalorder 1, %s13
    %p237 = scmp.lt.s32.totalorder %s13, 3
    %p238 = pnand %p236, %p237
    %p239 = pneg %p238
    // Predicated region
    $region45: #{a_call__.5} parent=5 // pred_check
      _
    $region46: #{a_call__.5} parent=5 // pred_check_branch
      %241 = sbr.rel (%p238) target = $region48
    $region47: #{a_call__.5} parent=5 // pred_region
      %s242 = ssub.s32 %s13, 1
      %p243 = scmp.lt.s32.totalorder %s18, 1
      %s244 = scalar_select %p243, %s18, 1
      %s245 = smul.addr %s244, 5
      %s246 = smul.addr %s245, 4
      %s247 = scalar_lea.vmem %s0, %s246
      %p248 = pneg %p39
      %p249 = pneg %p36
      %p250 = pneg %p60
      %p251 = pneg %p57
      %p252 = pneg %p81
      %p253 = pneg %p78
      %p254 = pneg %p102
      %p255 = pneg %p99
      %p256 = pneg %p123
      %p257 = pneg %p120
      %p258 = pneg %p144
      %p259 = pneg %p141
      %p260 = pneg %p165
      %p261 = pneg %p162
      %p262 = pneg %p191
      %p263 = pneg %p188
      %p264 = scmp.lt.s32.totalorder %s18, 1
      %s265 = scalar_select %p264, %s18, 1
      %s266 = smul.addr %s265, 5
      %s267 = smul.addr %s266, 4
      %s268 = scalar_lea.vmem %s7, %s267
      %p269 = scmp.lt.s32.totalorder %s18, 1
      %s270 = scalar_select %p269, %s18, 1
      %s271 = smul.addr %s270, 5
      %s272 = smul.addr %s271, 4
      %s273 = scalar_lea.vmem %s0, %s272
      %p274 = scmp.lt.s32.totalorder %s18, 1
      %s275 = scalar_select %p274, %s18, 1
      %s276 = smul.addr %s275, 5
      %s277 = smul.addr %s276, 4
      %s278 = scalar_lea.vmem %s7, %s277
      %v280 = vld [vmem:[%s273] sm:$0xff]
      %v281 = vld [vmem:[%s273 + $0x8] sm:$0xff]
      %v282 = vld [vmem:[%s273 + $0x10] sm:$0xf]
      %v283 = vunpack.c.l.bf16 %v280
      %v284 = vunpack.c.h.bf16 %v280
      %v285 = vunpack.c.l.bf16 %v281
      %v286 = vunpack.c.h.bf16 %v281
      %v287 = vunpack.c.l.bf16 %v282
      %v288 = vld [vmem:[%s1] sm:$0x1f]
      %v289 = vadd.f32 %v283, %v284
      %v290 = vadd.f32 %v289, %v285
      %v291 = vadd.f32 %v290, %v286
      %v292 = vadd.f32 %v291, %v287
      %293 = vadd.xlane.f32.xlu0 %v292
      %v294 = vpop.xlane.xlu0 %293
      %v295 = vmul.f32 %v294, 0.00390625
      %v296 = vsub.f32 %v283, %v295
      %v297 = vsub.f32 %v284, %v295
      %v298 = vsub.f32 %v285, %v295
      %v299 = vsub.f32 %v286, %v295
      %v300 = vsub.f32 %v287, %v295
      %v302 = vlaneseq
      %v303 = vshrl.u32 %v302, 7
      %v304 = vsub.s32 0, %v303
      %v305 = vrot.slane %v288, %v304
      %v306 = vlaneseq
      %v307 = vshrl.u32 %v306, 7
      %v308 = vsub.s32 1, %v307
      %v309 = vrot.slane %v288, %v308
      %v310 = vlaneseq
      %v311 = vshrl.u32 %v310, 7
      %v312 = vsub.s32 2, %v311
      %v313 = vrot.slane %v288, %v312
      %v314 = vlaneseq
      %v315 = vshrl.u32 %v314, 7
      %v316 = vsub.s32 3, %v315
      %v317 = vrot.slane %v288, %v316
      %v318 = vlaneseq
      %v319 = vshrl.u32 %v318, 7
      %v320 = vsub.s32 4, %v319
      %v321 = vrot.slane %v288, %v320
      %v327 = vmul.f32 %v296, %v305
      %v328 = vmul.f32 %v297, %v309
      %v329 = vmul.f32 %v298, %v313
      %v330 = vmul.f32 %v299, %v317
      %v331 = vmul.f32 %v300, %v321
      %v332 = vmul.f32 %v327, %v327
      %v333 = vmul.f32 %v328, %v328
      %v334 = vmul.f32 %v329, %v329
      %v335 = vmul.f32 %v330, %v330
      %v336 = vmul.f32 %v331, %v331
      %v337 = vadd.f32 %v332, %v333
      %v338 = vadd.f32 %v337, %v334
      %v339 = vadd.f32 %v338, %v335
      %v340 = vadd.f32 %v339, %v336
      %341 = vadd.xlane.f32.xlu0 %v340
      %v342 = vpop.xlane.xlu0 %341
      %v343 = vmul.f32 %v342, 0.00390625
      %v344 = vadd.f32 %v343, 1e-05
      %v345 = vrsqrt.pop %v344
      %v346 = vmul.f32 %v327, %v345
      %v347 = vmul.f32 %v328, %v345
      %v348 = vmul.f32 %v329, %v345
      %v349 = vmul.f32 %v330, %v345
      %v350 = vmul.f32 %v331, %v345
      %v351 = vld [vmem:[%s2] sm:$0xff]
      %353 = vset.pattern.permute.xlu0 0
      %354 = vperm.xlu0 %353, %v351
      %v355 = vpop.permute.xlu0 %354
      %v357 = vmul.f32 %v346, %v355
      %v358 = vmul.f32 %v347, %v355
      %v359 = vmul.f32 %v348, %v355
      %v360 = vmul.f32 %v349, %v355
      %v361 = vmul.f32 %v350, %v355
      %v362 = vld [vmem:[%s3] sm:$0xff]
      %364 = vset.pattern.permute.xlu0 0
      %365 = vperm.xlu0 %364, %v362
      %v366 = vpop.permute.xlu0 %365
      %v368 = vadd.f32 %v357, %v366
      %v369 = vadd.f32 %v358, %v366
      %v370 = vadd.f32 %v359, %v366
      %v371 = vadd.f32 %v360, %v366
      %v372 = vadd.f32 %v361, %v366
      %v373 = vmul.f32 %v368, 0.5
      %v374 = vmul.f32 %v369, 0.5
      %v375 = vmul.f32 %v370, 0.5
      %v376 = vmul.f32 %v371, 0.5
      %v377 = vmul.f32 %v372, 0.5
      %v378 = vmul.f32 %v368, 0.044715
      %v379 = vmul.f32 %v369, 0.044715
      %v380 = vmul.f32 %v370, 0.044715
      %v381 = vmul.f32 %v371, 0.044715
      %v382 = vmul.f32 %v372, 0.044715
      %v383 = vmul.f32 %v378, %v368
      %v384 = vmul.f32 %v379, %v369
      %v385 = vmul.f32 %v380, %v370
      %v386 = vmul.f32 %v381, %v371
      %v387 = vmul.f32 %v382, %v372
      %v388 = vmul.f32 %v383, %v368
      %v389 = vmul.f32 %v384, %v369
      %v390 = vmul.f32 %v385, %v370
      %v391 = vmul.f32 %v386, %v371
      %v392 = vmul.f32 %v387, %v372
      %v393 = vadd.f32 %v368, %v388
      %v394 = vadd.f32 %v369, %v389
      %v395 = vadd.f32 %v370, %v390
      %v396 = vadd.f32 %v371, %v391
      %v397 = vadd.f32 %v372, %v392
      %v398 = vmul.f32 %v393, 0.7978846
      %v399 = vmul.f32 %v394, 0.7978846
      %v400 = vmul.f32 %v395, 0.7978846
      %v401 = vmul.f32 %v396, 0.7978846
      %v402 = vmul.f32 %v397, 0.7978846
      %v403 = vtanh.pop %v398
      %v404 = vtanh.pop %v399
      %v405 = vtanh.pop %v400
      %v406 = vtanh.pop %v401
      %v407 = vtanh.pop %v402
      %v408 = vadd.f32 %v403, 1.0
      %v409 = vadd.f32 %v404, 1.0
      %v410 = vadd.f32 %v405, 1.0
      %v411 = vadd.f32 %v406, 1.0
      %v412 = vadd.f32 %v407, 1.0
      %v413 = vmul.f32 %v373, %v408
      %v414 = vmul.f32 %v374, %v409
      %v415 = vmul.f32 %v375, %v410
      %v416 = vmul.f32 %v376, %v411
      %v417 = vmul.f32 %v377, %v412
      %v418 = vmul.f32 %v413, %v305
      %v419 = vmul.f32 %v414, %v309
      %v420 = vmul.f32 %v415, %v313
      %v421 = vmul.f32 %v416, %v317
      %v422 = vmul.f32 %v417, %v321
      %v423 = vpack.c.bf16 %v418, %v418
      %v424 = vpack.c.bf16 %v419, %v419
      %v425 = vpack.c.bf16 %v420, %v420
      %v426 = vpack.c.bf16 %v421, %v421
      %v427 = vpack.c.bf16 %v422, %v422
      %v432 = vunpack.c.l.b16 %v423
      %v433 = vunpack.c.l.b16 %v424
      %v434 = vunpack.c.l.b16 %v425
      %v435 = vunpack.c.l.b16 %v426
      %v436 = vpack.c.b16 %v433, %v432
      %v437 = vpack.c.b16 %v435, %v434
      %438 = vrot.lane.b32.xlu0 %v436, 19
      %v439 = vpop.permute.xlu0 %438
      %440 = vrot.lane.b32.xlu0 %v437, 19
      %v441 = vpop.permute.xlu0 %440
      %v442 = vrot.slane %v439, 4
      %v443 = vrot.slane %v441, 4
      %vm444 = vcmask 1043456
      %v445 = vsel %vm444, %v442, %v443
      %vm446 = vcmask 154624
      %v447 = vsel %vm446, %v439, %v445
      %v448 = vsel %vm446, %v441, %v443
      %451 = vst [vmem:[#allocation2] sm:$0xff] %v447
      %452 = vst [vmem:[#allocation2 + $0x8] sm:$0xf] %v448
      %453 = vrot.lane.b32.xlu0 %v436, 18
      %v454 = vpop.permute.xlu0 %453
      %455 = vrot.lane.b32.xlu0 %v437, 18
      %v456 = vpop.permute.xlu0 %455
      %v457 = vrot.slane %v454, 4
      %v458 = vrot.slane %v456, 4
      %v459 = vsel %vm444, %v457, %v458
      %vm460 = vcmask 146432
      %v461 = vsel %vm460, %v454, %v459
      %v462 = vsel %vm460, %v456, %v458
      %465 = vst [vmem:[#allocation2 + $0xc] sm:$0xff] %v461
      %466 = vst [vmem:[#allocation2 + $0x14] sm:$0xf] %v462
      %467 = vrot.lane.b32.xlu0 %v436, 17
      %v468 = vpop.permute.xlu0 %467
      %469 = vrot.lane.b32.xlu0 %v437, 17
      %v470 = vpop.permute.xlu0 %469
      %v471 = vrot.slane %v468, 4
      %v472 = vrot.slane %v470, 4
      %v473 = vsel %vm444, %v471, %v472
      %vm474 = vcmask 138240
      %v475 = vsel %vm474, %v468, %v473
      %v476 = vsel %vm474, %v470, %v472
      %479 = vst [vmem:[#allocation2 + $0x18] sm:$0xff] %v475
      %480 = vst [vmem:[#allocation2 + $0x20] sm:$0xf] %v476
      %481 = vrot.lane.b32.xlu0 %v436, 1
      %v482 = vpop.permute.xlu0 %481
      %483 = vrot.lane.b32.xlu0 %v437, 1
      %v484 = vpop.permute.xlu0 %483
      %v485 = vrot.slane %v482, 4
      %v486 = vrot.slane %v484, 4
      %v487 = vsel %vm444, %v485, %v486
      %vm488 = vcmask 7168
      %v489 = vsel %vm488, %v482, %v487
      %v490 = vsel %vm488, %v484, %v486
      %493 = vst [vmem:[#allocation2 + $0x24] sm:$0xff] %v489
      %494 = vst [vmem:[#allocation2 + $0x2c] sm:$0xf] %v490
      %v495 = vpack.c.b16 %v434, %v433
      %v496 = vpack.c.b16 %v435, %v435
      %499 = vst [vmem:[#allocation2 + $0x30] sm:$0xff] %v495
      %500 = vst [vmem:[#allocation2 + $0x38] sm:$0xf] %v496
      %v502 = vunpack.c.l.b16 %v427
      %v503 = vpack.c.b16 %v502, %v435
      %504 = vrot.lane.b32.xlu0 %v495, 127
      %v505 = vpop.permute.xlu0 %504
      %506 = vrot.lane.b32.xlu0 %v503, 127
      %v507 = vpop.permute.xlu0 %506
      %v508 = vrot.slane %v505, 4
      %v509 = vrot.slane %v507, 4
      %v510 = vsel %vm444, %v508, %v509
      %vm511 = vcmask 1039360
      %v512 = vsel %vm511, %v505, %v510
      %v513 = vsel %vm511, %v507, %v509
      %516 = vst [vmem:[#allocation2 + $0x3c] sm:$0xff] %v512
      %517 = vst [vmem:[#allocation2 + $0x44] sm:$0xf] %v513
      %518 = vrot.lane.b32.xlu0 %v495, 111
      %v519 = vpop.permute.xlu0 %518
      %520 = vrot.lane.b32.xlu0 %v503, 111
      %v521 = vpop.permute.xlu0 %520
      %v522 = vrot.slane %v519, 4
      %v523 = vrot.slane %v521, 4
      %v524 = vsel %vm444, %v522, %v523
      %vm525 = vcmask 908288
      %v526 = vsel %vm525, %v519, %v524
      %v527 = vsel %vm525, %v521, %v523
      %530 = vst [vmem:[#allocation2 + $0x48] sm:$0xff] %v526
      %531 = vst [vmem:[#allocation2 + $0x50] sm:$0xf] %v527
      %532 = vrot.lane.b32.xlu0 %v495, 110
      %v533 = vpop.permute.xlu0 %532
      %534 = vrot.lane.b32.xlu0 %v503, 110
      %v535 = vpop.permute.xlu0 %534
      %v536 = vrot.slane %v533, 4
      %v537 = vrot.slane %v535, 4
      %v538 = vsel %vm444, %v536, %v537
      %vm539 = vcmask 900096
      %v540 = vsel %vm539, %v533, %v538
      %v541 = vsel %vm539, %v535, %v537
      %544 = vst [vmem:[#allocation2 + $0x54] sm:$0xff] %v540
      %545 = vst [vmem:[#allocation2 + $0x5c] sm:$0xf] %v541
      %546 = vrot.lane.b32.xlu0 %v495, 109
      %v547 = vpop.permute.xlu0 %546
      %548 = vrot.lane.b32.xlu0 %v503, 109
      %v549 = vpop.permute.xlu0 %548
      %v550 = vrot.slane %v547, 4
      %v551 = vrot.slane %v549, 4
      %v552 = vsel %vm444, %v550, %v551
      %vm553 = vcmask 891904
      %v554 = vsel %vm553, %v547, %v552
      %v555 = vsel %vm553, %v549, %v551
      %558 = vst [vmem:[#allocation2 + $0x60] sm:$0xff] %v554
      %559 = vst [vmem:[#allocation2 + $0x68] sm:$0xf] %v555
      %v560 = vld [vmem:[%s5] sm:$0xf]
      %v561 = vld [vmem:[#allocation2] sm:$0xff]
      %v562 = vld [vmem:[#allocation2 + $0x8] sm:$0xf]
      %v563 = vld [vmem:[#allocation2 + $0xc] sm:$0xff]
      %v564 = vld [vmem:[#allocation2 + $0x14] sm:$0xf]
      %v565 = vld [vmem:[#allocation2 + $0x18] sm:$0xff]
      %v566 = vld [vmem:[#allocation2 + $0x20] sm:$0xf]
      %v567 = vld [vmem:[#allocation2 + $0x24] sm:$0xff]
      %v568 = vld [vmem:[#allocation2 + $0x2c] sm:$0xf]
      %v569 = vld [vmem:[#allocation2 + $0x30] sm:$0xff]
      %v570 = vld [vmem:[#allocation2 + $0x38] sm:$0xf]
      %v571 = vld [vmem:[#allocation2 + $0x3c] sm:$0xff]
      %v572 = vld [vmem:[#allocation2 + $0x44] sm:$0xf]
      %v573 = vld [vmem:[#allocation2 + $0x48] sm:$0xff]
      %v574 = vld [vmem:[#allocation2 + $0x50] sm:$0xf]
      %v575 = vld [vmem:[#allocation2 + $0x54] sm:$0xff]
      %v576 = vld [vmem:[#allocation2 + $0x5c] sm:$0xf]
      %v577 = vld [vmem:[#allocation2 + $0x60] sm:$0xff]
      %v578 = vld [vmem:[#allocation2 + $0x68] sm:$0xf]
      %v579 = vld [vmem:[%s6] sm:$0xff]
      %581 = vset.pattern.permute.xlu0 0
      %582 = vperm.xlu0 %581, %v579
      %v583 = vpop.permute.xlu0 %582
      %v603 = vunpack.c.l.b16 %v561
      %v604 = vunpack.c.h.b16 %v561
      %v605 = vunpack.c.l.b16 %v562
      %v606 = vunpack.c.l.b16 %v563
      %v607 = vunpack.c.h.b16 %v563
      %v608 = vunpack.c.l.b16 %v564
      %v609 = vunpack.c.l.b16 %v565
      %v610 = vunpack.c.h.b16 %v565
      %v611 = vunpack.c.l.b16 %v566
      %v612 = vunpack.c.l.b16 %v567
      %v613 = vunpack.c.h.b16 %v567
      %v614 = vunpack.c.l.b16 %v568
      %v615 = vunpack.c.l.b16 %v569
      %v616 = vunpack.c.h.b16 %v569
      %v617 = vunpack.c.l.b16 %v570
      %v618 = vunpack.c.l.b16 %v571
      %v619 = vunpack.c.h.b16 %v571
      %v620 = vunpack.c.l.b16 %v572
      %v621 = vunpack.c.l.b16 %v573
      %v622 = vunpack.c.h.b16 %v573
      %v623 = vunpack.c.l.b16 %v574
      %v624 = vunpack.c.l.b16 %v575
      %v625 = vunpack.c.h.b16 %v575
      %v626 = vunpack.c.l.b16 %v576
      %v627 = vunpack.c.l.b16 %v577
      %v628 = vunpack.c.h.b16 %v577
      %v629 = vunpack.c.l.b16 %v578
      %v630 = vpack.c.b16 %v606, %v603
      %v631 = vpack.c.b16 %v607, %v604
      %v632 = vpack.c.b16 %v608, %v605
      %v633 = vpack.c.b16 %v612, %v609
      %v634 = vpack.c.b16 %v613, %v610
      %v635 = vpack.c.b16 %v614, %v611
      %v636 = vpack.c.b16 %v618, %v615
      %v637 = vpack.c.b16 %v619, %v616
      %v638 = vpack.c.b16 %v620, %v617
      %v639 = vpack.c.b16 %v624, %v621
      %v640 = vpack.c.b16 %v625, %v622
      %v641 = vpack.c.b16 %v626, %v623
      %v642 = vpack.c.b16 %v627, %v627
      %v643 = vpack.c.b16 %v628, %v628
      %v644 = vpack.c.b16 %v629, %v629
      %vm657 = vcmask 588800
      %v659 = vsel %vm657, %v560, 0
      %vm661 = vcmask 1043456
      %v663 = vsel %vm661, %v642, 0
      %v666 = vsel %vm661, %v643, 0
      %v669 = vsel %vm661, %v644, 0
      %671 = vmatprep.subr.bf16.mxu0 0
      %672 = vmatpush1.bf16.msra.mxu0 0
      %673 = vmatprep.subr.bf16.mxu0 0
      %674 = vmatpush1.bf16.msra.mxu0 0
      %675 = vmatprep.subr.bf16.mxu0 0
      %676 = vmatpush1.bf16.msra.mxu0 0
      %677 = vmatprep.subr.bf16.mxu0 %v666
      %678 = vmatpush1.bf16.msra.mxu0 %v663
      %679 = vmatprep.subr.bf16.mxu0 %v640
      %680 = vmatpush1.bf16.msra.mxu0 %v639
      %681 = vmatprep.subr.bf16.mxu0 %v637
      %682 = vmatpush1.bf16.msra.mxu0 %v636
      %683 = vmatprep.subr.bf16.mxu0 %v634
      %684 = vmatpush1.bf16.msra.mxu0 %v633
      %685 = vmatprep.subr.bf16.mxu0 %v631
      %686 = vmatpush1.bf16.msra.mxu0 %v630
      %687 = vmatprep.subr.bf16.mxu0 0
      %688 = vmatpush2.bf16.msra.mxu0 0
      %689 = vmatprep.subr.bf16.mxu0 0
      %690 = vmatpush2.bf16.msra.mxu0 0
      %691 = vmatprep.subr.bf16.mxu0 0
      %692 = vmatpush2.bf16.msra.mxu0 0
      %693 = vmatprep.subr.bf16.mxu0 0
      %694 = vmatpush2.bf16.msra.mxu0 0
      %695 = vmatprep.subr.bf16.mxu0 0
      %696 = vmatpush2.bf16.msra.mxu0 0
      %697 = vmatprep.subr.bf16.mxu0 0
      %698 = vmatpush2.bf16.msra.mxu0 0
      %699 = vmatprep.subr.bf16.mxu0 0
      %700 = vmatpush2.bf16.msra.mxu0 0
      %701 = vmatprep.subr.bf16.mxu0 0
      %702 = vmatpush2.bf16.msra.mxu0 0
      %703 = vmatprep.mubr.bf16.mxu0 0
      %704 = vmatmul.mubr.bf16.gmra.mxu0 %v659
      %v705 = vpop.f32.mrf.mxu0
      %v706 = vadd.f32 %v583, %v705
      %v707 = vpop.f32.mrf.mxu0
      %v708 = vadd.f32 %v583, %v707
      %v709 = vpop.f32.mrf.mxu0
      %v710 = vpop.f32.mrf.mxu0
      %711 = vdwg.mxu0
      %712 = vmatprep.subr.bf16.mxu0 0
      %713 = vmatpush1.bf16.msra.mxu0 0
      %714 = vmatprep.subr.bf16.mxu0 0
      %715 = vmatpush1.bf16.msra.mxu0 0
      %716 = vmatprep.subr.bf16.mxu0 0
      %717 = vmatpush1.bf16.msra.mxu0 0
      %718 = vmatprep.subr.bf16.mxu0 0
      %719 = vmatpush1.bf16.msra.mxu0 %v669
      %720 = vmatprep.subr.bf16.mxu0 0
      %721 = vmatpush1.bf16.msra.mxu0 %v641
      %722 = vmatprep.subr.bf16.mxu0 0
      %723 = vmatpush1.bf16.msra.mxu0 %v638
      %724 = vmatprep.subr.bf16.mxu0 0
      %725 = vmatpush1.bf16.msra.mxu0 %v635
      %726 = vmatprep.subr.bf16.mxu0 0
      %727 = vmatpush1.bf16.msra.mxu0 %v632
      %728 = vmatprep.subr.bf16.mxu0 0
      %729 = vmatpush2.bf16.msra.mxu0 0
      %730 = vmatprep.subr.bf16.mxu0 0
      %731 = vmatpush2.bf16.msra.mxu0 0
      %732 = vmatprep.subr.bf16.mxu0 0
      %733 = vmatpush2.bf16.msra.mxu0 0
      %734 = vmatprep.subr.bf16.mxu0 0
      %735 = vmatpush2.bf16.msra.mxu0 0
      %736 = vmatprep.subr.bf16.mxu0 0
      %737 = vmatpush2.bf16.msra.mxu0 0
      %738 = vmatprep.subr.bf16.mxu0 0
      %739 = vmatpush2.bf16.msra.mxu0 0
      %740 = vmatprep.subr.bf16.mxu0 0
      %741 = vmatpush2.bf16.msra.mxu0 0
      %742 = vmatprep.subr.bf16.mxu0 0
      %743 = vmatpush2.bf16.msra.mxu0 0
      %744 = vmatprep.mubr.bf16.mxu0 0
      %745 = vmatmul.mubr.bf16.gmra.mxu0 %v659
      %v746 = vpop.f32.mrf.mxu0
      %v747 = vadd.f32 %v583, %v746
      %v748 = vpop.f32.mrf.mxu0
      %v749 = vpop.f32.mrf.mxu0
      %v750 = vpop.f32.mrf.mxu0
      %751 = vdwg.mxu0
      %v752 = vld [vmem:[%s4] sm:$0x7]
      %v754 = vlaneseq
      %v755 = vshrl.u32 %v754, 7
      %v756 = vsub.s32 0, %v755
      %v757 = vrot.slane %v752, %v756
      %v758 = vlaneseq
      %v759 = vshrl.u32 %v758, 7
      %v760 = vsub.s32 1, %v759
      %v761 = vrot.slane %v752, %v760
      %v762 = vlaneseq
      %v763 = vshrl.u32 %v762, 7
      %v764 = vsub.s32 2, %v763
      %v765 = vrot.slane %v752, %v764
      %v769 = vmul.f32 %v706, %v757
      %v770 = vmul.f32 %v708, %v761
      %v771 = vmul.f32 %v747, %v765
      %v772 = vpack.c.bf16 %v769, %v769
      %v773 = vpack.c.bf16 %v770, %v770
      %v774 = vpack.c.bf16 %v771, %v771
      %v779 = vunpack.c.l.b16 0
      %v780 = vunpack.c.l.b16 %v772
      %v781 = vunpack.c.l.b16 %v773
      %v782 = vunpack.c.l.b16 %v774
      %v783 = vpack.c.b16 %v780, %v779
      %v784 = vpack.c.b16 %v782, %v781
      %v785 = vpack.c.b16 %v779, %v779
      %789 = vst [vmem:[%s278] sm:$0xff] %v783
      %790 = vst [vmem:[%s278 + $0x8] sm:$0xff] %v784
      %791 = vst [vmem:[%s278 + $0x10] sm:$0xf] %v785
      %p792 = scmp.lt.s32.totalorder %s18, 1
      %s793 = scalar_select %p792, %s18, 1
      %s794 = smul.addr %s793, 5
      %s795 = smul.addr %s794, 4
      %s796 = scalar_lea.vmem %s7, %s795
      // Predicated region
      $region49: #{a_call__.5} parent=47 // pred_check
        %p797 = pneg %p188
      $region50: #{a_call__.5} parent=47 // pred_check_branch
        %799 = sbr.rel (%p797) target = $region52
      $region51: #{a_call__.5} parent=47 // pred_region
        _
      $region52: #{a_call__.5} parent=47 // pred_fallthru
        _
    $region48: #{a_call__.5} parent=5 // pred_fallthru
      _
    %p800 = scmp.le.s32.totalorder 2, %s13
    // Predicated region
    $region53: #{a_call__.5} parent=5 // pred_check
      %p801 = pneg %p800
    $region54: #{a_call__.5} parent=5 // pred_check_branch
      %803 = sbr.rel (%p801) target = $region56
    $region55: #{a_call__.5} parent=5 // pred_region
      %s804 = ssub.s32 %s13, 2
      // Predicated region
      $region57: #{a_call__.5} parent=55 // pred_check
        %p805 = pneg %p194
      $region58: #{a_call__.5} parent=55 // pred_check_branch
        %807 = sbr.rel (%p805) target = $region60
      $region59: #{a_call__.5} parent=55 // pred_region
        %p808 = scmp.lt.s32.totalorder %s19, 1
        %s809 = scalar_select %p808, %s19, 1
        %s810 = smul.addr %s809, 5
        %s811 = smul.addr %s810, 4
        %s812 = scalar_lea.vmem %s7, %s811
      $region60: #{a_call__.5} parent=55 // pred_fallthru
        _
    $region56: #{a_call__.5} parent=5 // pred_fallthru
      _
  $region6: #{a_call__.5} parent=0 // loop_footer
    %s17 = sadd.s32 1, %s13
  $region7: #{a_call__.5} parent=0 // loop_footer_branch
    %12 = sbr.rel target = $region3
  $region8: #{a_call__.5} parent=0 // loop_exit
    _

// kernel: a_call__.7
$region0: #{a_call__.7}
  #allocation0 [shape = 'u32[]', space=smem, size = 0x4, offset = 0x4, fixed_abs, tag = 'smem constant byte address 0x4 - core index']
  #allocation1 [shape = 'u32[144,128]{1,0:T(1,128)}', space=vmem, size = 0x12000, scoped, tag = 'internal scratch']
  %s0 = inlined_call_operand.vmem [shape: bf16[2,8,640], index: 0, kind: input, shape index: {}]
  %s1 = inlined_call_operand.vmem [shape: bf16[2,8,640], index: 1, kind: input, shape index: {}]
  %s2 = inlined_call_operand.vmem [shape: f32[1,640], index: 2, kind: input, shape index: {}]
  %s3 = inlined_call_operand.vmem [shape: f32[8,1], index: 3, kind: input, shape index: {}]
  %s4 = inlined_call_operand.vmem [shape: f32[8,1], index: 4, kind: input, shape index: {}]
  %s5 = inlined_call_operand.vmem [shape: f32[8,8], index: 5, kind: input, shape index: {}]
  %s6 = inlined_call_operand.vmem [shape: f32[2,8,640], index: 6, kind: output, shape index: {}]
  %s7 = sld [smem:[#allocation0]]
  $region57: #{a_call__.7} parent=0
    _
  %s9 = ssub.s32 1, %s7
  %s10 = scalar_select 0, %s9, %s7
  loop: start=0, step=1, limit=4
  $region2: #{a_call__.7} parent=0 // loop_pre_header
    _
  $region3: #{a_call__.7} parent=0 // loop_header
    %s12 = sphi 0, %s16
    %p13 = scmp.ge.s32.totalorder %s12, 4
    %s22 = sphi 0, %s24
    %s25 = sphi 0, %s22
    %s26 = sphi 0, %s25
    %s42 = sphi 0, %s26
    %s48 = sphi 0, %s50
    %s51 = sphi 0, %s48
    %s52 = sphi 0, %s51
    %s68 = sphi 0, %s52
    %s72 = sphi 0, %s72
    %s74 = sphi 0, %s72
    %s75 = sphi 0, %s74
    %s89 = sphi 0, %s75
    %s93 = sphi 0, %s93
    %s95 = sphi 0, %s93
    %s96 = sphi 0, %s95
    %s110 = sphi 0, %s96
    %s114 = sphi 0, %s114
    %s116 = sphi 0, %s114
    %s117 = sphi 0, %s116
    %s131 = sphi 0, %s117
    %s135 = sphi 0, %s135
    %s137 = sphi 0, %s135
    %s138 = sphi 0, %s137
    %s152 = sphi 0, %s138
    %s158 = sphi 0, %s160
    %s161 = sphi 0, %s158
    %s162 = sphi 0, %s161
    %s178 = sphi 0, %s162
  $region4: #{a_call__.7} parent=0 // loop_header_branch
    %15 = sbr.rel (%p13) target = $region8
  $region5: #{a_call__.7} parent=0 // loop_body
    %s17 = ssub.s32 %s12, 1
    %s18 = ssub.s32 %s12, 2
    %s19 = sadd.s32 %s12, 1
    %s20 = ssub.s32 %s12, %s19
    %p21 = scmp.eq.s32.totalorder %s20, 0
    %s23 = sadd.s32 %s22, 1
    %s24 = scalar_select %p21, %s22, %s23
    %p27 = pneg %p21
    %p28 = scmp.eq.s32.totalorder %s12, 1
    %p29 = por %p27, %p28
    %p30 = scmp.ne.s32.totalorder %s22, %s25
    %p31 = scmp.eq.s32.totalorder %s12, 0
    %p32 = por %p30, %p31
    %p33 = scmp.ne.s32.totalorder %s22, %s25
    %p34 = scmp.eq.s32.totalorder %s17, 1
    %p35 = por %p33, %p34
    %p36 = scmp.ne.s32.totalorder %s25, %s26
    %p37 = scmp.eq.s32.totalorder %s17, 0
    %p38 = por %p36, %p37
    %p39 = scmp.ne.s32.totalorder %s25, %s26
    %p40 = scmp.eq.s32.totalorder %s18, 1
    %p41 = por %p39, %p40
    %p43 = scmp.ne.s32.totalorder %s26, %s42
    %p44 = scmp.eq.s32.totalorder %s18, 0
    %p45 = por %p43, %p44
    %s46 = ssub.s32 %s12, %s19
    %p47 = scmp.eq.s32.totalorder %s46, 0
    %s49 = sadd.s32 %s48, 1
    %s50 = scalar_select %p47, %s48, %s49
    %p53 = pneg %p47
    %p54 = scmp.eq.s32.totalorder %s12, 1
    %p55 = por %p53, %p54
    %p56 = scmp.ne.s32.totalorder %s48, %s51
    %p57 = scmp.eq.s32.totalorder %s12, 0
    %p58 = por %p56, %p57
    %p59 = scmp.ne.s32.totalorder %s48, %s51
    %p60 = scmp.eq.s32.totalorder %s17, 1
    %p61 = por %p59, %p60
    %p62 = scmp.ne.s32.totalorder %s51, %s52
    %p63 = scmp.eq.s32.totalorder %s17, 0
    %p64 = por %p62, %p63
    %p65 = scmp.ne.s32.totalorder %s51, %s52
    %p66 = scmp.eq.s32.totalorder %s18, 1
    %p67 = por %p65, %p66
    %p69 = scmp.ne.s32.totalorder %s52, %s68
    %p70 = scmp.eq.s32.totalorder %s18, 0
    %p71 = por %p69, %p70
    %s73 = sadd.s32 %s72, 1
    %p76 = scmp.eq.s32.totalorder %s12, 1
    %p77 = scmp.ne.s32.totalorder %s72, %s74
    %p78 = scmp.eq.s32.totalorder %s12, 0
    %p79 = por %p77, %p78
    %p80 = scmp.ne.s32.totalorder %s72, %s74
    %p81 = scmp.eq.s32.totalorder %s17, 1
    %p82 = por %p80, %p81
    %p83 = scmp.ne.s32.totalorder %s74, %s75
    %p84 = scmp.eq.s32.totalorder %s17, 0
    %p85 = por %p83, %p84
    %p86 = scmp.ne.s32.totalorder %s74, %s75
    %p87 = scmp.eq.s32.totalorder %s18, 1
    %p88 = por %p86, %p87
    %p90 = scmp.ne.s32.totalorder %s75, %s89
    %p91 = scmp.eq.s32.totalorder %s18, 0
    %p92 = por %p90, %p91
    %s94 = sadd.s32 %s93, 1
    %p97 = scmp.eq.s32.totalorder %s12, 1
    %p98 = scmp.ne.s32.totalorder %s93, %s95
    %p99 = scmp.eq.s32.totalorder %s12, 0
    %p100 = por %p98, %p99
    %p101 = scmp.ne.s32.totalorder %s93, %s95
    %p102 = scmp.eq.s32.totalorder %s17, 1
    %p103 = por %p101, %p102
    %p104 = scmp.ne.s32.totalorder %s95, %s96
    %p105 = scmp.eq.s32.totalorder %s17, 0
    %p106 = por %p104, %p105
    %p107 = scmp.ne.s32.totalorder %s95, %s96
    %p108 = scmp.eq.s32.totalorder %s18, 1
    %p109 = por %p107, %p108
    %p111 = scmp.ne.s32.totalorder %s96, %s110
    %p112 = scmp.eq.s32.totalorder %s18, 0
    %p113 = por %p111, %p112
    %s115 = sadd.s32 %s114, 1
    %p118 = scmp.eq.s32.totalorder %s12, 1
    %p119 = scmp.ne.s32.totalorder %s114, %s116
    %p120 = scmp.eq.s32.totalorder %s12, 0
    %p121 = por %p119, %p120
    %p122 = scmp.ne.s32.totalorder %s114, %s116
    %p123 = scmp.eq.s32.totalorder %s17, 1
    %p124 = por %p122, %p123
    %p125 = scmp.ne.s32.totalorder %s116, %s117
    %p126 = scmp.eq.s32.totalorder %s17, 0
    %p127 = por %p125, %p126
    %p128 = scmp.ne.s32.totalorder %s116, %s117
    %p129 = scmp.eq.s32.totalorder %s18, 1
    %p130 = por %p128, %p129
    %p132 = scmp.ne.s32.totalorder %s117, %s131
    %p133 = scmp.eq.s32.totalorder %s18, 0
    %p134 = por %p132, %p133
    %s136 = sadd.s32 %s135, 1
    %p139 = scmp.eq.s32.totalorder %s12, 1
    %p140 = scmp.ne.s32.totalorder %s135, %s137
    %p141 = scmp.eq.s32.totalorder %s12, 0
    %p142 = por %p140, %p141
    %p143 = scmp.ne.s32.totalorder %s135, %s137
    %p144 = scmp.eq.s32.totalorder %s17, 1
    %p145 = por %p143, %p144
    %p146 = scmp.ne.s32.totalorder %s137, %s138
    %p147 = scmp.eq.s32.totalorder %s17, 0
    %p148 = por %p146, %p147
    %p149 = scmp.ne.s32.totalorder %s137, %s138
    %p150 = scmp.eq.s32.totalorder %s18, 1
    %p151 = por %p149, %p150
    %p153 = scmp.ne.s32.totalorder %s138, %s152
    %p154 = scmp.eq.s32.totalorder %s18, 0
    %p155 = por %p153, %p154
    %s156 = ssub.s32 %s12, %s19
    %p157 = scmp.eq.s32.totalorder %s156, 0
    %s159 = sadd.s32 %s158, 1
    %s160 = scalar_select %p157, %s158, %s159
    %p163 = pneg %p157
    %p164 = scmp.eq.s32.totalorder %s12, 1
    %p165 = por %p163, %p164
    %p166 = scmp.ne.s32.totalorder %s158, %s161
    %p167 = scmp.eq.s32.totalorder %s12, 0
    %p168 = por %p166, %p167
    %p169 = scmp.ne.s32.totalorder %s158, %s161
    %p170 = scmp.eq.s32.totalorder %s17, 1
    %p171 = por %p169, %p170
    %p172 = scmp.ne.s32.totalorder %s161, %s162
    %p173 = scmp.eq.s32.totalorder %s17, 0
    %p174 = por %p172, %p173
    %p175 = scmp.ne.s32.totalorder %s161, %s162
    %p176 = scmp.eq.s32.totalorder %s18, 1
    %p177 = por %p175, %p176
    %p179 = scmp.ne.s32.totalorder %s162, %s178
    %p180 = scmp.eq.s32.totalorder %s18, 0
    %p181 = por %p179, %p180
    %p182 = scmp.le.s32.totalorder 1, %s12
    %p183 = scmp.lt.s32.totalorder %s12, 3
    %p184 = pnand %p182, %p183
    %p185 = pneg %p184
    // Predicated region
    $region9: #{a_call__.7} parent=5 // pred_check
      _
    $region10: #{a_call__.7} parent=5 // pred_check_branch
      %187 = sbr.rel (%p184) target = $region12
    $region11: #{a_call__.7} parent=5 // pred_region
      %s188 = ssub.s32 %s12, 1
      // Predicated region
      $region13: #{a_call__.7} parent=11 // pred_check
        %p189 = pneg %p85
      $region14: #{a_call__.7} parent=11 // pred_check_branch
        %191 = sbr.rel (%p189) target = $region16
      $region15: #{a_call__.7} parent=11 // pred_region
        _
      $region16: #{a_call__.7} parent=11 // pred_fallthru
        _
      // Predicated region
      $region17: #{a_call__.7} parent=11 // pred_check
        %p192 = pneg %p106
      $region18: #{a_call__.7} parent=11 // pred_check_branch
        %194 = sbr.rel (%p192) target = $region20
      $region19: #{a_call__.7} parent=11 // pred_region
        _
      $region20: #{a_call__.7} parent=11 // pred_fallthru
        _
      // Predicated region
      $region21: #{a_call__.7} parent=11 // pred_check
        %p195 = pneg %p127
      $region22: #{a_call__.7} parent=11 // pred_check_branch
        %197 = sbr.rel (%p195) target = $region24
      $region23: #{a_call__.7} parent=11 // pred_region
        _
      $region24: #{a_call__.7} parent=11 // pred_fallthru
        _
      // Predicated region
      $region25: #{a_call__.7} parent=11 // pred_check
        %p198 = pneg %p148
      $region26: #{a_call__.7} parent=11 // pred_check_branch
        %200 = sbr.rel (%p198) target = $region28
      $region27: #{a_call__.7} parent=11 // pred_region
        _
      $region28: #{a_call__.7} parent=11 // pred_fallthru
        _
    $region12: #{a_call__.7} parent=5 // pred_fallthru
      _
    %p201 = scmp.lt.s32.totalorder %s12, 2
    // Predicated region
    $region29: #{a_call__.7} parent=5 // pred_check
      %p202 = pneg %p201
    $region30: #{a_call__.7} parent=5 // pred_check_branch
      %204 = sbr.rel (%p202) target = $region32
    $region31: #{a_call__.7} parent=5 // pred_region
      // Predicated region
      $region33: #{a_call__.7} parent=31 // pred_check
        %p205 = pneg %p32
      $region34: #{a_call__.7} parent=31 // pred_check_branch
        %207 = sbr.rel (%p205) target = $region36
      $region35: #{a_call__.7} parent=31 // pred_region
        %p208 = scmp.lt.s32.totalorder %s12, 1
        %s209 = scalar_select %p208, %s12, 1
        %s210 = smul.addr %s209, 5
        %s211 = smul.addr %s210, 4
        %s212 = scalar_lea.vmem %s0, %s211
      $region36: #{a_call__.7} parent=31 // pred_fallthru
        _
      // Predicated region
      $region37: #{a_call__.7} parent=31 // pred_check
        %p213 = pneg %p58
      $region38: #{a_call__.7} parent=31 // pred_check_branch
        %215 = sbr.rel (%p213) target = $region40
      $region39: #{a_call__.7} parent=31 // pred_region
        %p216 = scmp.lt.s32.totalorder %s12, 1
        %s217 = scalar_select %p216, %s12, 1
        %s218 = smul.addr %s217, 5
        %s219 = smul.addr %s218, 4
        %s220 = scalar_lea.vmem %s1, %s219
      $region40: #{a_call__.7} parent=31 // pred_fallthru
        _
    $region32: #{a_call__.7} parent=5 // pred_fallthru
      _
    %p221 = scmp.le.s32.totalorder 1, %s12
    %p222 = scmp.lt.s32.totalorder %s12, 3
    %p223 = pnand %p221, %p222
    %p224 = pneg %p223
    // Predicated region
    $region41: #{a_call__.7} parent=5 // pred_check
      _
    $region42: #{a_call__.7} parent=5 // pred_check_branch
      %226 = sbr.rel (%p223) target = $region44
    $region43: #{a_call__.7} parent=5 // pred_region
      %s227 = ssub.s32 %s12, 1
      %p228 = scmp.lt.s32.totalorder %s17, 1
      %s229 = scalar_select %p228, %s17, 1
      %s230 = smul.addr %s229, 5
      %s231 = smul.addr %s230, 4
      %s232 = scalar_lea.vmem %s0, %s231
      %p233 = pneg %p38
      %p234 = pneg %p35
      %p235 = scmp.lt.s32.totalorder %s17, 1
      %s236 = scalar_select %p235, %s17, 1
      %s237 = smul.addr %s236, 5
      %s238 = smul.addr %s237, 4
      %s239 = scalar_lea.vmem %s1, %s238
      %p240 = pneg %p64
      %p241 = pneg %p61
      %p242 = pneg %p85
      %p243 = pneg %p82
      %p244 = pneg %p106
      %p245 = pneg %p103
      %p246 = pneg %p127
      %p247 = pneg %p124
      %p248 = pneg %p148
      %p249 = pneg %p145
      %p250 = pneg %p174
      %p251 = pneg %p171
      %p252 = scmp.lt.s32.totalorder %s17, 1
      %s253 = scalar_select %p252, %s17, 1
      %s254 = smul.addr %s253, 5
      %s255 = smul.addr %s254, 8
      %s256 = scalar_lea.vmem %s6, %s255
      %p257 = scmp.lt.s32.totalorder %s17, 1
      %s258 = scalar_select %p257, %s17, 1
      %s259 = smul.addr %s258, 5
      %s260 = smul.addr %s259, 4
      %s261 = scalar_lea.vmem %s0, %s260
      %p262 = scmp.lt.s32.totalorder %s17, 1
      %s263 = scalar_select %p262, %s17, 1
      %s264 = smul.addr %s263, 5
      %s265 = smul.addr %s264, 4
      %s266 = scalar_lea.vmem %s1, %s265
      %p267 = scmp.lt.s32.totalorder %s17, 1
      %s268 = scalar_select %p267, %s17, 1
      %s269 = smul.addr %s268, 5
      %s270 = smul.addr %s269, 8
      %s271 = scalar_lea.vmem %s6, %s270
      %v272 = vld [vmem:[%s261] sm:$0xff]
      %v273 = vld [vmem:[%s261 + $0x8] sm:$0xff]
      %v274 = vld [vmem:[%s261 + $0x10] sm:$0xf]
      %v275 = vunpack.c.l.bf16 %v272
      %v276 = vunpack.c.h.bf16 %v272
      %v277 = vunpack.c.l.bf16 %v273
      %v278 = vunpack.c.h.bf16 %v273
      %v279 = vunpack.c.l.bf16 %v274
      %v280 = vld [vmem:[%s266] sm:$0xff]
      %v281 = vld [vmem:[%s266 + $0x8] sm:$0xff]
      %v282 = vld [vmem:[%s266 + $0x10] sm:$0xf]
      %v283 = vunpack.c.l.bf16 %v280
      %v284 = vunpack.c.h.bf16 %v280
      %v285 = vunpack.c.l.bf16 %v281
      %v286 = vunpack.c.h.bf16 %v281
      %v287 = vunpack.c.l.bf16 %v282
      %v288 = vld [vmem:[%s2] sm:$0x1f]
      %v289 = vadd.f32 %v283, %v284
      %v290 = vadd.f32 %v289, %v285
      %v291 = vadd.f32 %v290, %v286
      %v292 = vadd.f32 %v291, %v287
      %293 = vadd.xlane.f32.xlu0 %v292
      %v294 = vpop.xlane.xlu0 %293
      %v295 = vmul.f32 %v294, 0.00390625
      %v296 = vsub.f32 %v283, %v295
      %v297 = vsub.f32 %v284, %v295
      %v298 = vsub.f32 %v285, %v295
      %v299 = vsub.f32 %v286, %v295
      %v300 = vsub.f32 %v287, %v295
      %v302 = vlaneseq
      %v303 = vshrl.u32 %v302, 7
      %v304 = vsub.s32 0, %v303
      %v305 = vrot.slane %v288, %v304
      %v306 = vlaneseq
      %v307 = vshrl.u32 %v306, 7
      %v308 = vsub.s32 1, %v307
      %v309 = vrot.slane %v288, %v308
      %v310 = vlaneseq
      %v311 = vshrl.u32 %v310, 7
      %v312 = vsub.s32 2, %v311
      %v313 = vrot.slane %v288, %v312
      %v314 = vlaneseq
      %v315 = vshrl.u32 %v314, 7
      %v316 = vsub.s32 3, %v315
      %v317 = vrot.slane %v288, %v316
      %v318 = vlaneseq
      %v319 = vshrl.u32 %v318, 7
      %v320 = vsub.s32 4, %v319
      %v321 = vrot.slane %v288, %v320
      %v327 = vmul.f32 %v296, %v305
      %v328 = vmul.f32 %v297, %v309
      %v329 = vmul.f32 %v298, %v313
      %v330 = vmul.f32 %v299, %v317
      %v331 = vmul.f32 %v300, %v321
      %v332 = vmul.f32 %v327, %v327
      %v333 = vmul.f32 %v328, %v328
      %v334 = vmul.f32 %v329, %v329
      %v335 = vmul.f32 %v330, %v330
      %v336 = vmul.f32 %v331, %v331
      %v337 = vadd.f32 %v332, %v333
      %v338 = vadd.f32 %v337, %v334
      %v339 = vadd.f32 %v338, %v335
      %v340 = vadd.f32 %v339, %v336
      %341 = vadd.xlane.f32.xlu0 %v340
      %v342 = vpop.xlane.xlu0 %341
      %v343 = vmul.f32 %v342, 0.00390625
      %v344 = vadd.f32 %v343, 1e-05
      %v345 = vrsqrt.pop %v344
      %v346 = vmul.f32 %v296, %v345
      %v347 = vmul.f32 %v297, %v345
      %v348 = vmul.f32 %v298, %v345
      %v349 = vmul.f32 %v299, %v345
      %v350 = vmul.f32 %v300, %v345
      %v351 = vld [vmem:[%s3] sm:$0xff]
      %353 = vset.pattern.permute.xlu0 0
      %354 = vperm.xlu0 %353, %v351
      %v355 = vpop.permute.xlu0 %354
      %v357 = vmul.f32 %v346, %v355
      %v358 = vmul.f32 %v347, %v355
      %v359 = vmul.f32 %v348, %v355
      %v360 = vmul.f32 %v349, %v355
      %v361 = vmul.f32 %v350, %v355
      %v362 = vld [vmem:[%s4] sm:$0xff]
      %364 = vset.pattern.permute.xlu0 0
      %365 = vperm.xlu0 %364, %v362
      %v366 = vpop.permute.xlu0 %365
      %v368 = vadd.f32 %v357, %v366
      %v369 = vadd.f32 %v358, %v366
      %v370 = vadd.f32 %v359, %v366
      %v371 = vadd.f32 %v360, %v366
      %v372 = vadd.f32 %v361, %v366
      %v373 = vadd.f32 %v275, %v276
      %v374 = vadd.f32 %v373, %v277
      %v375 = vadd.f32 %v374, %v278
      %v376 = vadd.f32 %v375, %v279
      %377 = vadd.xlane.f32.xlu0 %v376
      %v378 = vpop.xlane.xlu0 %377
      %v379 = vmul.f32 %v378, 0.00390625
      %v380 = vld [vmem:[%s5] sm:$0xff]
      %vm381 = vcmask 64512
      %v383 = vsel %vm381, %v380, 0
      %385 = vmatprep.subr.mxu0 0.0
      %386 = vmatpush1.msra.mxu0 0.0
      %387 = vmatprep.subr.mxu0 0.0
      %388 = vmatpush1.msra.mxu0 0.0
      %389 = vmatprep.subr.mxu0 0.0
      %390 = vmatpush1.msra.mxu0 0.0
      %391 = vmatprep.subr.mxu0 0.0
      %392 = vmatpush1.msra.mxu0 0.0
      %393 = vmatprep.subr.mxu0 0.0
      %394 = vmatpush1.msra.mxu0 0.0
      %395 = vmatprep.subr.mxu0 0.0
      %396 = vmatpush1.msra.mxu0 0.0
      %397 = vmatprep.subr.mxu0 0.0
      %398 = vmatpush1.msra.mxu0 0.0
      %399 = vmatprep.subr.mxu0 0.0
      %400 = vmatpush1.msra.mxu0 0.0
      %401 = vmatprep.subr.mxu0 0.0
      %402 = vmatpush1.msra.mxu0 0.0
      %403 = vmatprep.subr.mxu0 0.0
      %404 = vmatpush1.msra.mxu0 0.0
      %405 = vmatprep.subr.mxu0 0.0
      %406 = vmatpush1.msra.mxu0 0.0
      %407 = vmatprep.subr.mxu0 0.0
      %408 = vmatpush1.msra.mxu0 0.0
      %409 = vmatprep.subr.mxu0 0.0
      %410 = vmatpush1.msra.mxu0 0.0
      %411 = vmatprep.subr.mxu0 0.0
      %412 = vmatpush1.msra.mxu0 0.0
      %413 = vmatprep.subr.mxu0 0.0
      %414 = vmatpush1.msra.mxu0 0.0
      %415 = vmatprep.subr.mxu0 0.0
      %416 = vmatpush1.msra.mxu0 %v379
      %417 = vmatprep.subr.mxu0 0.0
      %418 = vmatpush2.msra.mxu0 0.0
      %419 = vmatprep.subr.mxu0 0.0
      %420 = vmatpush2.msra.mxu0 0.0
      %421 = vmatprep.subr.mxu0 0.0
      %422 = vmatpush2.msra.mxu0 0.0
      %423 = vmatprep.subr.mxu0 0.0
      %424 = vmatpush2.msra.mxu0 0.0
      %425 = vmatprep.subr.mxu0 0.0
      %426 = vmatpush2.msra.mxu0 0.0
      %427 = vmatprep.subr.mxu0 0.0
      %428 = vmatpush2.msra.mxu0 0.0
      %429 = vmatprep.subr.mxu0 0.0
      %430 = vmatpush2.msra.mxu0 0.0
      %431 = vmatprep.subr.mxu0 0.0
      %432 = vmatpush2.msra.mxu0 0.0
      %433 = vmatprep.subr.mxu0 0.0
      %434 = vmatpush2.msra.mxu0 0.0
      %435 = vmatprep.subr.mxu0 0.0
      %436 = vmatpush2.msra.mxu0 0.0
      %437 = vmatprep.subr.mxu0 0.0
      %438 = vmatpush2.msra.mxu0 0.0
      %439 = vmatprep.subr.mxu0 0.0
      %440 = vmatpush2.msra.mxu0 0.0
      %441 = vmatprep.subr.mxu0 0.0
      %442 = vmatpush2.msra.mxu0 0.0
      %443 = vmatprep.subr.mxu0 0.0
      %444 = vmatpush2.msra.mxu0 0.0
      %445 = vmatprep.subr.mxu0 0.0
      %446 = vmatpush2.msra.mxu0 0.0
      %447 = vmatprep.subr.mxu0 0.0
      %448 = vmatpush2.msra.mxu0 0.0
      %449 = vmatprep.mubr.f32.mxu0 0.0
      %450 = vmatmul.mubr.f32.gmra.mxu0 %v383
      %v451 = vpop.f32.mrf.mxu0
      %v452 = vadd.f32 0.0, %v451
      %v453 = vpop.f32.mrf.mxu0
      %454 = vdwg.mxu0
      %v455 = vxor.u32 %v452, 2147483648
      %v456 = vmul.f32 %v455, 1.442695
      %v457 = vpow.pop %v456
      %v458 = vadd.f32 %v457, 1.0
      %v459 = vrcp.pop %v458
      %v460 = vmul.f32 1.0, %v459
      %462 = vset.pattern.permute.xlu0 0
      %463 = vperm.xlu0 %462, %v460
      %v464 = vpop.permute.xlu0 %463
      %v466 = vmul.f32 %v275, %v464
      %v467 = vmul.f32 %v276, %v464
      %v468 = vmul.f32 %v277, %v464
      %v469 = vmul.f32 %v278, %v464
      %v470 = vmul.f32 %v279, %v464
      %v471 = vadd.f32 %v466, %v368
      %v472 = vadd.f32 %v467, %v369
      %v473 = vadd.f32 %v468, %v370
      %v474 = vadd.f32 %v469, %v371
      %v475 = vadd.f32 %v470, %v372
      %476 = vst [vmem:[%s271] sm:$0xff] %v471
      %477 = vst [vmem:[%s271 + $0x8] sm:$0xff] %v472
      %478 = vst [vmem:[%s271 + $0x10] sm:$0xff] %v473
      %479 = vst [vmem:[%s271 + $0x18] sm:$0xff] %v474
      %480 = vst [vmem:[%s271 + $0x20] sm:$0xff] %v475
      %p481 = scmp.lt.s32.totalorder %s17, 1
      %s482 = scalar_select %p481, %s17, 1
      %s483 = smul.addr %s482, 5
      %s484 = smul.addr %s483, 8
      %s485 = scalar_lea.vmem %s6, %s484
      // Predicated region
      $region45: #{a_call__.7} parent=43 // pred_check
        %p486 = pneg %p171
      $region46: #{a_call__.7} parent=43 // pred_check_branch
        %488 = sbr.rel (%p486) target = $region48
      $region47: #{a_call__.7} parent=43 // pred_region
        _
      $region48: #{a_call__.7} parent=43 // pred_fallthru
        _
    $region44: #{a_call__.7} parent=5 // pred_fallthru
      _
    %p489 = scmp.le.s32.totalorder 2, %s12
    // Predicated region
    $region49: #{a_call__.7} parent=5 // pred_check
      %p490 = pneg %p489
    $region50: #{a_call__.7} parent=5 // pred_check_branch
      %492 = sbr.rel (%p490) target = $region52
    $region51: #{a_call__.7} parent=5 // pred_region
      %s493 = ssub.s32 %s12, 2
      // Predicated region
      $region53: #{a_call__.7} parent=51 // pred_check
        %p494 = pneg %p177
      $region54: #{a_call__.7} parent=51 // pred_check_branch
        %496 = sbr.rel (%p494) target = $region56
      $region55: #{a_call__.7} parent=51 // pred_region
        %p497 = scmp.lt.s32.totalorder %s18, 1
        %s498 = scalar_select %p497, %s18, 1
        %s499 = smul.addr %s498, 5
        %s500 = smul.addr %s499, 8
        %s501 = scalar_lea.vmem %s6, %s500
      $region56: #{a_call__.7} parent=51 // pred_fallthru
        _
    $region52: #{a_call__.7} parent=5 // pred_fallthru
      _
  $region6: #{a_call__.7} parent=0 // loop_footer
    %s16 = sadd.s32 1, %s12
  $region7: #{a_call__.7} parent=0 // loop_footer_branch
    %11 = sbr.rel target = $region3
  $region8: #{a_call__.7} parent=0 // loop_exit
    _

</llo_original>
